<compile_context>
chip_gen: v5e
topology: v5e:2x2
jax: 0.10.0
libtpu: 0.0.40
codegen_flags: <defaults>
</compile_context>

<pallas_src>
import jax
import jax.numpy as jnp
from jax.experimental import pallas as pl
from jax.experimental.pallas import tpu as pltpu

# ----- EEGNet hyperparameters (small shapes, consistent with the module) -----
NB_CLASSES = 4
CHANS      = 8          # Chans
SAMPLES    = 128        # Samples
KERN_LEN   = 16         # kernLength (block1 temporal kernel)
F1         = 4
D          = 2
F2         = 8          # block2 grouped conv needs F2 % (D*F1) == 0
DF1        = D * F1
K2         = 16         # block2 depthwise temporal kernel (hardcoded (1,16))
PAD_L      = (KERN_LEN - 1) // 2        # PyTorch 'same' left padding
W1         = SAMPLES // 4               # width after block1 AvgPool2d((1,4))
W2         = W1 - K2 + 1                # width after block2 depthwise conv (valid)
T_OUT      = W2 // 8                    # width after block2 AvgPool2d((1,8)) (floor)
FEAT       = F2 * T_OUT                 # Flatten -> Linear(FEAT, NB_CLASSES)
BN_EPS     = 1e-5

assert F2 == DF1, "depthwise mapping in block2 assumes groups == out_channels"


# ----------------------------- Pallas kernel --------------------------------
def eegnet_kernel(x_ref, w1_ref, b1_ref, w2_ref, b2_ref, wc_ref, bc_ref, out_ref):
    # x_ref : (TILE_B, CHANS*SAMPLES)
    # w1    : (CHANS*SAMPLES, DF1*SAMPLES)   b1: (1, DF1*SAMPLES)
    # w2    : (DF1*SAMPLES,  F2*W2)          b2: (1, F2*W2)
    # wc    : (F2*W2, NB_CLASSES)            bc: (1, NB_CLASSES)
    # out   : (TILE_B, NB_CLASSES)
    def elu(v):
        # clamp the exp argument so the untaken branch never overflows (VPU select,
        # exp goes to the EUP slot -> effectively free next to the MXU work)
        return jnp.where(v > 0.0, v, jnp.exp(jnp.minimum(v, 0.0)) - 1.0)

    x = x_ref[...]

    # block1: temporal 'same' conv + BN1 + spatial depthwise conv + BN2 + ELU
    z1 = jnp.dot(x, w1_ref[...], preferred_element_type=jnp.float32) + b1_ref[...]
    z1 = elu(z1)                                             # (TILE_B, DF1*SAMPLES)

    # AvgPool(1,4) + block2 depthwise conv + pointwise conv + BN3 (all folded) + ELU
    z2 = jnp.dot(z1, w2_ref[...], preferred_element_type=jnp.float32) + b2_ref[...]
    z2 = elu(z2)                                             # (TILE_B, F2*W2)

    # AvgPool(1,8) + Flatten + Linear (folded) + Softmax
    logits = jnp.dot(z2, wc_ref[...], preferred_element_type=jnp.float32) + bc_ref[...]
    m = jnp.max(logits, axis=-1, keepdims=True)
    e = jnp.exp(logits - m)
    out_ref[...] = e / jnp.sum(e, axis=-1, keepdims=True)


def _round_up(n, m):
    return ((n + m - 1) // m) * m


def eegnet_forward(x, K, tile_b=256):
    """x: (B, CHANS, SAMPLES) float32; K: fused operands -> (B, NB_CLASSES) probs."""
    B = x.shape[0]
    x2 = x.reshape(B, CHANS * SAMPLES)        # free view; row index = c*SAMPLES + s

    # Biggest batch tile that still fits comfortably in VMEM; batch rides the
    # sublane axis so every tile is a large, dense MXU matmul.
    tb = min(_round_up(tile_b, 8), _round_up(B, 8))
    Bp = _round_up(B, tb)
    if Bp != B:
        x2 = jnp.pad(x2, ((0, Bp - B), (0, 0)))
    grid = (Bp // tb,)

    def const_spec(arr):
        # Constant block index across the grid -> weights stay resident in VMEM.
        nd = arr.ndim
        return pl.BlockSpec(arr.shape, lambda i, _nd=nd: (0,) * _nd)

    ops = (K["w1c"], K["b1c"], K["w2c"], K["b2c"], K["wcls"], K["bcls"])
    out = pl.pallas_call(
        eegnet_kernel,
        grid=grid,
        in_specs=[pl.BlockSpec((tb, CHANS * SAMPLES), lambda i: (i, 0))]
                 + [const_spec(o) for o in ops],
        out_specs=pl.BlockSpec((tb, NB_CLASSES), lambda i: (i, 0)),
        out_shape=jax.ShapeDtypeStruct((Bp, NB_CLASSES), jnp.float32),
        compiler_params=pltpu.CompilerParams(
            dimension_semantics=("parallel",),
            vmem_limit_bytes=64 << 20,   # headroom for big batch tiles + resident weights
        ),
    )(x2, *ops)
    return out[:B]


# ------------------------- parameter construction ---------------------------
def make_params(key):
    """Raw (torch-layout) parameters for the eval-mode module."""
    ks = jax.random.split(key, 18)
    f32 = jnp.float32

    def bn_fold(kg, kb, km, kv, n):
        gamma = 1.0 + 0.1 * jax.random.normal(kg, (n,), f32)
        beta  = 0.1 * jax.random.normal(kb, (n,), f32)
        mean  = 0.1 * jax.random.normal(km, (n,), f32)
        var   = 0.5 + jax.random.uniform(kv, (n,), f32)
        scale = gamma / jnp.sqrt(var + BN_EPS)
        shift = beta - mean * scale
        return scale, shift

    w1   = 0.3 * jax.random.normal(ks[0], (F1, KERN_LEN), f32)   # Conv2d(1,F1,(1,K)) squeezed
    wdw  = 0.3 * jax.random.normal(ks[1], (F1, D, CHANS), f32)   # Conv2d(F1,DF1,(Chans,1),groups=F1)
    wsep = 0.3 * jax.random.normal(ks[2], (F2, K2), f32)         # Conv2d(DF1,F2,(1,16),groups=DF1)
    wpw  = 0.3 * jax.random.normal(ks[3], (F2, F2), f32)         # Conv2d(F2,F2,1)
    wlin = 0.3 * jax.random.normal(ks[4], (NB_CLASSES, FEAT), f32)
    blin = 0.1 * jax.random.normal(ks[5], (NB_CLASSES,), f32)

    s1, h1 = bn_fold(ks[6],  ks[7],  ks[8],  ks[9],  F1)
    s2, h2 = bn_fold(ks[10], ks[11], ks[12], ks[13], DF1)
    s3, h3 = bn_fold(ks[14], ks[15], ks[16], ks[17], F2)

    return dict(w1=w1, wdw=wdw, wsep=wsep, wpw=wpw, wlin=wlin, blin=blin,
                s1=s1, h1=h1, s2=s2, h2=h2, s3=s3, h3=h3)


def fold_params(P):
    """Fold convs, eval-mode BN, 'same' padding, pools and the classifier into
    three dense matrices + biases consumed by the Pallas kernel."""
    f32 = jnp.float32
    w1, wdw, wsep, wpw = P["w1"], P["wdw"], P["wsep"], P["wpw"]
    s1, h1, s2, h2, s3, h3 = P["s1"], P["h1"], P["s2"], P["h2"], P["s3"], P["h3"]

    # --- block1: Toeplitz temporal conv ('same' padding folded) + BN1 + depthwise + BN2
    ii = jnp.arange(SAMPLES)[:, None]
    ss = jnp.arange(SAMPLES)[None, :]
    kk = ii - ss + PAD_L
    t1 = jnp.where((kk >= 0) & (kk < KERN_LEN),
                   w1[:, jnp.clip(kk, 0, KERN_LEN - 1)], 0.0)     # (F1, S_in, S_out)
    s2_fd = s2.reshape(F1, D)
    h2_fd = h2.reshape(F1, D)
    wdw_sc = wdw * (s1[:, None, None] * s2_fd[:, :, None])        # BN1/BN2 scales folded
    w1c = jnp.einsum('fdc,fis->cifds', wdw_sc, t1).reshape(CHANS * SAMPLES, DF1 * SAMPLES)
    bias_fd = s2_fd * h1[:, None] * wdw.sum(-1) + h2_fd           # BN1 shift thru conv + BN2 shift
    b1c = jnp.repeat(bias_fd.reshape(DF1), SAMPLES).reshape(1, DF1 * SAMPLES)

    # --- AvgPool(1,4) + block2 depthwise (valid) + pointwise 1x1 + BN3 (all linear, fused)
    p4 = ((jnp.arange(SAMPLES)[:, None] // 4) == jnp.arange(W1)[None, :]).astype(f32) * 0.25
    P4 = jnp.einsum('ab,sw->asbw', jnp.eye(DF1, dtype=f32), p4).reshape(DF1 * SAMPLES, DF1 * W1)
    ww = jnp.arange(W1)[:, None]
    vv = jnp.arange(W2)[None, :]
    kk2 = ww - vv
    sconv = jnp.where((kk2 >= 0) & (kk2 < K2),
                      wsep[:, jnp.clip(kk2, 0, K2 - 1)], 0.0)     # (DF1, W1, W2)
    w2c_small = jnp.einsum('o,od,dwv->dwov', s3, wpw, sconv).reshape(DF1 * W1, F2 * W2)
    w2c = P4 @ w2c_small                                          # (DF1*SAMPLES, F2*W2)
    b2c = jnp.repeat(h3, W2).reshape(1, F2 * W2)

    # --- AvgPool(1,8) (floor mode) + Flatten (channel-major) + Linear
    p8 = ((jnp.arange(W2)[:, None] // 8) == jnp.arange(T_OUT)[None, :]).astype(f32) * 0.125
    P8 = jnp.einsum('ab,wt->awbt', jnp.eye(F2, dtype=f32), p8).reshape(F2 * W2, F2 * T_OUT)
    wcls = P8 @ P["wlin"].T                                       # (F2*W2, NB_CLASSES)
    bcls = P["blin"].reshape(1, NB_CLASSES)

    return dict(w1c=w1c, b1c=b1c, w2c=w2c, b2c=b2c, wcls=wcls, bcls=bcls)


# ------------------------------ pure-JAX reference --------------------------
def eegnet_reference(x, P):
    """Eval-mode reference with identical semantics, built from the raw params."""
    B = x.shape[0]
    pad_r = KERN_LEN - 1 - PAD_L
    xp = jnp.pad(x, ((0, 0), (0, 0), (PAD_L, pad_r)))
    out1 = jnp.zeros((B, F1, CHANS, SAMPLES), jnp.float32)
    for k in range(KERN_LEN):
        out1 = out1 + P["w1"][None, :, None, k:k + 1] * xp[:, None, :, k:k + SAMPLES]
    out1 = P["s1"].reshape(1, F1, 1, 1) * out1 + P["h1"].reshape(1, F1, 1, 1)
    out2 = jnp.einsum('fdc,bfcs->bfds', P["wdw"], out1).reshape(B, DF1, SAMPLES)
    out2 = P["s2"].reshape(1, DF1, 1) * out2 + P["h2"].reshape(1, DF1, 1)
    out2 = jnp.where(out2 > 0, out2, jnp.exp(out2) - 1.0)
    out2 = out2.reshape(B, DF1, W1, 4).mean(-1)
    acc = jnp.zeros((B, F2, W2), jnp.float32)
    for k in range(K2):
        acc = acc + P["wsep"][None, :, k:k + 1] * out2[:, :, k:k + W2]
    z = jnp.einsum('oi,biw->bow', P["wpw"], acc)
    z = P["s3"].reshape(1, F2, 1) * z + P["h3"].reshape(1, F2, 1)
    z = jnp.where(z > 0, z, jnp.exp(z) - 1.0)
    z = z[:, :, :T_OUT * 8].reshape(B, F2, T_OUT, 8).mean(-1)
    feat = z.reshape(B, FEAT)
    logits = feat @ P["wlin"].T + P["blin"]
    return jax.nn.softmax(logits, axis=1)


if __name__ == "__main__":
    key = jax.random.PRNGKey(0)
    kx, kp = jax.random.split(key)
    B = 16
    x = jax.random.normal(kx, (B, CHANS, SAMPLES), jnp.float32)

    raw = make_params(kp)
    fused = fold_params(raw)

    out = eegnet_forward(x, fused, tile_b=8)   # 2 batch tiles -> exercises the grid
    out = jax.block_until_ready(out)

    ref = eegnet_reference(x, raw)
    assert out.shape == (B, NB_CLASSES)
    assert jnp.allclose(out, ref, atol=2e-3, rtol=2e-3), (out, ref)
    assert jnp.allclose(jnp.sum(out, axis=1), 1.0, atol=1e-5)

    # TODO(synk): Dropout is identity (eval mode) and BatchNorm uses folded running
    # stats; training-mode stochasticity/batch statistics are not implemented.

    print("KERNEL_OK")
</pallas_src>

<mosaic_0001>
module attributes {stable_mosaic.version = 11 : i64} {
  func.func @eegnet_kernel(%arg0: i32, %arg1: memref<8x1024xf32, #tpu.memory_space<vmem>>, %arg2: memref<1024x1024xf32, #tpu.memory_space<vmem>>, %arg3: memref<1x1024xf32, #tpu.memory_space<vmem>>, %arg4: memref<1024x136xf32, #tpu.memory_space<vmem>>, %arg5: memref<1x136xf32, #tpu.memory_space<vmem>>, %arg6: memref<136x4xf32, #tpu.memory_space<vmem>>, %arg7: memref<1x4xf32, #tpu.memory_space<vmem>>, %arg8: memref<8x4xf32, #tpu.memory_space<vmem>>) attributes {dimension_semantics = [#tpu.dimension_semantics<parallel>], iteration_bounds = array<i64: 2>, scalar_prefetch = 0 : i64, scratch_operands = 0 : i64, tpu.core_type = #tpu.core_type<tc>, window_params = [{transform_indices = @transform_0, window_bounds = array<i64: 8, 1024>}, {pipeline_mode = #tpu.pipeline_mode<synchronous>, transform_indices = @transform_1, window_bounds = array<i64: 1024, 1024>}, {pipeline_mode = #tpu.pipeline_mode<synchronous>, transform_indices = @transform_2, window_bounds = array<i64: 1, 1024>}, {pipeline_mode = #tpu.pipeline_mode<synchronous>, transform_indices = @transform_3, window_bounds = array<i64: 1024, 136>}, {pipeline_mode = #tpu.pipeline_mode<synchronous>, transform_indices = @transform_4, window_bounds = array<i64: 1, 136>}, {pipeline_mode = #tpu.pipeline_mode<synchronous>, transform_indices = @transform_5, window_bounds = array<i64: 136, 4>}, {pipeline_mode = #tpu.pipeline_mode<synchronous>, transform_indices = @transform_6, window_bounds = array<i64: 1, 4>}, {transform_indices = @transform_7, window_bounds = array<i64: 8, 4>}]} {
    %c0 = arith.constant 0 : index
    %c0_0 = arith.constant 0 : index
    %0 = vector.load %arg1[%c0, %c0_0] : memref<8x1024xf32, #tpu.memory_space<vmem>>, vector<8x1024xf32>
    %c0_1 = arith.constant 0 : index
    %c0_2 = arith.constant 0 : index
    %1 = vector.load %arg2[%c0_1, %c0_2] : memref<1024x1024xf32, #tpu.memory_space<vmem>>, vector<1024x1024xf32>
    %cst = arith.constant dense<0.000000e+00> : vector<8x1024xf32>
    %2 = tpu.matmul %0, %1, %cst {dimension_numbers = #tpu.dot_dimension_numbers<[1], [0], [0], [1], [0, 0, 1, 1], [], []>} : vector<8x1024xf32>, vector<1024x1024xf32>, vector<8x1024xf32> -> vector<8x1024xf32>
    %c0_3 = arith.constant 0 : index
    %c0_4 = arith.constant 0 : index
    %3 = vector.load %arg3[%c0_3, %c0_4] : memref<1x1024xf32, #tpu.memory_space<vmem>>, vector<1x1024xf32>
    %4 = vector.broadcast %3 : vector<1x1024xf32> to vector<8x1024xf32>
    %5 = arith.addf %2, %4 : vector<8x1024xf32>
    %cst_5 = arith.constant 0.000000e+00 : f32
    %6 = vector.broadcast %cst_5 : f32 to vector<8x1024xf32>
    %7 = arith.cmpf ogt, %5, %6 : vector<8x1024xf32>
    %cst_6 = arith.constant 0.000000e+00 : f32
    %8 = vector.broadcast %cst_6 : f32 to vector<8x1024xf32>
    %9 = arith.minimumf %5, %8 : vector<8x1024xf32>
    %10 = math.exp %9 : vector<8x1024xf32>
    %cst_7 = arith.constant 1.000000e+00 : f32
    %11 = vector.broadcast %cst_7 : f32 to vector<8x1024xf32>
    %12 = arith.subf %10, %11 : vector<8x1024xf32>
    %13 = arith.select %7, %5, %12 : vector<8x1024xi1>, vector<8x1024xf32>
    %c0_8 = arith.constant 0 : index
    %c0_9 = arith.constant 0 : index
    %14 = vector.load %arg4[%c0_8, %c0_9] : memref<1024x136xf32, #tpu.memory_space<vmem>>, vector<1024x136xf32>
    %cst_10 = arith.constant dense<0.000000e+00> : vector<8x136xf32>
    %15 = tpu.matmul %13, %14, %cst_10 {dimension_numbers = #tpu.dot_dimension_numbers<[1], [0], [0], [1], [0, 0, 1, 1], [], []>} : vector<8x1024xf32>, vector<1024x136xf32>, vector<8x136xf32> -> vector<8x136xf32>
    %c0_11 = arith.constant 0 : index
    %c0_12 = arith.constant 0 : index
    %16 = vector.load %arg5[%c0_11, %c0_12] : memref<1x136xf32, #tpu.memory_space<vmem>>, vector<1x136xf32>
    %17 = vector.broadcast %16 : vector<1x136xf32> to vector<8x136xf32>
    %18 = arith.addf %15, %17 : vector<8x136xf32>
    %cst_13 = arith.constant 0.000000e+00 : f32
    %19 = vector.broadcast %cst_13 : f32 to vector<8x136xf32>
    %20 = arith.cmpf ogt, %18, %19 : vector<8x136xf32>
    %cst_14 = arith.constant 0.000000e+00 : f32
    %21 = vector.broadcast %cst_14 : f32 to vector<8x136xf32>
    %22 = arith.minimumf %18, %21 : vector<8x136xf32>
    %23 = math.exp %22 : vector<8x136xf32>
    %cst_15 = arith.constant 1.000000e+00 : f32
    %24 = vector.broadcast %cst_15 : f32 to vector<8x136xf32>
    %25 = arith.subf %23, %24 : vector<8x136xf32>
    %26 = arith.select %20, %18, %25 : vector<8x136xi1>, vector<8x136xf32>
    %c0_16 = arith.constant 0 : index
    %c0_17 = arith.constant 0 : index
    %27 = vector.load %arg6[%c0_16, %c0_17] : memref<136x4xf32, #tpu.memory_space<vmem>>, vector<136x4xf32>
    %cst_18 = arith.constant dense<0.000000e+00> : vector<8x4xf32>
    %28 = tpu.matmul %26, %27, %cst_18 {dimension_numbers = #tpu.dot_dimension_numbers<[1], [0], [0], [1], [0, 0, 1, 1], [], []>} : vector<8x136xf32>, vector<136x4xf32>, vector<8x4xf32> -> vector<8x4xf32>
    %c0_19 = arith.constant 0 : index
    %c0_20 = arith.constant 0 : index
    %29 = vector.load %arg7[%c0_19, %c0_20] : memref<1x4xf32, #tpu.memory_space<vmem>>, vector<1x4xf32>
    %30 = vector.broadcast %29 : vector<1x4xf32> to vector<8x4xf32>
    %31 = arith.addf %28, %30 : vector<8x4xf32>
    %cst_21 = arith.constant dense<0xFF800000> : vector<8xf32>
    %32 = vector.multi_reduction <maximumf>, %31, %cst_21 [1] : vector<8x4xf32> to vector<8xf32>
    %33 = vector.shape_cast %32 : vector<8xf32> to vector<8x1xf32>
    %34 = vector.broadcast %33 : vector<8x1xf32> to vector<8x4xf32>
    %35 = arith.subf %31, %34 : vector<8x4xf32>
    %36 = math.exp %35 : vector<8x4xf32>
    %cst_22 = arith.constant dense<0.000000e+00> : vector<8xf32>
    %37 = vector.multi_reduction <add>, %36, %cst_22 [1] : vector<8x4xf32> to vector<8xf32>
    %38 = vector.shape_cast %37 : vector<8xf32> to vector<8x1xf32>
    %39 = vector.broadcast %38 : vector<8x1xf32> to vector<8x4xf32>
    %40 = arith.divf %36, %39 : vector<8x4xf32>
    %c0_23 = arith.constant 0 : index
    %c0_24 = arith.constant 0 : index
    %41 = vector.load %arg8[%c0_23, %c0_24] : memref<8x4xf32, #tpu.memory_space<vmem>>, vector<8x4xf32>
    tpu.vector_store %arg8[%c0_23, %c0_24], %40 {strides = array<i32>} : memref<8x4xf32, #tpu.memory_space<vmem>>, vector<8x4xf32>,
    return
  }
  func.func @transform_0(%arg0: i32) -> (i32, i32) {
    %c0_i32 = arith.constant 0 : i32
    %c0_i32_0 = arith.constant 0 : i32
    return %arg0, %c0_i32 : i32, i32
  }
  func.func @transform_1(%arg0: i32) -> (i32, i32) {
    %c0_i32 = arith.constant 0 : i32
    %c0_i32_0 = arith.constant 0 : i32
    %c0_i32_1 = arith.constant 0 : i32
    return %c0_i32, %c0_i32_0 : i32, i32
  }
  func.func @transform_2(%arg0: i32) -> (i32, i32) {
    %c0_i32 = arith.constant 0 : i32
    %c0_i32_0 = arith.constant 0 : i32
    %c0_i32_1 = arith.constant 0 : i32
    return %c0_i32, %c0_i32_0 : i32, i32
  }
  func.func @transform_3(%arg0: i32) -> (i32, i32) {
    %c0_i32 = arith.constant 0 : i32
    %c0_i32_0 = arith.constant 0 : i32
    %c0_i32_1 = arith.constant 0 : i32
    return %c0_i32, %c0_i32_0 : i32, i32
  }
  func.func @transform_4(%arg0: i32) -> (i32, i32) {
    %c0_i32 = arith.constant 0 : i32
    %c0_i32_0 = arith.constant 0 : i32
    %c0_i32_1 = arith.constant 0 : i32
    return %c0_i32, %c0_i32_0 : i32, i32
  }
  func.func @transform_5(%arg0: i32) -> (i32, i32) {
    %c0_i32 = arith.constant 0 : i32
    %c0_i32_0 = arith.constant 0 : i32
    %c0_i32_1 = arith.constant 0 : i32
    return %c0_i32, %c0_i32_0 : i32, i32
  }
  func.func @transform_6(%arg0: i32) -> (i32, i32) {
    %c0_i32 = arith.constant 0 : i32
    %c0_i32_0 = arith.constant 0 : i32
    %c0_i32_1 = arith.constant 0 : i32
    return %c0_i32, %c0_i32_0 : i32, i32
  }
  func.func @transform_7(%arg0: i32) -> (i32, i32) {
    %c0_i32 = arith.constant 0 : i32
    %c0_i32_0 = arith.constant 0 : i32
    return %arg0, %c0_i32 : i32, i32
  }
}

</mosaic_0001>

<llo_original>
// kernel: tpu_custom_call.1
$region0: #{tpu_custom_call.1}
  #allocation0 [shape = 'u32[]', space=smem, size = 0x4, offset = 0x4, fixed_abs, tag = 'smem constant byte address 0x4 - core index']
  #allocation1 [shape = 'u32[72,128]{1,0:T(1,128)}', space=vmem, size = 0x9000, scoped, tag = 'internal scratch']
  %s0 = inlined_call_operand.hbm [shape: f32[16,1024], index: 0, kind: input, shape index: {}]
  %s1 = inlined_call_operand.hbm [shape: f32[1024,1024], index: 1, kind: input, shape index: {}]
  %s2 = inlined_call_operand.hbm [shape: f32[1,1024], index: 2, kind: input, shape index: {}]
  %s3 = inlined_call_operand.vmem [shape: f32[1024,136], index: 3, kind: input, shape index: {}]
  %s4 = inlined_call_operand.hbm [shape: f32[1,136], index: 4, kind: input, shape index: {}]
  %s5 = inlined_call_operand.vmem [shape: f32[136,4], index: 5, kind: input, shape index: {}]
  %s6 = inlined_call_operand.hbm [shape: f32[1,4], index: 6, kind: input, shape index: {}]
  %s7 = inlined_call_operand.vmem [shape: f32[16,4], index: 7, kind: output, shape index: {}]
  %s8 = sld [smem:[#allocation0]]
  $region81: #{tpu_custom_call.1} parent=0
    _
  %s10 = ssub.s32 1, %s8
  %s11 = scalar_select 0, %s10, %s8
  $region1: #{tpu_custom_call.1} parent=0
    #allocation2 [shape = 'u8[65536]{0}', space=vmem, size = 0x10000, scoped, tag = 'input window, operand 0']
    #allocation3 [shape = 's32[2]{0}', space=sflag, size = 0x8, scoped, tag = 'scoped memory for tpu_custom_call.1']
    #allocation4 [shape = 'u8[4194304]{0}', space=vmem, size = 0x400000, scoped, tag = 'input window, operand 1, single buffered']
    #allocation5 [shape = 's32[1]{0}', space=sflag, size = 0x4, scoped, tag = 'scoped memory for tpu_custom_call.1']
    #allocation6 [shape = 'u8[4096]{0}', space=vmem, size = 0x1000, scoped, tag = 'input window, operand 2, single buffered']
    #allocation7 [shape = 'u8[1024]{0}', space=vmem, size = 0x400, scoped, tag = 'input window, operand 4, single buffered']
    #allocation8 [shape = 's32[1]{0}', space=sflag, size = 0x4, scoped, tag = 'scoped memory for tpu_custom_call.1']
    #allocation9 [shape = 'u8[512]{0}', space=vmem, size = 0x400, scoped, tag = 'input window, operand 6, single buffered']
    %12 = vsyncpa [#allocation3], 0
    %s13 = scalar_lea.sflag [#allocation3], 1
    %14 = vsyncpa %s13, 0
    %15 = vsyncpa [#allocation5], 0
    %16 = vsyncpa [#allocation8], 0
    loop: start=0, step=1, limit=4
    $region2: #{tpu_custom_call.1} parent=1 // loop_pre_header
      _
    $region3: #{tpu_custom_call.1} parent=1 // loop_header
      %s18 = sphi 0, %s22
      %p19 = scmp.ge.s32.totalorder %s18, 4
      %s28 = sphi 0, %s30
      %s31 = sphi 0, %s28
      %s32 = sphi 0, %s31
      %s48 = sphi 0, %s32
      %s52 = sphi 0, %s52
      %s54 = sphi 0, %s52
      %s55 = sphi 0, %s54
      %s69 = sphi 0, %s55
      %s73 = sphi 0, %s73
      %s75 = sphi 0, %s73
      %s76 = sphi 0, %s75
      %s90 = sphi 0, %s76
      %s94 = sphi 0, %s94
      %s96 = sphi 0, %s94
      %s97 = sphi 0, %s96
      %s111 = sphi 0, %s97
      %s115 = sphi 0, %s115
      %s117 = sphi 0, %s115
      %s118 = sphi 0, %s117
      %s132 = sphi 0, %s118
      %s136 = sphi 0, %s136
      %s138 = sphi 0, %s136
      %s139 = sphi 0, %s138
      %s153 = sphi 0, %s139
      %s157 = sphi 0, %s157
      %s159 = sphi 0, %s157
      %s160 = sphi 0, %s159
      %s174 = sphi 0, %s160
      %s180 = sphi 0, %s182
      %s183 = sphi 0, %s180
      %s184 = sphi 0, %s183
      %s200 = sphi 0, %s184
    $region4: #{tpu_custom_call.1} parent=1 // loop_header_branch
      %21 = sbr.rel (%p19) target = $region8
    $region5: #{tpu_custom_call.1} parent=1 // loop_body
      %s23 = ssub.s32 %s18, 1
      %s24 = ssub.s32 %s18, 2
      %s25 = sadd.s32 %s18, 1
      %s26 = ssub.s32 %s18, %s25
      %p27 = scmp.eq.s32.totalorder %s26, 0
      %s29 = sadd.s32 %s28, 1
      %s30 = scalar_select %p27, %s28, %s29
      %p33 = pneg %p27
      %p34 = scmp.eq.s32.totalorder %s18, 1
      %p35 = por %p33, %p34
      %p36 = scmp.ne.s32.totalorder %s28, %s31
      %p37 = scmp.eq.s32.totalorder %s18, 0
      %p38 = por %p36, %p37
      %p39 = scmp.ne.s32.totalorder %s28, %s31
      %p40 = scmp.eq.s32.totalorder %s23, 1
      %p41 = por %p39, %p40
      %p42 = scmp.ne.s32.totalorder %s31, %s32
      %p43 = scmp.eq.s32.totalorder %s23, 0
      %p44 = por %p42, %p43
      %p45 = scmp.ne.s32.totalorder %s31, %s32
      %p46 = scmp.eq.s32.totalorder %s24, 1
      %p47 = por %p45, %p46
      %p49 = scmp.ne.s32.totalorder %s32, %s48
      %p50 = scmp.eq.s32.totalorder %s24, 0
      %p51 = por %p49, %p50
      %s53 = sadd.s32 %s52, 1
      %p56 = scmp.eq.s32.totalorder %s18, 1
      %p57 = scmp.ne.s32.totalorder %s52, %s54
      %p58 = scmp.eq.s32.totalorder %s18, 0
      %p59 = por %p57, %p58
      %p60 = scmp.ne.s32.totalorder %s52, %s54
      %p61 = scmp.eq.s32.totalorder %s23, 1
      %p62 = por %p60, %p61
      %p63 = scmp.ne.s32.totalorder %s54, %s55
      %p64 = scmp.eq.s32.totalorder %s23, 0
      %p65 = por %p63, %p64
      %p66 = scmp.ne.s32.totalorder %s54, %s55
      %p67 = scmp.eq.s32.totalorder %s24, 1
      %p68 = por %p66, %p67
      %p70 = scmp.ne.s32.totalorder %s55, %s69
      %p71 = scmp.eq.s32.totalorder %s24, 0
      %p72 = por %p70, %p71
      %s74 = sadd.s32 %s73, 1
      %p77 = scmp.eq.s32.totalorder %s18, 1
      %p78 = scmp.ne.s32.totalorder %s73, %s75
      %p79 = scmp.eq.s32.totalorder %s18, 0
      %p80 = por %p78, %p79
      %p81 = scmp.ne.s32.totalorder %s73, %s75
      %p82 = scmp.eq.s32.totalorder %s23, 1
      %p83 = por %p81, %p82
      %p84 = scmp.ne.s32.totalorder %s75, %s76
      %p85 = scmp.eq.s32.totalorder %s23, 0
      %p86 = por %p84, %p85
      %p87 = scmp.ne.s32.totalorder %s75, %s76
      %p88 = scmp.eq.s32.totalorder %s24, 1
      %p89 = por %p87, %p88
      %p91 = scmp.ne.s32.totalorder %s76, %s90
      %p92 = scmp.eq.s32.totalorder %s24, 0
      %p93 = por %p91, %p92
      %s95 = sadd.s32 %s94, 1
      %p98 = scmp.eq.s32.totalorder %s18, 1
      %p99 = scmp.ne.s32.totalorder %s94, %s96
      %p100 = scmp.eq.s32.totalorder %s18, 0
      %p101 = por %p99, %p100
      %p102 = scmp.ne.s32.totalorder %s94, %s96
      %p103 = scmp.eq.s32.totalorder %s23, 1
      %p104 = por %p102, %p103
      %p105 = scmp.ne.s32.totalorder %s96, %s97
      %p106 = scmp.eq.s32.totalorder %s23, 0
      %p107 = por %p105, %p106
      %p108 = scmp.ne.s32.totalorder %s96, %s97
      %p109 = scmp.eq.s32.totalorder %s24, 1
      %p110 = por %p108, %p109
      %p112 = scmp.ne.s32.totalorder %s97, %s111
      %p113 = scmp.eq.s32.totalorder %s24, 0
      %p114 = por %p112, %p113
      %s116 = sadd.s32 %s115, 1
      %p119 = scmp.eq.s32.totalorder %s18, 1
      %p120 = scmp.ne.s32.totalorder %s115, %s117
      %p121 = scmp.eq.s32.totalorder %s18, 0
      %p122 = por %p120, %p121
      %p123 = scmp.ne.s32.totalorder %s115, %s117
      %p124 = scmp.eq.s32.totalorder %s23, 1
      %p125 = por %p123, %p124
      %p126 = scmp.ne.s32.totalorder %s117, %s118
      %p127 = scmp.eq.s32.totalorder %s23, 0
      %p128 = por %p126, %p127
      %p129 = scmp.ne.s32.totalorder %s117, %s118
      %p130 = scmp.eq.s32.totalorder %s24, 1
      %p131 = por %p129, %p130
      %p133 = scmp.ne.s32.totalorder %s118, %s132
      %p134 = scmp.eq.s32.totalorder %s24, 0
      %p135 = por %p133, %p134
      %s137 = sadd.s32 %s136, 1
      %p140 = scmp.eq.s32.totalorder %s18, 1
      %p141 = scmp.ne.s32.totalorder %s136, %s138
      %p142 = scmp.eq.s32.totalorder %s18, 0
      %p143 = por %p141, %p142
      %p144 = scmp.ne.s32.totalorder %s136, %s138
      %p145 = scmp.eq.s32.totalorder %s23, 1
      %p146 = por %p144, %p145
      %p147 = scmp.ne.s32.totalorder %s138, %s139
      %p148 = scmp.eq.s32.totalorder %s23, 0
      %p149 = por %p147, %p148
      %p150 = scmp.ne.s32.totalorder %s138, %s139
      %p151 = scmp.eq.s32.totalorder %s24, 1
      %p152 = por %p150, %p151
      %p154 = scmp.ne.s32.totalorder %s139, %s153
      %p155 = scmp.eq.s32.totalorder %s24, 0
      %p156 = por %p154, %p155
      %s158 = sadd.s32 %s157, 1
      %p161 = scmp.eq.s32.totalorder %s18, 1
      %p162 = scmp.ne.s32.totalorder %s157, %s159
      %p163 = scmp.eq.s32.totalorder %s18, 0
      %p164 = por %p162, %p163
      %p165 = scmp.ne.s32.totalorder %s157, %s159
      %p166 = scmp.eq.s32.totalorder %s23, 1
      %p167 = por %p165, %p166
      %p168 = scmp.ne.s32.totalorder %s159, %s160
      %p169 = scmp.eq.s32.totalorder %s23, 0
      %p170 = por %p168, %p169
      %p171 = scmp.ne.s32.totalorder %s159, %s160
      %p172 = scmp.eq.s32.totalorder %s24, 1
      %p173 = por %p171, %p172
      %p175 = scmp.ne.s32.totalorder %s160, %s174
      %p176 = scmp.eq.s32.totalorder %s24, 0
      %p177 = por %p175, %p176
      %s178 = ssub.s32 %s18, %s25
      %p179 = scmp.eq.s32.totalorder %s178, 0
      %s181 = sadd.s32 %s180, 1
      %s182 = scalar_select %p179, %s180, %s181
      %p185 = pneg %p179
      %p186 = scmp.eq.s32.totalorder %s18, 1
      %p187 = por %p185, %p186
      %p188 = scmp.ne.s32.totalorder %s180, %s183
      %p189 = scmp.eq.s32.totalorder %s18, 0
      %p190 = por %p188, %p189
      %p191 = scmp.ne.s32.totalorder %s180, %s183
      %p192 = scmp.eq.s32.totalorder %s23, 1
      %p193 = por %p191, %p192
      %p194 = scmp.ne.s32.totalorder %s183, %s184
      %p195 = scmp.eq.s32.totalorder %s23, 0
      %p196 = por %p194, %p195
      %p197 = scmp.ne.s32.totalorder %s183, %s184
      %p198 = scmp.eq.s32.totalorder %s24, 1
      %p199 = por %p197, %p198
      %p201 = scmp.ne.s32.totalorder %s184, %s200
      %p202 = scmp.eq.s32.totalorder %s24, 0
      %p203 = por %p201, %p202
      %p204 = scmp.le.s32.totalorder 1, %s18
      %p205 = scmp.lt.s32.totalorder %s18, 3
      %p206 = pnand %p204, %p205
      %p207 = pneg %p206
      // Predicated region
      $region9: #{tpu_custom_call.1} parent=5 // pred_check
        _
      $region10: #{tpu_custom_call.1} parent=5 // pred_check_branch
        %209 = sbr.rel (%p206) target = $region12
      $region11: #{tpu_custom_call.1} parent=5 // pred_region
        %s210 = ssub.s32 %s18, 1
        // Predicated region
        $region13: #{tpu_custom_call.1} parent=11 // pred_check
          %p211 = pneg %p65
        $region14: #{tpu_custom_call.1} parent=11 // pred_check_branch
          %213 = sbr.rel (%p211) target = $region16
        $region15: #{tpu_custom_call.1} parent=11 // pred_region
          %215 = vsyncadd [#allocation5], 0
          %s216 = sshll.u32 %s1, 4
          %s217 = int_to_ptr.hbm [resolvable:$true] %s216
          %s218 = sshll.u32 [#allocation4], 4
          %s219 = int_to_ptr.vmem [resolvable:$true] %s218
          %224 = dma.hbm_to_vmem [thread:$0]  %s217, 131072, %s219, [#allocation5], 1024, 1024, 64
        $region16: #{tpu_custom_call.1} parent=11 // pred_fallthru
          _
        // Predicated region
        $region17: #{tpu_custom_call.1} parent=11 // pred_check
          %p225 = pneg %p86
        $region18: #{tpu_custom_call.1} parent=11 // pred_check_branch
          %227 = sbr.rel (%p225) target = $region20
        $region19: #{tpu_custom_call.1} parent=11 // pred_region
          %229 = vsyncadd [#allocation5], 0
          %s231 = sshll.u32 %s2, 4
          %s232 = int_to_ptr.hbm [resolvable:$true] %s231
          %s233 = sshll.u32 [#allocation6], 4
          %s234 = int_to_ptr.vmem [resolvable:$true] %s233
          %236 = dma.hbm_to_vmem [thread:$0]  %s232, 128, %s234, [#allocation5]
        $region20: #{tpu_custom_call.1} parent=11 // pred_fallthru
          _
        // Predicated region
        $region21: #{tpu_custom_call.1} parent=11 // pred_check
          %p237 = pneg %p107
        $region22: #{tpu_custom_call.1} parent=11 // pred_check_branch
          %239 = sbr.rel (%p237) target = $region24
        $region23: #{tpu_custom_call.1} parent=11 // pred_region
          _
        $region24: #{tpu_custom_call.1} parent=11 // pred_fallthru
          _
        // Predicated region
        $region25: #{tpu_custom_call.1} parent=11 // pred_check
          %p240 = pneg %p128
        $region26: #{tpu_custom_call.1} parent=11 // pred_check_branch
          %242 = sbr.rel (%p240) target = $region28
        $region27: #{tpu_custom_call.1} parent=11 // pred_region
          %244 = vsyncadd [#allocation8], 0
          %s246 = sshll.u32 %s4, 4
          %s247 = int_to_ptr.hbm [resolvable:$true] %s246
          %s248 = sshll.u32 [#allocation7], 4
          %s249 = int_to_ptr.vmem [resolvable:$true] %s248
          %251 = dma.hbm_to_vmem [thread:$0]  %s247, 32, %s249, [#allocation8]
        $region28: #{tpu_custom_call.1} parent=11 // pred_fallthru
          _
        // Predicated region
        $region29: #{tpu_custom_call.1} parent=11 // pred_check
          %p252 = pneg %p149
        $region30: #{tpu_custom_call.1} parent=11 // pred_check_branch
          %254 = sbr.rel (%p252) target = $region32
        $region31: #{tpu_custom_call.1} parent=11 // pred_region
          _
        $region32: #{tpu_custom_call.1} parent=11 // pred_fallthru
          _
        // Predicated region
        $region33: #{tpu_custom_call.1} parent=11 // pred_check
          %p255 = pneg %p170
        $region34: #{tpu_custom_call.1} parent=11 // pred_check_branch
          %257 = sbr.rel (%p255) target = $region36
        $region35: #{tpu_custom_call.1} parent=11 // pred_region
          %259 = vsyncadd [#allocation8], 0
          %s261 = sshll.u32 %s6, 4
          %s262 = int_to_ptr.hbm [resolvable:$true] %s261
          %s263 = sshll.u32 [#allocation9], 4
          %s264 = int_to_ptr.vmem [resolvable:$true] %s263
          %266 = dma.hbm_to_vmem [thread:$0]  %s262, 16, %s264, [#allocation8]
        $region36: #{tpu_custom_call.1} parent=11 // pred_fallthru
          _
      $region12: #{tpu_custom_call.1} parent=5 // pred_fallthru
        _
      %p267 = scmp.lt.s32.totalorder %s18, 2
      // Predicated region
      $region37: #{tpu_custom_call.1} parent=5 // pred_check
        %p268 = pneg %p267
      $region38: #{tpu_custom_call.1} parent=5 // pred_check_branch
        %270 = sbr.rel (%p268) target = $region40
      $region39: #{tpu_custom_call.1} parent=5 // pred_region
        // Predicated region
        $region41: #{tpu_custom_call.1} parent=39 // pred_check
          %p271 = pneg %p38
        $region42: #{tpu_custom_call.1} parent=39 // pred_check_branch
          %273 = sbr.rel (%p271) target = $region44
        $region43: #{tpu_custom_call.1} parent=39 // pred_region
          %s274 = sand.u32 %s28, 1
          %s275 = scalar_lea.sflag [#allocation3], %s274
          %s276 = sand.u32 %s28, 1
          %s277 = smul.addr %s276, 64
          %s278 = scalar_lea.vmem [#allocation2], %s277
          %280 = vsyncadd %s275, 0
          %s281 = smul.addr %s18, 8
          %s282 = smul.addr %s281, 8
          %s283 = scalar_lea.hbm %s0, %s282
          %s285 = sshll.u32 %s283, 4
          %s286 = int_to_ptr.hbm [resolvable:$true] %s285
          %s287 = sshll.u32 %s278, 4
          %s288 = int_to_ptr.vmem [resolvable:$true] %s287
          %290 = dma.hbm_to_vmem [thread:$0]  %s286, 1024, %s288, %s275
        $region44: #{tpu_custom_call.1} parent=39 // pred_fallthru
          _
      $region40: #{tpu_custom_call.1} parent=5 // pred_fallthru
        _
      %p291 = scmp.le.s32.totalorder 1, %s18
      %p292 = scmp.lt.s32.totalorder %s18, 3
      %p293 = pnand %p291, %p292
      %p294 = pneg %p293
      // Predicated region
      $region45: #{tpu_custom_call.1} parent=5 // pred_check
        _
      $region46: #{tpu_custom_call.1} parent=5 // pred_check_branch
        %296 = sbr.rel (%p293) target = $region48
      $region47: #{tpu_custom_call.1} parent=5 // pred_region
        %s297 = ssub.s32 %s18, 1
        %s298 = sand.u32 %s31, 1
        %s299 = scalar_lea.sflag [#allocation3], %s298
        %s300 = sand.u32 %s31, 1
        %s301 = smul.addr %s300, 64
        %s302 = scalar_lea.vmem [#allocation2], %s301
        // Predicated region
        $region49: #{tpu_custom_call.1} parent=47 // pred_check
          %p303 = pneg %p44
        $region50: #{tpu_custom_call.1} parent=47 // pred_check_branch
          %305 = sbr.rel (%p303) target = $region52
        $region51: #{tpu_custom_call.1} parent=47 // pred_region
          %307 = dma.done %s299, 1024
        $region52: #{tpu_custom_call.1} parent=47 // pred_fallthru
          _
        // Predicated region
        $region53: #{tpu_custom_call.1} parent=47 // pred_check
          %p308 = pneg %p65
        $region54: #{tpu_custom_call.1} parent=47 // pred_check_branch
          %310 = sbr.rel (%p308) target = $region56
        $region55: #{tpu_custom_call.1} parent=47 // pred_region
          %312 = dma.done [#allocation5], 131072
        $region56: #{tpu_custom_call.1} parent=47 // pred_fallthru
          _
        // Predicated region
        $region57: #{tpu_custom_call.1} parent=47 // pred_check
          %p313 = pneg %p86
        $region58: #{tpu_custom_call.1} parent=47 // pred_check_branch
          %315 = sbr.rel (%p313) target = $region60
        $region59: #{tpu_custom_call.1} parent=47 // pred_region
          %317 = dma.done [#allocation5], 128
        $region60: #{tpu_custom_call.1} parent=47 // pred_fallthru
          _
        // Predicated region
        $region61: #{tpu_custom_call.1} parent=47 // pred_check
          %p318 = pneg %p128
        $region62: #{tpu_custom_call.1} parent=47 // pred_check_branch
          %320 = sbr.rel (%p318) target = $region64
        $region63: #{tpu_custom_call.1} parent=47 // pred_region
          %322 = dma.done [#allocation8], 32
        $region64: #{tpu_custom_call.1} parent=47 // pred_fallthru
          _
        // Predicated region
        $region65: #{tpu_custom_call.1} parent=47 // pred_check
          %p323 = pneg %p170
        $region66: #{tpu_custom_call.1} parent=47 // pred_check_branch
          %325 = sbr.rel (%p323) target = $region68
        $region67: #{tpu_custom_call.1} parent=47 // pred_region
          %327 = dma.done [#allocation8], 16
        $region68: #{tpu_custom_call.1} parent=47 // pred_fallthru
          _
        %s328 = sand.u32 %s31, 1
        %s329 = scalar_lea.sflag [#allocation3], %s328
        %s330 = sand.u32 %s31, 1
        %s331 = smul.addr %s330, 64
        %s332 = scalar_lea.vmem [#allocation2], %s331
        %p333 = pneg %p44
        %p334 = pneg %p41
        %p335 = pneg %p65
        %p336 = pneg %p62
        %p337 = pneg %p86
        %p338 = pneg %p83
        %p339 = pneg %p107
        %p340 = pneg %p104
        %p341 = pneg %p128
        %p342 = pneg %p125
        %p343 = pneg %p149
        %p344 = pneg %p146
        %p345 = pneg %p170
        %p346 = pneg %p167
        %p347 = pneg %p196
        %p348 = pneg %p193
        %p349 = scmp.lt.s32.totalorder %s23, 1
        %s350 = scalar_select %p349, %s23, 1
        %s351 = smul.addr %s350, 8
        %s352 = scalar_lea.vmem %s7, %s351
        %p353 = scmp.lt.s32.totalorder %s23, 1
        %s354 = scalar_select %p353, %s23, 1
        %s355 = smul.addr %s354, 8
        %s356 = scalar_lea.vmem %s7, %s355
        %v357 = vld [vmem:[%s302] sm:$0xff]
        %v358 = vld [vmem:[%s302 + $0x8] sm:$0xff]
        %v359 = vld [vmem:[%s302 + $0x10] sm:$0xff]
        %v360 = vld [vmem:[%s302 + $0x18] sm:$0xff]
        %v361 = vld [vmem:[%s302 + $0x20] sm:$0xff]
        %v362 = vld [vmem:[%s302 + $0x28] sm:$0xff]
        %v363 = vld [vmem:[%s302 + $0x30] sm:$0xff]
        %v364 = vld [vmem:[%s302 + $0x38] sm:$0xff]
        %v365 = vld [vmem:[#allocation4] sm:$0xff]
        %v366 = vld [vmem:[#allocation4 + $0x8] sm:$0xff]
        %v367 = vld [vmem:[#allocation4 + $0x10] sm:$0xff]
        %v368 = vld [vmem:[#allocation4 + $0x18] sm:$0xff]
        %v369 = vld [vmem:[#allocation4 + $0x20] sm:$0xff]
        %v370 = vld [vmem:[#allocation4 + $0x28] sm:$0xff]
        %v371 = vld [vmem:[#allocation4 + $0x30] sm:$0xff]
        %v372 = vld [vmem:[#allocation4 + $0x38] sm:$0xff]
        %v373 = vld [vmem:[#allocation4 + $0x40] sm:$0xff]
        %v374 = vld [vmem:[#allocation4 + $0x48] sm:$0xff]
        %v375 = vld [vmem:[#allocation4 + $0x50] sm:$0xff]
        %v376 = vld [vmem:[#allocation4 + $0x58] sm:$0xff]
        %v377 = vld [vmem:[#allocation4 + $0x60] sm:$0xff]
        %v378 = vld [vmem:[#allocation4 + $0x68] sm:$0xff]
        %v379 = vld [vmem:[#allocation4 + $0x70] sm:$0xff]
        %v380 = vld [vmem:[#allocation4 + $0x78] sm:$0xff]
        %v381 = vld [vmem:[#allocation4 + $0x80] sm:$0xff]
        %v382 = vld [vmem:[#allocation4 + $0x88] sm:$0xff]
        %v383 = vld [vmem:[#allocation4 + $0x90] sm:$0xff]
        %v384 = vld [vmem:[#allocation4 + $0x98] sm:$0xff]
        %v385 = vld [vmem:[#allocation4 + $0xa0] sm:$0xff]
        %v386 = vld [vmem:[#allocation4 + $0xa8] sm:$0xff]
        %v387 = vld [vmem:[#allocation4 + $0xb0] sm:$0xff]
        %v388 = vld [vmem:[#allocation4 + $0xb8] sm:$0xff]
        %v389 = vld [vmem:[#allocation4 + $0xc0] sm:$0xff]
        %v390 = vld [vmem:[#allocation4 + $0xc8] sm:$0xff]
        %v391 = vld [vmem:[#allocation4 + $0xd0] sm:$0xff]
        %v392 = vld [vmem:[#allocation4 + $0xd8] sm:$0xff]
        %v393 = vld [vmem:[#allocation4 + $0xe0] sm:$0xff]
        %v394 = vld [vmem:[#allocation4 + $0xe8] sm:$0xff]
        %v395 = vld [vmem:[#allocation4 + $0xf0] sm:$0xff]
        %v396 = vld [vmem:[#allocation4 + $0xf8] sm:$0xff]
        %v397 = vld [vmem:[#allocation4 + $0x100] sm:$0xff]
        %v398 = vld [vmem:[#allocation4 + $0x108] sm:$0xff]
        %v399 = vld [vmem:[#allocation4 + $0x110] sm:$0xff]
        %v400 = vld [vmem:[#allocation4 + $0x118] sm:$0xff]
        %v401 = vld [vmem:[#allocation4 + $0x120] sm:$0xff]
        %v402 = vld [vmem:[#allocation4 + $0x128] sm:$0xff]
        %v403 = vld [vmem:[#allocation4 + $0x130] sm:$0xff]
        %v404 = vld [vmem:[#allocation4 + $0x138] sm:$0xff]
        %v405 = vld [vmem:[#allocation4 + $0x140] sm:$0xff]
        %v406 = vld [vmem:[#allocation4 + $0x148] sm:$0xff]
        %v407 = vld [vmem:[#allocation4 + $0x150] sm:$0xff]
        %v408 = vld [vmem:[#allocation4 + $0x158] sm:$0xff]
        %v409 = vld [vmem:[#allocation4 + $0x160] sm:$0xff]
        %v410 = vld [vmem:[#allocation4 + $0x168] sm:$0xff]
        %v411 = vld [vmem:[#allocation4 + $0x170] sm:$0xff]
        %v412 = vld [vmem:[#allocation4 + $0x178] sm:$0xff]
        %v413 = vld [vmem:[#allocation4 + $0x180] sm:$0xff]
        %v414 = vld [vmem:[#allocation4 + $0x188] sm:$0xff]
        %v415 = vld [vmem:[#allocation4 + $0x190] sm:$0xff]
        %v416 = vld [vmem:[#allocation4 + $0x198] sm:$0xff]
        %v417 = vld [vmem:[#allocation4 + $0x1a0] sm:$0xff]
        %v418 = vld [vmem:[#allocation4 + $0x1a8] sm:$0xff]
        %v419 = vld [vmem:[#allocation4 + $0x1b0] sm:$0xff]
        %v420 = vld [vmem:[#allocation4 + $0x1b8] sm:$0xff]
        %v421 = vld [vmem:[#allocation4 + $0x1c0] sm:$0xff]
        %v422 = vld [vmem:[#allocation4 + $0x1c8] sm:$0xff]
        %v423 = vld [vmem:[#allocation4 + $0x1d0] sm:$0xff]
        %v424 = vld [vmem:[#allocation4 + $0x1d8] sm:$0xff]
        %v425 = vld [vmem:[#allocation4 + $0x1e0] sm:$0xff]
        %v426 = vld [vmem:[#allocation4 + $0x1e8] sm:$0xff]
        %v427 = vld [vmem:[#allocation4 + $0x1f0] sm:$0xff]
        %v428 = vld [vmem:[#allocation4 + $0x1f8] sm:$0xff]
        %v429 = vld [vmem:[#allocation4 + $0x200] sm:$0xff]
        %v430 = vld [vmem:[#allocation4 + $0x208] sm:$0xff]
        %v431 = vld [vmem:[#allocation4 + $0x210] sm:$0xff]
        %v432 = vld [vmem:[#allocation4 + $0x218] sm:$0xff]
        %v433 = vld [vmem:[#allocation4 + $0x220] sm:$0xff]
        %v434 = vld [vmem:[#allocation4 + $0x228] sm:$0xff]
        %v435 = vld [vmem:[#allocation4 + $0x230] sm:$0xff]
        %v436 = vld [vmem:[#allocation4 + $0x238] sm:$0xff]
        %v437 = vld [vmem:[#allocation4 + $0x240] sm:$0xff]
        %v438 = vld [vmem:[#allocation4 + $0x248] sm:$0xff]
        %v439 = vld [vmem:[#allocation4 + $0x250] sm:$0xff]
        %v440 = vld [vmem:[#allocation4 + $0x258] sm:$0xff]
        %v441 = vld [vmem:[#allocation4 + $0x260] sm:$0xff]
        %v442 = vld [vmem:[#allocation4 + $0x268] sm:$0xff]
        %v443 = vld [vmem:[#allocation4 + $0x270] sm:$0xff]
        %v444 = vld [vmem:[#allocation4 + $0x278] sm:$0xff]
        %v445 = vld [vmem:[#allocation4 + $0x280] sm:$0xff]
        %v446 = vld [vmem:[#allocation4 + $0x288] sm:$0xff]
        %v447 = vld [vmem:[#allocation4 + $0x290] sm:$0xff]
        %v448 = vld [vmem:[#allocation4 + $0x298] sm:$0xff]
        %v449 = vld [vmem:[#allocation4 + $0x2a0] sm:$0xff]
        %v450 = vld [vmem:[#allocation4 + $0x2a8] sm:$0xff]
        %v451 = vld [vmem:[#allocation4 + $0x2b0] sm:$0xff]
        %v452 = vld [vmem:[#allocation4 + $0x2b8] sm:$0xff]
        %v453 = vld [vmem:[#allocation4 + $0x2c0] sm:$0xff]
        %v454 = vld [vmem:[#allocation4 + $0x2c8] sm:$0xff]
        %v455 = vld [vmem:[#allocation4 + $0x2d0] sm:$0xff]
        %v456 = vld [vmem:[#allocation4 + $0x2d8] sm:$0xff]
        %v457 = vld [vmem:[#allocation4 + $0x2e0] sm:$0xff]
        %v458 = vld [vmem:[#allocation4 + $0x2e8] sm:$0xff]
        %v459 = vld [vmem:[#allocation4 + $0x2f0] sm:$0xff]
        %v460 = vld [vmem:[#allocation4 + $0x2f8] sm:$0xff]
        %v461 = vld [vmem:[#allocation4 + $0x300] sm:$0xff]
        %v462 = vld [vmem:[#allocation4 + $0x308] sm:$0xff]
        %v463 = vld [vmem:[#allocation4 + $0x310] sm:$0xff]
        %v464 = vld [vmem:[#allocation4 + $0x318] sm:$0xff]
        %v465 = vld [vmem:[#allocation4 + $0x320] sm:$0xff]
        %v466 = vld [vmem:[#allocation4 + $0x328] sm:$0xff]
        %v467 = vld [vmem:[#allocation4 + $0x330] sm:$0xff]
        %v468 = vld [vmem:[#allocation4 + $0x338] sm:$0xff]
        %v469 = vld [vmem:[#allocation4 + $0x340] sm:$0xff]
        %v470 = vld [vmem:[#allocation4 + $0x348] sm:$0xff]
        %v471 = vld [vmem:[#allocation4 + $0x350] sm:$0xff]
        %v472 = vld [vmem:[#allocation4 + $0x358] sm:$0xff]
        %v473 = vld [vmem:[#allocation4 + $0x360] sm:$0xff]
        %v474 = vld [vmem:[#allocation4 + $0x368] sm:$0xff]
        %v475 = vld [vmem:[#allocation4 + $0x370] sm:$0xff]
        %v476 = vld [vmem:[#allocation4 + $0x378] sm:$0xff]
        %v477 = vld [vmem:[#allocation4 + $0x380] sm:$0xff]
        %v478 = vld [vmem:[#allocation4 + $0x388] sm:$0xff]
        %v479 = vld [vmem:[#allocation4 + $0x390] sm:$0xff]
        %v480 = vld [vmem:[#allocation4 + $0x398] sm:$0xff]
        %v481 = vld [vmem:[#allocation4 + $0x3a0] sm:$0xff]
        %v482 = vld [vmem:[#allocation4 + $0x3a8] sm:$0xff]
        %v483 = vld [vmem:[#allocation4 + $0x3b0] sm:$0xff]
        %v484 = vld [vmem:[#allocation4 + $0x3b8] sm:$0xff]
        %v485 = vld [vmem:[#allocation4 + $0x3c0] sm:$0xff]
        %v486 = vld [vmem:[#allocation4 + $0x3c8] sm:$0xff]
        %v487 = vld [vmem:[#allocation4 + $0x3d0] sm:$0xff]
        %v488 = vld [vmem:[#allocation4 + $0x3d8] sm:$0xff]
        %v489 = vld [vmem:[#allocation4 + $0x3e0] sm:$0xff]
        %v490 = vld [vmem:[#allocation4 + $0x3e8] sm:$0xff]
        %v491 = vld [vmem:[#allocation4 + $0x3f0] sm:$0xff]
        %v492 = vld [vmem:[#allocation4 + $0x3f8] sm:$0xff]
        %v493 = vld [vmem:[#allocation4 + $0x400] sm:$0xff]
        %v494 = vld [vmem:[#allocation4 + $0x408] sm:$0xff]
        %v495 = vld [vmem:[#allocation4 + $0x410] sm:$0xff]
        %v496 = vld [vmem:[#allocation4 + $0x418] sm:$0xff]
        %v497 = vld [vmem:[#allocation4 + $0x420] sm:$0xff]
        %v498 = vld [vmem:[#allocation4 + $0x428] sm:$0xff]
        %v499 = vld [vmem:[#allocation4 + $0x430] sm:$0xff]
        %v500 = vld [vmem:[#allocation4 + $0x438] sm:$0xff]
        %v501 = vld [vmem:[#allocation4 + $0x440] sm:$0xff]
        %v502 = vld [vmem:[#allocation4 + $0x448] sm:$0xff]
        %v503 = vld [vmem:[#allocation4 + $0x450] sm:$0xff]
        %v504 = vld [vmem:[#allocation4 + $0x458] sm:$0xff]
        %v505 = vld [vmem:[#allocation4 + $0x460] sm:$0xff]
        %v506 = vld [vmem:[#allocation4 + $0x468] sm:$0xff]
        %v507 = vld [vmem:[#allocation4 + $0x470] sm:$0xff]
        %v508 = vld [vmem:[#allocation4 + $0x478] sm:$0xff]
        %v509 = vld [vmem:[#allocation4 + $0x480] sm:$0xff]
        %v510 = vld [vmem:[#allocation4 + $0x488] sm:$0xff]
        %v511 = vld [vmem:[#allocation4 + $0x490] sm:$0xff]
        %v512 = vld [vmem:[#allocation4 + $0x498] sm:$0xff]
        %v513 = vld [vmem:[#allocation4 + $0x4a0] sm:$0xff]
        %v514 = vld [vmem:[#allocation4 + $0x4a8] sm:$0xff]
        %v515 = vld [vmem:[#allocation4 + $0x4b0] sm:$0xff]
        %v516 = vld [vmem:[#allocation4 + $0x4b8] sm:$0xff]
        %v517 = vld [vmem:[#allocation4 + $0x4c0] sm:$0xff]
        %v518 = vld [vmem:[#allocation4 + $0x4c8] sm:$0xff]
        %v519 = vld [vmem:[#allocation4 + $0x4d0] sm:$0xff]
        %v520 = vld [vmem:[#allocation4 + $0x4d8] sm:$0xff]
        %v521 = vld [vmem:[#allocation4 + $0x4e0] sm:$0xff]
        %v522 = vld [vmem:[#allocation4 + $0x4e8] sm:$0xff]
        %v523 = vld [vmem:[#allocation4 + $0x4f0] sm:$0xff]
        %v524 = vld [vmem:[#allocation4 + $0x4f8] sm:$0xff]
        %v525 = vld [vmem:[#allocation4 + $0x500] sm:$0xff]
        %v526 = vld [vmem:[#allocation4 + $0x508] sm:$0xff]
        %v527 = vld [vmem:[#allocation4 + $0x510] sm:$0xff]
        %v528 = vld [vmem:[#allocation4 + $0x518] sm:$0xff]
        %v529 = vld [vmem:[#allocation4 + $0x520] sm:$0xff]
        %v530 = vld [vmem:[#allocation4 + $0x528] sm:$0xff]
        %v531 = vld [vmem:[#allocation4 + $0x530] sm:$0xff]
        %v532 = vld [vmem:[#allocation4 + $0x538] sm:$0xff]
        %v533 = vld [vmem:[#allocation4 + $0x540] sm:$0xff]
        %v534 = vld [vmem:[#allocation4 + $0x548] sm:$0xff]
        %v535 = vld [vmem:[#allocation4 + $0x550] sm:$0xff]
        %v536 = vld [vmem:[#allocation4 + $0x558] sm:$0xff]
        %v537 = vld [vmem:[#allocation4 + $0x560] sm:$0xff]
        %v538 = vld [vmem:[#allocation4 + $0x568] sm:$0xff]
        %v539 = vld [vmem:[#allocation4 + $0x570] sm:$0xff]
        %v540 = vld [vmem:[#allocation4 + $0x578] sm:$0xff]
        %v541 = vld [vmem:[#allocation4 + $0x580] sm:$0xff]
        %v542 = vld [vmem:[#allocation4 + $0x588] sm:$0xff]
        %v543 = vld [vmem:[#allocation4 + $0x590] sm:$0xff]
        %v544 = vld [vmem:[#allocation4 + $0x598] sm:$0xff]
        %v545 = vld [vmem:[#allocation4 + $0x5a0] sm:$0xff]
        %v546 = vld [vmem:[#allocation4 + $0x5a8] sm:$0xff]
        %v547 = vld [vmem:[#allocation4 + $0x5b0] sm:$0xff]
        %v548 = vld [vmem:[#allocation4 + $0x5b8] sm:$0xff]
        %v549 = vld [vmem:[#allocation4 + $0x5c0] sm:$0xff]
        %v550 = vld [vmem:[#allocation4 + $0x5c8] sm:$0xff]
        %v551 = vld [vmem:[#allocation4 + $0x5d0] sm:$0xff]
        %v552 = vld [vmem:[#allocation4 + $0x5d8] sm:$0xff]
        %v553 = vld [vmem:[#allocation4 + $0x5e0] sm:$0xff]
        %v554 = vld [vmem:[#allocation4 + $0x5e8] sm:$0xff]
        %v555 = vld [vmem:[#allocation4 + $0x5f0] sm:$0xff]
        %v556 = vld [vmem:[#allocation4 + $0x5f8] sm:$0xff]
        %v557 = vld [vmem:[#allocation4 + $0x600] sm:$0xff]
        %v558 = vld [vmem:[#allocation4 + $0x608] sm:$0xff]
        %v559 = vld [vmem:[#allocation4 + $0x610] sm:$0xff]
        %v560 = vld [vmem:[#allocation4 + $0x618] sm:$0xff]
        %v561 = vld [vmem:[#allocation4 + $0x620] sm:$0xff]
        %v562 = vld [vmem:[#allocation4 + $0x628] sm:$0xff]
        %v563 = vld [vmem:[#allocation4 + $0x630] sm:$0xff]
        %v564 = vld [vmem:[#allocation4 + $0x638] sm:$0xff]
        %v565 = vld [vmem:[#allocation4 + $0x640] sm:$0xff]
        %v566 = vld [vmem:[#allocation4 + $0x648] sm:$0xff]
        %v567 = vld [vmem:[#allocation4 + $0x650] sm:$0xff]
        %v568 = vld [vmem:[#allocation4 + $0x658] sm:$0xff]
        %v569 = vld [vmem:[#allocation4 + $0x660] sm:$0xff]
        %v570 = vld [vmem:[#allocation4 + $0x668] sm:$0xff]
        %v571 = vld [vmem:[#allocation4 + $0x670] sm:$0xff]
        %v572 = vld [vmem:[#allocation4 + $0x678] sm:$0xff]
        %v573 = vld [vmem:[#allocation4 + $0x680] sm:$0xff]
        %v574 = vld [vmem:[#allocation4 + $0x688] sm:$0xff]
        %v575 = vld [vmem:[#allocation4 + $0x690] sm:$0xff]
        %v576 = vld [vmem:[#allocation4 + $0x698] sm:$0xff]
        %v577 = vld [vmem:[#allocation4 + $0x6a0] sm:$0xff]
        %v578 = vld [vmem:[#allocation4 + $0x6a8] sm:$0xff]
        %v579 = vld [vmem:[#allocation4 + $0x6b0] sm:$0xff]
        %v580 = vld [vmem:[#allocation4 + $0x6b8] sm:$0xff]
        %v581 = vld [vmem:[#allocation4 + $0x6c0] sm:$0xff]
        %v582 = vld [vmem:[#allocation4 + $0x6c8] sm:$0xff]
        %v583 = vld [vmem:[#allocation4 + $0x6d0] sm:$0xff]
        %v584 = vld [vmem:[#allocation4 + $0x6d8] sm:$0xff]
        %v585 = vld [vmem:[#allocation4 + $0x6e0] sm:$0xff]
        %v586 = vld [vmem:[#allocation4 + $0x6e8] sm:$0xff]
        %v587 = vld [vmem:[#allocation4 + $0x6f0] sm:$0xff]
        %v588 = vld [vmem:[#allocation4 + $0x6f8] sm:$0xff]
        %v589 = vld [vmem:[#allocation4 + $0x700] sm:$0xff]
        %v590 = vld [vmem:[#allocation4 + $0x708] sm:$0xff]
        %v591 = vld [vmem:[#allocation4 + $0x710] sm:$0xff]
        %v592 = vld [vmem:[#allocation4 + $0x718] sm:$0xff]
        %v593 = vld [vmem:[#allocation4 + $0x720] sm:$0xff]
        %v594 = vld [vmem:[#allocation4 + $0x728] sm:$0xff]
        %v595 = vld [vmem:[#allocation4 + $0x730] sm:$0xff]
        %v596 = vld [vmem:[#allocation4 + $0x738] sm:$0xff]
        %v597 = vld [vmem:[#allocation4 + $0x740] sm:$0xff]
        %v598 = vld [vmem:[#allocation4 + $0x748] sm:$0xff]
        %v599 = vld [vmem:[#allocation4 + $0x750] sm:$0xff]
        %v600 = vld [vmem:[#allocation4 + $0x758] sm:$0xff]
        %v601 = vld [vmem:[#allocation4 + $0x760] sm:$0xff]
        %v602 = vld [vmem:[#allocation4 + $0x768] sm:$0xff]
        %v603 = vld [vmem:[#allocation4 + $0x770] sm:$0xff]
        %v604 = vld [vmem:[#allocation4 + $0x778] sm:$0xff]
        %v605 = vld [vmem:[#allocation4 + $0x780] sm:$0xff]
        %v606 = vld [vmem:[#allocation4 + $0x788] sm:$0xff]
        %v607 = vld [vmem:[#allocation4 + $0x790] sm:$0xff]
        %v608 = vld [vmem:[#allocation4 + $0x798] sm:$0xff]
        %v609 = vld [vmem:[#allocation4 + $0x7a0] sm:$0xff]
        %v610 = vld [vmem:[#allocation4 + $0x7a8] sm:$0xff]
        %v611 = vld [vmem:[#allocation4 + $0x7b0] sm:$0xff]
        %v612 = vld [vmem:[#allocation4 + $0x7b8] sm:$0xff]
        %v613 = vld [vmem:[#allocation4 + $0x7c0] sm:$0xff]
        %v614 = vld [vmem:[#allocation4 + $0x7c8] sm:$0xff]
        %v615 = vld [vmem:[#allocation4 + $0x7d0] sm:$0xff]
        %v616 = vld [vmem:[#allocation4 + $0x7d8] sm:$0xff]
        %v617 = vld [vmem:[#allocation4 + $0x7e0] sm:$0xff]
        %v618 = vld [vmem:[#allocation4 + $0x7e8] sm:$0xff]
        %v619 = vld [vmem:[#allocation4 + $0x7f0] sm:$0xff]
        %v620 = vld [vmem:[#allocation4 + $0x7f8] sm:$0xff]
        %v621 = vld [vmem:[#allocation4 + $0x800] sm:$0xff]
        %v622 = vld [vmem:[#allocation4 + $0x808] sm:$0xff]
        %v623 = vld [vmem:[#allocation4 + $0x810] sm:$0xff]
        %v624 = vld [vmem:[#allocation4 + $0x818] sm:$0xff]
        %v625 = vld [vmem:[#allocation4 + $0x820] sm:$0xff]
        %v626 = vld [vmem:[#allocation4 + $0x828] sm:$0xff]
        %v627 = vld [vmem:[#allocation4 + $0x830] sm:$0xff]
        %v628 = vld [vmem:[#allocation4 + $0x838] sm:$0xff]
        %v629 = vld [vmem:[#allocation4 + $0x840] sm:$0xff]
        %v630 = vld [vmem:[#allocation4 + $0x848] sm:$0xff]
        %v631 = vld [vmem:[#allocation4 + $0x850] sm:$0xff]
        %v632 = vld [vmem:[#allocation4 + $0x858] sm:$0xff]
        %v633 = vld [vmem:[#allocation4 + $0x860] sm:$0xff]
        %v634 = vld [vmem:[#allocation4 + $0x868] sm:$0xff]
        %v635 = vld [vmem:[#allocation4 + $0x870] sm:$0xff]
        %v636 = vld [vmem:[#allocation4 + $0x878] sm:$0xff]
        %v637 = vld [vmem:[#allocation4 + $0x880] sm:$0xff]
        %v638 = vld [vmem:[#allocation4 + $0x888] sm:$0xff]
        %v639 = vld [vmem:[#allocation4 + $0x890] sm:$0xff]
        %v640 = vld [vmem:[#allocation4 + $0x898] sm:$0xff]
        %v641 = vld [vmem:[#allocation4 + $0x8a0] sm:$0xff]
        %v642 = vld [vmem:[#allocation4 + $0x8a8] sm:$0xff]
        %v643 = vld [vmem:[#allocation4 + $0x8b0] sm:$0xff]
        %v644 = vld [vmem:[#allocation4 + $0x8b8] sm:$0xff]
        %v645 = vld [vmem:[#allocation4 + $0x8c0] sm:$0xff]
        %v646 = vld [vmem:[#allocation4 + $0x8c8] sm:$0xff]
        %v647 = vld [vmem:[#allocation4 + $0x8d0] sm:$0xff]
        %v648 = vld [vmem:[#allocation4 + $0x8d8] sm:$0xff]
        %v649 = vld [vmem:[#allocation4 + $0x8e0] sm:$0xff]
        %v650 = vld [vmem:[#allocation4 + $0x8e8] sm:$0xff]
        %v651 = vld [vmem:[#allocation4 + $0x8f0] sm:$0xff]
        %v652 = vld [vmem:[#allocation4 + $0x8f8] sm:$0xff]
        %v653 = vld [vmem:[#allocation4 + $0x900] sm:$0xff]
        %v654 = vld [vmem:[#allocation4 + $0x908] sm:$0xff]
        %v655 = vld [vmem:[#allocation4 + $0x910] sm:$0xff]
        %v656 = vld [vmem:[#allocation4 + $0x918] sm:$0xff]
        %v657 = vld [vmem:[#allocation4 + $0x920] sm:$0xff]
        %v658 = vld [vmem:[#allocation4 + $0x928] sm:$0xff]
        %v659 = vld [vmem:[#allocation4 + $0x930] sm:$0xff]
        %v660 = vld [vmem:[#allocation4 + $0x938] sm:$0xff]
        %v661 = vld [vmem:[#allocation4 + $0x940] sm:$0xff]
        %v662 = vld [vmem:[#allocation4 + $0x948] sm:$0xff]
        %v663 = vld [vmem:[#allocation4 + $0x950] sm:$0xff]
        %v664 = vld [vmem:[#allocation4 + $0x958] sm:$0xff]
        %v665 = vld [vmem:[#allocation4 + $0x960] sm:$0xff]
        %v666 = vld [vmem:[#allocation4 + $0x968] sm:$0xff]
        %v667 = vld [vmem:[#allocation4 + $0x970] sm:$0xff]
        %v668 = vld [vmem:[#allocation4 + $0x978] sm:$0xff]
        %v669 = vld [vmem:[#allocation4 + $0x980] sm:$0xff]
        %v670 = vld [vmem:[#allocation4 + $0x988] sm:$0xff]
        %v671 = vld [vmem:[#allocation4 + $0x990] sm:$0xff]
        %v672 = vld [vmem:[#allocation4 + $0x998] sm:$0xff]
        %v673 = vld [vmem:[#allocation4 + $0x9a0] sm:$0xff]
        %v674 = vld [vmem:[#allocation4 + $0x9a8] sm:$0xff]
        %v675 = vld [vmem:[#allocation4 + $0x9b0] sm:$0xff]
        %v676 = vld [vmem:[#allocation4 + $0x9b8] sm:$0xff]
        %v677 = vld [vmem:[#allocation4 + $0x9c0] sm:$0xff]
        %v678 = vld [vmem:[#allocation4 + $0x9c8] sm:$0xff]
        %v679 = vld [vmem:[#allocation4 + $0x9d0] sm:$0xff]
        %v680 = vld [vmem:[#allocation4 + $0x9d8] sm:$0xff]
        %v681 = vld [vmem:[#allocation4 + $0x9e0] sm:$0xff]
        %v682 = vld [vmem:[#allocation4 + $0x9e8] sm:$0xff]
        %v683 = vld [vmem:[#allocation4 + $0x9f0] sm:$0xff]
        %v684 = vld [vmem:[#allocation4 + $0x9f8] sm:$0xff]
        %v685 = vld [vmem:[#allocation4 + $0xa00] sm:$0xff]
        %v686 = vld [vmem:[#allocation4 + $0xa08] sm:$0xff]
        %v687 = vld [vmem:[#allocation4 + $0xa10] sm:$0xff]
        %v688 = vld [vmem:[#allocation4 + $0xa18] sm:$0xff]
        %v689 = vld [vmem:[#allocation4 + $0xa20] sm:$0xff]
        %v690 = vld [vmem:[#allocation4 + $0xa28] sm:$0xff]
        %v691 = vld [vmem:[#allocation4 + $0xa30] sm:$0xff]
        %v692 = vld [vmem:[#allocation4 + $0xa38] sm:$0xff]
        %v693 = vld [vmem:[#allocation4 + $0xa40] sm:$0xff]
        %v694 = vld [vmem:[#allocation4 + $0xa48] sm:$0xff]
        %v695 = vld [vmem:[#allocation4 + $0xa50] sm:$0xff]
        %v696 = vld [vmem:[#allocation4 + $0xa58] sm:$0xff]
        %v697 = vld [vmem:[#allocation4 + $0xa60] sm:$0xff]
        %v698 = vld [vmem:[#allocation4 + $0xa68] sm:$0xff]
        %v699 = vld [vmem:[#allocation4 + $0xa70] sm:$0xff]
        %v700 = vld [vmem:[#allocation4 + $0xa78] sm:$0xff]
        %v701 = vld [vmem:[#allocation4 + $0xa80] sm:$0xff]
        %v702 = vld [vmem:[#allocation4 + $0xa88] sm:$0xff]
        %v703 = vld [vmem:[#allocation4 + $0xa90] sm:$0xff]
        %v704 = vld [vmem:[#allocation4 + $0xa98] sm:$0xff]
        %v705 = vld [vmem:[#allocation4 + $0xaa0] sm:$0xff]
        %v706 = vld [vmem:[#allocation4 + $0xaa8] sm:$0xff]
        %v707 = vld [vmem:[#allocation4 + $0xab0] sm:$0xff]
        %v708 = vld [vmem:[#allocation4 + $0xab8] sm:$0xff]
        %v709 = vld [vmem:[#allocation4 + $0xac0] sm:$0xff]
        %v710 = vld [vmem:[#allocation4 + $0xac8] sm:$0xff]
        %v711 = vld [vmem:[#allocation4 + $0xad0] sm:$0xff]
        %v712 = vld [vmem:[#allocation4 + $0xad8] sm:$0xff]
        %v713 = vld [vmem:[#allocation4 + $0xae0] sm:$0xff]
        %v714 = vld [vmem:[#allocation4 + $0xae8] sm:$0xff]
        %v715 = vld [vmem:[#allocation4 + $0xaf0] sm:$0xff]
        %v716 = vld [vmem:[#allocation4 + $0xaf8] sm:$0xff]
        %v717 = vld [vmem:[#allocation4 + $0xb00] sm:$0xff]
        %v718 = vld [vmem:[#allocation4 + $0xb08] sm:$0xff]
        %v719 = vld [vmem:[#allocation4 + $0xb10] sm:$0xff]
        %v720 = vld [vmem:[#allocation4 + $0xb18] sm:$0xff]
        %v721 = vld [vmem:[#allocation4 + $0xb20] sm:$0xff]
        %v722 = vld [vmem:[#allocation4 + $0xb28] sm:$0xff]
        %v723 = vld [vmem:[#allocation4 + $0xb30] sm:$0xff]
        %v724 = vld [vmem:[#allocation4 + $0xb38] sm:$0xff]
        %v725 = vld [vmem:[#allocation4 + $0xb40] sm:$0xff]
        %v726 = vld [vmem:[#allocation4 + $0xb48] sm:$0xff]
        %v727 = vld [vmem:[#allocation4 + $0xb50] sm:$0xff]
        %v728 = vld [vmem:[#allocation4 + $0xb58] sm:$0xff]
        %v729 = vld [vmem:[#allocation4 + $0xb60] sm:$0xff]
        %v730 = vld [vmem:[#allocation4 + $0xb68] sm:$0xff]
        %v731 = vld [vmem:[#allocation4 + $0xb70] sm:$0xff]
        %v732 = vld [vmem:[#allocation4 + $0xb78] sm:$0xff]
        %v733 = vld [vmem:[#allocation4 + $0xb80] sm:$0xff]
        %v734 = vld [vmem:[#allocation4 + $0xb88] sm:$0xff]
        %v735 = vld [vmem:[#allocation4 + $0xb90] sm:$0xff]
        %v736 = vld [vmem:[#allocation4 + $0xb98] sm:$0xff]
        %v737 = vld [vmem:[#allocation4 + $0xba0] sm:$0xff]
        %v738 = vld [vmem:[#allocation4 + $0xba8] sm:$0xff]
        %v739 = vld [vmem:[#allocation4 + $0xbb0] sm:$0xff]
        %v740 = vld [vmem:[#allocation4 + $0xbb8] sm:$0xff]
        %v741 = vld [vmem:[#allocation4 + $0xbc0] sm:$0xff]
        %v742 = vld [vmem:[#allocation4 + $0xbc8] sm:$0xff]
        %v743 = vld [vmem:[#allocation4 + $0xbd0] sm:$0xff]
        %v744 = vld [vmem:[#allocation4 + $0xbd8] sm:$0xff]
        %v745 = vld [vmem:[#allocation4 + $0xbe0] sm:$0xff]
        %v746 = vld [vmem:[#allocation4 + $0xbe8] sm:$0xff]
        %v747 = vld [vmem:[#allocation4 + $0xbf0] sm:$0xff]
        %v748 = vld [vmem:[#allocation4 + $0xbf8] sm:$0xff]
        %v749 = vld [vmem:[#allocation4 + $0xc00] sm:$0xff]
        %v750 = vld [vmem:[#allocation4 + $0xc08] sm:$0xff]
        %v751 = vld [vmem:[#allocation4 + $0xc10] sm:$0xff]
        %v752 = vld [vmem:[#allocation4 + $0xc18] sm:$0xff]
        %v753 = vld [vmem:[#allocation4 + $0xc20] sm:$0xff]
        %v754 = vld [vmem:[#allocation4 + $0xc28] sm:$0xff]
        %v755 = vld [vmem:[#allocation4 + $0xc30] sm:$0xff]
        %v756 = vld [vmem:[#allocation4 + $0xc38] sm:$0xff]
        %v757 = vld [vmem:[#allocation4 + $0xc40] sm:$0xff]
        %v758 = vld [vmem:[#allocation4 + $0xc48] sm:$0xff]
        %v759 = vld [vmem:[#allocation4 + $0xc50] sm:$0xff]
        %v760 = vld [vmem:[#allocation4 + $0xc58] sm:$0xff]
        %v761 = vld [vmem:[#allocation4 + $0xc60] sm:$0xff]
        %v762 = vld [vmem:[#allocation4 + $0xc68] sm:$0xff]
        %v763 = vld [vmem:[#allocation4 + $0xc70] sm:$0xff]
        %v764 = vld [vmem:[#allocation4 + $0xc78] sm:$0xff]
        %v765 = vld [vmem:[#allocation4 + $0xc80] sm:$0xff]
        %v766 = vld [vmem:[#allocation4 + $0xc88] sm:$0xff]
        %v767 = vld [vmem:[#allocation4 + $0xc90] sm:$0xff]
        %v768 = vld [vmem:[#allocation4 + $0xc98] sm:$0xff]
        %v769 = vld [vmem:[#allocation4 + $0xca0] sm:$0xff]
        %v770 = vld [vmem:[#allocation4 + $0xca8] sm:$0xff]
        %v771 = vld [vmem:[#allocation4 + $0xcb0] sm:$0xff]
        %v772 = vld [vmem:[#allocation4 + $0xcb8] sm:$0xff]
        %v773 = vld [vmem:[#allocation4 + $0xcc0] sm:$0xff]
        %v774 = vld [vmem:[#allocation4 + $0xcc8] sm:$0xff]
        %v775 = vld [vmem:[#allocation4 + $0xcd0] sm:$0xff]
        %v776 = vld [vmem:[#allocation4 + $0xcd8] sm:$0xff]
        %v777 = vld [vmem:[#allocation4 + $0xce0] sm:$0xff]
        %v778 = vld [vmem:[#allocation4 + $0xce8] sm:$0xff]
        %v779 = vld [vmem:[#allocation4 + $0xcf0] sm:$0xff]
        %v780 = vld [vmem:[#allocation4 + $0xcf8] sm:$0xff]
        %v781 = vld [vmem:[#allocation4 + $0xd00] sm:$0xff]
        %v782 = vld [vmem:[#allocation4 + $0xd08] sm:$0xff]
        %v783 = vld [vmem:[#allocation4 + $0xd10] sm:$0xff]
        %v784 = vld [vmem:[#allocation4 + $0xd18] sm:$0xff]
        %v785 = vld [vmem:[#allocation4 + $0xd20] sm:$0xff]
        %v786 = vld [vmem:[#allocation4 + $0xd28] sm:$0xff]
        %v787 = vld [vmem:[#allocation4 + $0xd30] sm:$0xff]
        %v788 = vld [vmem:[#allocation4 + $0xd38] sm:$0xff]
        %v789 = vld [vmem:[#allocation4 + $0xd40] sm:$0xff]
        %v790 = vld [vmem:[#allocation4 + $0xd48] sm:$0xff]
        %v791 = vld [vmem:[#allocation4 + $0xd50] sm:$0xff]
        %v792 = vld [vmem:[#allocation4 + $0xd58] sm:$0xff]
        %v793 = vld [vmem:[#allocation4 + $0xd60] sm:$0xff]
        %v794 = vld [vmem:[#allocation4 + $0xd68] sm:$0xff]
        %v795 = vld [vmem:[#allocation4 + $0xd70] sm:$0xff]
        %v796 = vld [vmem:[#allocation4 + $0xd78] sm:$0xff]
        %v797 = vld [vmem:[#allocation4 + $0xd80] sm:$0xff]
        %v798 = vld [vmem:[#allocation4 + $0xd88] sm:$0xff]
        %v799 = vld [vmem:[#allocation4 + $0xd90] sm:$0xff]
        %v800 = vld [vmem:[#allocation4 + $0xd98] sm:$0xff]
        %v801 = vld [vmem:[#allocation4 + $0xda0] sm:$0xff]
        %v802 = vld [vmem:[#allocation4 + $0xda8] sm:$0xff]
        %v803 = vld [vmem:[#allocation4 + $0xdb0] sm:$0xff]
        %v804 = vld [vmem:[#allocation4 + $0xdb8] sm:$0xff]
        %v805 = vld [vmem:[#allocation4 + $0xdc0] sm:$0xff]
        %v806 = vld [vmem:[#allocation4 + $0xdc8] sm:$0xff]
        %v807 = vld [vmem:[#allocation4 + $0xdd0] sm:$0xff]
        %v808 = vld [vmem:[#allocation4 + $0xdd8] sm:$0xff]
        %v809 = vld [vmem:[#allocation4 + $0xde0] sm:$0xff]
        %v810 = vld [vmem:[#allocation4 + $0xde8] sm:$0xff]
        %v811 = vld [vmem:[#allocation4 + $0xdf0] sm:$0xff]
        %v812 = vld [vmem:[#allocation4 + $0xdf8] sm:$0xff]
        %v813 = vld [vmem:[#allocation4 + $0xe00] sm:$0xff]
        %v814 = vld [vmem:[#allocation4 + $0xe08] sm:$0xff]
        %v815 = vld [vmem:[#allocation4 + $0xe10] sm:$0xff]
        %v816 = vld [vmem:[#allocation4 + $0xe18] sm:$0xff]
        %v817 = vld [vmem:[#allocation4 + $0xe20] sm:$0xff]
        %v818 = vld [vmem:[#allocation4 + $0xe28] sm:$0xff]
        %v819 = vld [vmem:[#allocation4 + $0xe30] sm:$0xff]
        %v820 = vld [vmem:[#allocation4 + $0xe38] sm:$0xff]
        %v821 = vld [vmem:[#allocation4 + $0xe40] sm:$0xff]
        %v822 = vld [vmem:[#allocation4 + $0xe48] sm:$0xff]
        %v823 = vld [vmem:[#allocation4 + $0xe50] sm:$0xff]
        %v824 = vld [vmem:[#allocation4 + $0xe58] sm:$0xff]
        %v825 = vld [vmem:[#allocation4 + $0xe60] sm:$0xff]
        %v826 = vld [vmem:[#allocation4 + $0xe68] sm:$0xff]
        %v827 = vld [vmem:[#allocation4 + $0xe70] sm:$0xff]
        %v828 = vld [vmem:[#allocation4 + $0xe78] sm:$0xff]
        %v829 = vld [vmem:[#allocation4 + $0xe80] sm:$0xff]
        %v830 = vld [vmem:[#allocation4 + $0xe88] sm:$0xff]
        %v831 = vld [vmem:[#allocation4 + $0xe90] sm:$0xff]
        %v832 = vld [vmem:[#allocation4 + $0xe98] sm:$0xff]
        %v833 = vld [vmem:[#allocation4 + $0xea0] sm:$0xff]
        %v834 = vld [vmem:[#allocation4 + $0xea8] sm:$0xff]
        %v835 = vld [vmem:[#allocation4 + $0xeb0] sm:$0xff]
        %v836 = vld [vmem:[#allocation4 + $0xeb8] sm:$0xff]
        %v837 = vld [vmem:[#allocation4 + $0xec0] sm:$0xff]
        %v838 = vld [vmem:[#allocation4 + $0xec8] sm:$0xff]
        %v839 = vld [vmem:[#allocation4 + $0xed0] sm:$0xff]
        %v840 = vld [vmem:[#allocation4 + $0xed8] sm:$0xff]
        %v841 = vld [vmem:[#allocation4 + $0xee0] sm:$0xff]
        %v842 = vld [vmem:[#allocation4 + $0xee8] sm:$0xff]
        %v843 = vld [vmem:[#allocation4 + $0xef0] sm:$0xff]
        %v844 = vld [vmem:[#allocation4 + $0xef8] sm:$0xff]
        %v845 = vld [vmem:[#allocation4 + $0xf00] sm:$0xff]
        %v846 = vld [vmem:[#allocation4 + $0xf08] sm:$0xff]
        %v847 = vld [vmem:[#allocation4 + $0xf10] sm:$0xff]
        %v848 = vld [vmem:[#allocation4 + $0xf18] sm:$0xff]
        %v849 = vld [vmem:[#allocation4 + $0xf20] sm:$0xff]
        %v850 = vld [vmem:[#allocation4 + $0xf28] sm:$0xff]
        %v851 = vld [vmem:[#allocation4 + $0xf30] sm:$0xff]
        %v852 = vld [vmem:[#allocation4 + $0xf38] sm:$0xff]
        %v853 = vld [vmem:[#allocation4 + $0xf40] sm:$0xff]
        %v854 = vld [vmem:[#allocation4 + $0xf48] sm:$0xff]
        %v855 = vld [vmem:[#allocation4 + $0xf50] sm:$0xff]
        %v856 = vld [vmem:[#allocation4 + $0xf58] sm:$0xff]
        %v857 = vld [vmem:[#allocation4 + $0xf60] sm:$0xff]
        %v858 = vld [vmem:[#allocation4 + $0xf68] sm:$0xff]
        %v859 = vld [vmem:[#allocation4 + $0xf70] sm:$0xff]
        %v860 = vld [vmem:[#allocation4 + $0xf78] sm:$0xff]
        %v861 = vld [vmem:[#allocation4 + $0xf80] sm:$0xff]
        %v862 = vld [vmem:[#allocation4 + $0xf88] sm:$0xff]
        %v863 = vld [vmem:[#allocation4 + $0xf90] sm:$0xff]
        %v864 = vld [vmem:[#allocation4 + $0xf98] sm:$0xff]
        %v865 = vld [vmem:[#allocation4 + $0xfa0] sm:$0xff]
        %v866 = vld [vmem:[#allocation4 + $0xfa8] sm:$0xff]
        %v867 = vld [vmem:[#allocation4 + $0xfb0] sm:$0xff]
        %v868 = vld [vmem:[#allocation4 + $0xfb8] sm:$0xff]
        %v869 = vld [vmem:[#allocation4 + $0xfc0] sm:$0xff]
        %v870 = vld [vmem:[#allocation4 + $0xfc8] sm:$0xff]
        %v871 = vld [vmem:[#allocation4 + $0xfd0] sm:$0xff]
        %v872 = vld [vmem:[#allocation4 + $0xfd8] sm:$0xff]
        %v873 = vld [vmem:[#allocation4 + $0xfe0] sm:$0xff]
        %v874 = vld [vmem:[#allocation4 + $0xfe8] sm:$0xff]
        %v875 = vld [vmem:[#allocation4 + $0xff0] sm:$0xff]
        %v876 = vld [vmem:[#allocation4 + $0xff8] sm:$0xff]
        %v877 = vld [vmem:[#allocation4 + $0x1000] sm:$0xff]
        %v878 = vld [vmem:[#allocation4 + $0x1008] sm:$0xff]
        %v879 = vld [vmem:[#allocation4 + $0x1010] sm:$0xff]
        %v880 = vld [vmem:[#allocation4 + $0x1018] sm:$0xff]
        %v881 = vld [vmem:[#allocation4 + $0x1020] sm:$0xff]
        %v882 = vld [vmem:[#allocation4 + $0x1028] sm:$0xff]
        %v883 = vld [vmem:[#allocation4 + $0x1030] sm:$0xff]
        %v884 = vld [vmem:[#allocation4 + $0x1038] sm:$0xff]
        %v885 = vld [vmem:[#allocation4 + $0x1040] sm:$0xff]
        %v886 = vld [vmem:[#allocation4 + $0x1048] sm:$0xff]
        %v887 = vld [vmem:[#allocation4 + $0x1050] sm:$0xff]
        %v888 = vld [vmem:[#allocation4 + $0x1058] sm:$0xff]
        %v889 = vld [vmem:[#allocation4 + $0x1060] sm:$0xff]
        %v890 = vld [vmem:[#allocation4 + $0x1068] sm:$0xff]
        %v891 = vld [vmem:[#allocation4 + $0x1070] sm:$0xff]
        %v892 = vld [vmem:[#allocation4 + $0x1078] sm:$0xff]
        %v893 = vld [vmem:[#allocation4 + $0x1080] sm:$0xff]
        %v894 = vld [vmem:[#allocation4 + $0x1088] sm:$0xff]
        %v895 = vld [vmem:[#allocation4 + $0x1090] sm:$0xff]
        %v896 = vld [vmem:[#allocation4 + $0x1098] sm:$0xff]
        %v897 = vld [vmem:[#allocation4 + $0x10a0] sm:$0xff]
        %v898 = vld [vmem:[#allocation4 + $0x10a8] sm:$0xff]
        %v899 = vld [vmem:[#allocation4 + $0x10b0] sm:$0xff]
        %v900 = vld [vmem:[#allocation4 + $0x10b8] sm:$0xff]
        %v901 = vld [vmem:[#allocation4 + $0x10c0] sm:$0xff]
        %v902 = vld [vmem:[#allocation4 + $0x10c8] sm:$0xff]
        %v903 = vld [vmem:[#allocation4 + $0x10d0] sm:$0xff]
        %v904 = vld [vmem:[#allocation4 + $0x10d8] sm:$0xff]
        %v905 = vld [vmem:[#allocation4 + $0x10e0] sm:$0xff]
        %v906 = vld [vmem:[#allocation4 + $0x10e8] sm:$0xff]
        %v907 = vld [vmem:[#allocation4 + $0x10f0] sm:$0xff]
        %v908 = vld [vmem:[#allocation4 + $0x10f8] sm:$0xff]
        %v909 = vld [vmem:[#allocation4 + $0x1100] sm:$0xff]
        %v910 = vld [vmem:[#allocation4 + $0x1108] sm:$0xff]
        %v911 = vld [vmem:[#allocation4 + $0x1110] sm:$0xff]
        %v912 = vld [vmem:[#allocation4 + $0x1118] sm:$0xff]
        %v913 = vld [vmem:[#allocation4 + $0x1120] sm:$0xff]
        %v914 = vld [vmem:[#allocation4 + $0x1128] sm:$0xff]
        %v915 = vld [vmem:[#allocation4 + $0x1130] sm:$0xff]
        %v916 = vld [vmem:[#allocation4 + $0x1138] sm:$0xff]
        %v917 = vld [vmem:[#allocation4 + $0x1140] sm:$0xff]
        %v918 = vld [vmem:[#allocation4 + $0x1148] sm:$0xff]
        %v919 = vld [vmem:[#allocation4 + $0x1150] sm:$0xff]
        %v920 = vld [vmem:[#allocation4 + $0x1158] sm:$0xff]
        %v921 = vld [vmem:[#allocation4 + $0x1160] sm:$0xff]
        %v922 = vld [vmem:[#allocation4 + $0x1168] sm:$0xff]
        %v923 = vld [vmem:[#allocation4 + $0x1170] sm:$0xff]
        %v924 = vld [vmem:[#allocation4 + $0x1178] sm:$0xff]
        %v925 = vld [vmem:[#allocation4 + $0x1180] sm:$0xff]
        %v926 = vld [vmem:[#allocation4 + $0x1188] sm:$0xff]
        %v927 = vld [vmem:[#allocation4 + $0x1190] sm:$0xff]
        %v928 = vld [vmem:[#allocation4 + $0x1198] sm:$0xff]
        %v929 = vld [vmem:[#allocation4 + $0x11a0] sm:$0xff]
        %v930 = vld [vmem:[#allocation4 + $0x11a8] sm:$0xff]
        %v931 = vld [vmem:[#allocation4 + $0x11b0] sm:$0xff]
        %v932 = vld [vmem:[#allocation4 + $0x11b8] sm:$0xff]
        %v933 = vld [vmem:[#allocation4 + $0x11c0] sm:$0xff]
        %v934 = vld [vmem:[#allocation4 + $0x11c8] sm:$0xff]
        %v935 = vld [vmem:[#allocation4 + $0x11d0] sm:$0xff]
        %v936 = vld [vmem:[#allocation4 + $0x11d8] sm:$0xff]
        %v937 = vld [vmem:[#allocation4 + $0x11e0] sm:$0xff]
        %v938 = vld [vmem:[#allocation4 + $0x11e8] sm:$0xff]
        %v939 = vld [vmem:[#allocation4 + $0x11f0] sm:$0xff]
        %v940 = vld [vmem:[#allocation4 + $0x11f8] sm:$0xff]
        %v941 = vld [vmem:[#allocation4 + $0x1200] sm:$0xff]
        %v942 = vld [vmem:[#allocation4 + $0x1208] sm:$0xff]
        %v943 = vld [vmem:[#allocation4 + $0x1210] sm:$0xff]
        %v944 = vld [vmem:[#allocation4 + $0x1218] sm:$0xff]
        %v945 = vld [vmem:[#allocation4 + $0x1220] sm:$0xff]
        %v946 = vld [vmem:[#allocation4 + $0x1228] sm:$0xff]
        %v947 = vld [vmem:[#allocation4 + $0x1230] sm:$0xff]
        %v948 = vld [vmem:[#allocation4 + $0x1238] sm:$0xff]
        %v949 = vld [vmem:[#allocation4 + $0x1240] sm:$0xff]
        %v950 = vld [vmem:[#allocation4 + $0x1248] sm:$0xff]
        %v951 = vld [vmem:[#allocation4 + $0x1250] sm:$0xff]
        %v952 = vld [vmem:[#allocation4 + $0x1258] sm:$0xff]
        %v953 = vld [vmem:[#allocation4 + $0x1260] sm:$0xff]
        %v954 = vld [vmem:[#allocation4 + $0x1268] sm:$0xff]
        %v955 = vld [vmem:[#allocation4 + $0x1270] sm:$0xff]
        %v956 = vld [vmem:[#allocation4 + $0x1278] sm:$0xff]
        %v957 = vld [vmem:[#allocation4 + $0x1280] sm:$0xff]
        %v958 = vld [vmem:[#allocation4 + $0x1288] sm:$0xff]
        %v959 = vld [vmem:[#allocation4 + $0x1290] sm:$0xff]
        %v960 = vld [vmem:[#allocation4 + $0x1298] sm:$0xff]
        %v961 = vld [vmem:[#allocation4 + $0x12a0] sm:$0xff]
        %v962 = vld [vmem:[#allocation4 + $0x12a8] sm:$0xff]
        %v963 = vld [vmem:[#allocation4 + $0x12b0] sm:$0xff]
        %v964 = vld [vmem:[#allocation4 + $0x12b8] sm:$0xff]
        %v965 = vld [vmem:[#allocation4 + $0x12c0] sm:$0xff]
        %v966 = vld [vmem:[#allocation4 + $0x12c8] sm:$0xff]
        %v967 = vld [vmem:[#allocation4 + $0x12d0] sm:$0xff]
        %v968 = vld [vmem:[#allocation4 + $0x12d8] sm:$0xff]
        %v969 = vld [vmem:[#allocation4 + $0x12e0] sm:$0xff]
        %v970 = vld [vmem:[#allocation4 + $0x12e8] sm:$0xff]
        %v971 = vld [vmem:[#allocation4 + $0x12f0] sm:$0xff]
        %v972 = vld [vmem:[#allocation4 + $0x12f8] sm:$0xff]
        %v973 = vld [vmem:[#allocation4 + $0x1300] sm:$0xff]
        %v974 = vld [vmem:[#allocation4 + $0x1308] sm:$0xff]
        %v975 = vld [vmem:[#allocation4 + $0x1310] sm:$0xff]
        %v976 = vld [vmem:[#allocation4 + $0x1318] sm:$0xff]
        %v977 = vld [vmem:[#allocation4 + $0x1320] sm:$0xff]
        %v978 = vld [vmem:[#allocation4 + $0x1328] sm:$0xff]
        %v979 = vld [vmem:[#allocation4 + $0x1330] sm:$0xff]
        %v980 = vld [vmem:[#allocation4 + $0x1338] sm:$0xff]
        %v981 = vld [vmem:[#allocation4 + $0x1340] sm:$0xff]
        %v982 = vld [vmem:[#allocation4 + $0x1348] sm:$0xff]
        %v983 = vld [vmem:[#allocation4 + $0x1350] sm:$0xff]
        %v984 = vld [vmem:[#allocation4 + $0x1358] sm:$0xff]
        %v985 = vld [vmem:[#allocation4 + $0x1360] sm:$0xff]
        %v986 = vld [vmem:[#allocation4 + $0x1368] sm:$0xff]
        %v987 = vld [vmem:[#allocation4 + $0x1370] sm:$0xff]
        %v988 = vld [vmem:[#allocation4 + $0x1378] sm:$0xff]
        %v989 = vld [vmem:[#allocation4 + $0x1380] sm:$0xff]
        %v990 = vld [vmem:[#allocation4 + $0x1388] sm:$0xff]
        %v991 = vld [vmem:[#allocation4 + $0x1390] sm:$0xff]
        %v992 = vld [vmem:[#allocation4 + $0x1398] sm:$0xff]
        %v993 = vld [vmem:[#allocation4 + $0x13a0] sm:$0xff]
        %v994 = vld [vmem:[#allocation4 + $0x13a8] sm:$0xff]
        %v995 = vld [vmem:[#allocation4 + $0x13b0] sm:$0xff]
        %v996 = vld [vmem:[#allocation4 + $0x13b8] sm:$0xff]
        %v997 = vld [vmem:[#allocation4 + $0x13c0] sm:$0xff]
        %v998 = vld [vmem:[#allocation4 + $0x13c8] sm:$0xff]
        %v999 = vld [vmem:[#allocation4 + $0x13d0] sm:$0xff]
        %v1000 = vld [vmem:[#allocation4 + $0x13d8] sm:$0xff]
        %v1001 = vld [vmem:[#allocation4 + $0x13e0] sm:$0xff]
        %v1002 = vld [vmem:[#allocation4 + $0x13e8] sm:$0xff]
        %v1003 = vld [vmem:[#allocation4 + $0x13f0] sm:$0xff]
        %v1004 = vld [vmem:[#allocation4 + $0x13f8] sm:$0xff]
        %v1005 = vld [vmem:[#allocation4 + $0x1400] sm:$0xff]
        %v1006 = vld [vmem:[#allocation4 + $0x1408] sm:$0xff]
        %v1007 = vld [vmem:[#allocation4 + $0x1410] sm:$0xff]
        %v1008 = vld [vmem:[#allocation4 + $0x1418] sm:$0xff]
        %v1009 = vld [vmem:[#allocation4 + $0x1420] sm:$0xff]
        %v1010 = vld [vmem:[#allocation4 + $0x1428] sm:$0xff]
        %v1011 = vld [vmem:[#allocation4 + $0x1430] sm:$0xff]
        %v1012 = vld [vmem:[#allocation4 + $0x1438] sm:$0xff]
        %v1013 = vld [vmem:[#allocation4 + $0x1440] sm:$0xff]
        %v1014 = vld [vmem:[#allocation4 + $0x1448] sm:$0xff]
        %v1015 = vld [vmem:[#allocation4 + $0x1450] sm:$0xff]
        %v1016 = vld [vmem:[#allocation4 + $0x1458] sm:$0xff]
        %v1017 = vld [vmem:[#allocation4 + $0x1460] sm:$0xff]
        %v1018 = vld [vmem:[#allocation4 + $0x1468] sm:$0xff]
        %v1019 = vld [vmem:[#allocation4 + $0x1470] sm:$0xff]
        %v1020 = vld [vmem:[#allocation4 + $0x1478] sm:$0xff]
        %v1021 = vld [vmem:[#allocation4 + $0x1480] sm:$0xff]
        %v1022 = vld [vmem:[#allocation4 + $0x1488] sm:$0xff]
        %v1023 = vld [vmem:[#allocation4 + $0x1490] sm:$0xff]
        %v1024 = vld [vmem:[#allocation4 + $0x1498] sm:$0xff]
        %v1025 = vld [vmem:[#allocation4 + $0x14a0] sm:$0xff]
        %v1026 = vld [vmem:[#allocation4 + $0x14a8] sm:$0xff]
        %v1027 = vld [vmem:[#allocation4 + $0x14b0] sm:$0xff]
        %v1028 = vld [vmem:[#allocation4 + $0x14b8] sm:$0xff]
        %v1029 = vld [vmem:[#allocation4 + $0x14c0] sm:$0xff]
        %v1030 = vld [vmem:[#allocation4 + $0x14c8] sm:$0xff]
        %v1031 = vld [vmem:[#allocation4 + $0x14d0] sm:$0xff]
        %v1032 = vld [vmem:[#allocation4 + $0x14d8] sm:$0xff]
        %v1033 = vld [vmem:[#allocation4 + $0x14e0] sm:$0xff]
        %v1034 = vld [vmem:[#allocation4 + $0x14e8] sm:$0xff]
        %v1035 = vld [vmem:[#allocation4 + $0x14f0] sm:$0xff]
        %v1036 = vld [vmem:[#allocation4 + $0x14f8] sm:$0xff]
        %v1037 = vld [vmem:[#allocation4 + $0x1500] sm:$0xff]
        %v1038 = vld [vmem:[#allocation4 + $0x1508] sm:$0xff]
        %v1039 = vld [vmem:[#allocation4 + $0x1510] sm:$0xff]
        %v1040 = vld [vmem:[#allocation4 + $0x1518] sm:$0xff]
        %v1041 = vld [vmem:[#allocation4 + $0x1520] sm:$0xff]
        %v1042 = vld [vmem:[#allocation4 + $0x1528] sm:$0xff]
        %v1043 = vld [vmem:[#allocation4 + $0x1530] sm:$0xff]
        %v1044 = vld [vmem:[#allocation4 + $0x1538] sm:$0xff]
        %v1045 = vld [vmem:[#allocation4 + $0x1540] sm:$0xff]
        %v1046 = vld [vmem:[#allocation4 + $0x1548] sm:$0xff]
        %v1047 = vld [vmem:[#allocation4 + $0x1550] sm:$0xff]
        %v1048 = vld [vmem:[#allocation4 + $0x1558] sm:$0xff]
        %v1049 = vld [vmem:[#allocation4 + $0x1560] sm:$0xff]
        %v1050 = vld [vmem:[#allocation4 + $0x1568] sm:$0xff]
        %v1051 = vld [vmem:[#allocation4 + $0x1570] sm:$0xff]
        %v1052 = vld [vmem:[#allocation4 + $0x1578] sm:$0xff]
        %v1053 = vld [vmem:[#allocation4 + $0x1580] sm:$0xff]
        %v1054 = vld [vmem:[#allocation4 + $0x1588] sm:$0xff]
        %v1055 = vld [vmem:[#allocation4 + $0x1590] sm:$0xff]
        %v1056 = vld [vmem:[#allocation4 + $0x1598] sm:$0xff]
        %v1057 = vld [vmem:[#allocation4 + $0x15a0] sm:$0xff]
        %v1058 = vld [vmem:[#allocation4 + $0x15a8] sm:$0xff]
        %v1059 = vld [vmem:[#allocation4 + $0x15b0] sm:$0xff]
        %v1060 = vld [vmem:[#allocation4 + $0x15b8] sm:$0xff]
        %v1061 = vld [vmem:[#allocation4 + $0x15c0] sm:$0xff]
        %v1062 = vld [vmem:[#allocation4 + $0x15c8] sm:$0xff]
        %v1063 = vld [vmem:[#allocation4 + $0x15d0] sm:$0xff]
        %v1064 = vld [vmem:[#allocation4 + $0x15d8] sm:$0xff]
        %v1065 = vld [vmem:[#allocation4 + $0x15e0] sm:$0xff]
        %v1066 = vld [vmem:[#allocation4 + $0x15e8] sm:$0xff]
        %v1067 = vld [vmem:[#allocation4 + $0x15f0] sm:$0xff]
        %v1068 = vld [vmem:[#allocation4 + $0x15f8] sm:$0xff]
        %v1069 = vld [vmem:[#allocation4 + $0x1600] sm:$0xff]
        %v1070 = vld [vmem:[#allocation4 + $0x1608] sm:$0xff]
        %v1071 = vld [vmem:[#allocation4 + $0x1610] sm:$0xff]
        %v1072 = vld [vmem:[#allocation4 + $0x1618] sm:$0xff]
        %v1073 = vld [vmem:[#allocation4 + $0x1620] sm:$0xff]
        %v1074 = vld [vmem:[#allocation4 + $0x1628] sm:$0xff]
        %v1075 = vld [vmem:[#allocation4 + $0x1630] sm:$0xff]
        %v1076 = vld [vmem:[#allocation4 + $0x1638] sm:$0xff]
        %v1077 = vld [vmem:[#allocation4 + $0x1640] sm:$0xff]
        %v1078 = vld [vmem:[#allocation4 + $0x1648] sm:$0xff]
        %v1079 = vld [vmem:[#allocation4 + $0x1650] sm:$0xff]
        %v1080 = vld [vmem:[#allocation4 + $0x1658] sm:$0xff]
        %v1081 = vld [vmem:[#allocation4 + $0x1660] sm:$0xff]
        %v1082 = vld [vmem:[#allocation4 + $0x1668] sm:$0xff]
        %v1083 = vld [vmem:[#allocation4 + $0x1670] sm:$0xff]
        %v1084 = vld [vmem:[#allocation4 + $0x1678] sm:$0xff]
        %v1085 = vld [vmem:[#allocation4 + $0x1680] sm:$0xff]
        %v1086 = vld [vmem:[#allocation4 + $0x1688] sm:$0xff]
        %v1087 = vld [vmem:[#allocation4 + $0x1690] sm:$0xff]
        %v1088 = vld [vmem:[#allocation4 + $0x1698] sm:$0xff]
        %v1089 = vld [vmem:[#allocation4 + $0x16a0] sm:$0xff]
        %v1090 = vld [vmem:[#allocation4 + $0x16a8] sm:$0xff]
        %v1091 = vld [vmem:[#allocation4 + $0x16b0] sm:$0xff]
        %v1092 = vld [vmem:[#allocation4 + $0x16b8] sm:$0xff]
        %v1093 = vld [vmem:[#allocation4 + $0x16c0] sm:$0xff]
        %v1094 = vld [vmem:[#allocation4 + $0x16c8] sm:$0xff]
        %v1095 = vld [vmem:[#allocation4 + $0x16d0] sm:$0xff]
        %v1096 = vld [vmem:[#allocation4 + $0x16d8] sm:$0xff]
        %v1097 = vld [vmem:[#allocation4 + $0x16e0] sm:$0xff]
        %v1098 = vld [vmem:[#allocation4 + $0x16e8] sm:$0xff]
        %v1099 = vld [vmem:[#allocation4 + $0x16f0] sm:$0xff]
        %v1100 = vld [vmem:[#allocation4 + $0x16f8] sm:$0xff]
        %v1101 = vld [vmem:[#allocation4 + $0x1700] sm:$0xff]
        %v1102 = vld [vmem:[#allocation4 + $0x1708] sm:$0xff]
        %v1103 = vld [vmem:[#allocation4 + $0x1710] sm:$0xff]
        %v1104 = vld [vmem:[#allocation4 + $0x1718] sm:$0xff]
        %v1105 = vld [vmem:[#allocation4 + $0x1720] sm:$0xff]
        %v1106 = vld [vmem:[#allocation4 + $0x1728] sm:$0xff]
        %v1107 = vld [vmem:[#allocation4 + $0x1730] sm:$0xff]
        %v1108 = vld [vmem:[#allocation4 + $0x1738] sm:$0xff]
        %v1109 = vld [vmem:[#allocation4 + $0x1740] sm:$0xff]
        %v1110 = vld [vmem:[#allocation4 + $0x1748] sm:$0xff]
        %v1111 = vld [vmem:[#allocation4 + $0x1750] sm:$0xff]
        %v1112 = vld [vmem:[#allocation4 + $0x1758] sm:$0xff]
        %v1113 = vld [vmem:[#allocation4 + $0x1760] sm:$0xff]
        %v1114 = vld [vmem:[#allocation4 + $0x1768] sm:$0xff]
        %v1115 = vld [vmem:[#allocation4 + $0x1770] sm:$0xff]
        %v1116 = vld [vmem:[#allocation4 + $0x1778] sm:$0xff]
        %v1117 = vld [vmem:[#allocation4 + $0x1780] sm:$0xff]
        %v1118 = vld [vmem:[#allocation4 + $0x1788] sm:$0xff]
        %v1119 = vld [vmem:[#allocation4 + $0x1790] sm:$0xff]
        %v1120 = vld [vmem:[#allocation4 + $0x1798] sm:$0xff]
        %v1121 = vld [vmem:[#allocation4 + $0x17a0] sm:$0xff]
        %v1122 = vld [vmem:[#allocation4 + $0x17a8] sm:$0xff]
        %v1123 = vld [vmem:[#allocation4 + $0x17b0] sm:$0xff]
        %v1124 = vld [vmem:[#allocation4 + $0x17b8] sm:$0xff]
        %v1125 = vld [vmem:[#allocation4 + $0x17c0] sm:$0xff]
        %v1126 = vld [vmem:[#allocation4 + $0x17c8] sm:$0xff]
        %v1127 = vld [vmem:[#allocation4 + $0x17d0] sm:$0xff]
        %v1128 = vld [vmem:[#allocation4 + $0x17d8] sm:$0xff]
        %v1129 = vld [vmem:[#allocation4 + $0x17e0] sm:$0xff]
        %v1130 = vld [vmem:[#allocation4 + $0x17e8] sm:$0xff]
        %v1131 = vld [vmem:[#allocation4 + $0x17f0] sm:$0xff]
        %v1132 = vld [vmem:[#allocation4 + $0x17f8] sm:$0xff]
        %v1133 = vld [vmem:[#allocation4 + $0x1800] sm:$0xff]
        %v1134 = vld [vmem:[#allocation4 + $0x1808] sm:$0xff]
        %v1135 = vld [vmem:[#allocation4 + $0x1810] sm:$0xff]
        %v1136 = vld [vmem:[#allocation4 + $0x1818] sm:$0xff]
        %v1137 = vld [vmem:[#allocation4 + $0x1820] sm:$0xff]
        %v1138 = vld [vmem:[#allocation4 + $0x1828] sm:$0xff]
        %v1139 = vld [vmem:[#allocation4 + $0x1830] sm:$0xff]
        %v1140 = vld [vmem:[#allocation4 + $0x1838] sm:$0xff]
        %v1141 = vld [vmem:[#allocation4 + $0x1840] sm:$0xff]
        %v1142 = vld [vmem:[#allocation4 + $0x1848] sm:$0xff]
        %v1143 = vld [vmem:[#allocation4 + $0x1850] sm:$0xff]
        %v1144 = vld [vmem:[#allocation4 + $0x1858] sm:$0xff]
        %v1145 = vld [vmem:[#allocation4 + $0x1860] sm:$0xff]
        %v1146 = vld [vmem:[#allocation4 + $0x1868] sm:$0xff]
        %v1147 = vld [vmem:[#allocation4 + $0x1870] sm:$0xff]
        %v1148 = vld [vmem:[#allocation4 + $0x1878] sm:$0xff]
        %v1149 = vld [vmem:[#allocation4 + $0x1880] sm:$0xff]
        %v1150 = vld [vmem:[#allocation4 + $0x1888] sm:$0xff]
        %v1151 = vld [vmem:[#allocation4 + $0x1890] sm:$0xff]
        %v1152 = vld [vmem:[#allocation4 + $0x1898] sm:$0xff]
        %v1153 = vld [vmem:[#allocation4 + $0x18a0] sm:$0xff]
        %v1154 = vld [vmem:[#allocation4 + $0x18a8] sm:$0xff]
        %v1155 = vld [vmem:[#allocation4 + $0x18b0] sm:$0xff]
        %v1156 = vld [vmem:[#allocation4 + $0x18b8] sm:$0xff]
        %v1157 = vld [vmem:[#allocation4 + $0x18c0] sm:$0xff]
        %v1158 = vld [vmem:[#allocation4 + $0x18c8] sm:$0xff]
        %v1159 = vld [vmem:[#allocation4 + $0x18d0] sm:$0xff]
        %v1160 = vld [vmem:[#allocation4 + $0x18d8] sm:$0xff]
        %v1161 = vld [vmem:[#allocation4 + $0x18e0] sm:$0xff]
        %v1162 = vld [vmem:[#allocation4 + $0x18e8] sm:$0xff]
        %v1163 = vld [vmem:[#allocation4 + $0x18f0] sm:$0xff]
        %v1164 = vld [vmem:[#allocation4 + $0x18f8] sm:$0xff]
        %v1165 = vld [vmem:[#allocation4 + $0x1900] sm:$0xff]
        %v1166 = vld [vmem:[#allocation4 + $0x1908] sm:$0xff]
        %v1167 = vld [vmem:[#allocation4 + $0x1910] sm:$0xff]
        %v1168 = vld [vmem:[#allocation4 + $0x1918] sm:$0xff]
        %v1169 = vld [vmem:[#allocation4 + $0x1920] sm:$0xff]
        %v1170 = vld [vmem:[#allocation4 + $0x1928] sm:$0xff]
        %v1171 = vld [vmem:[#allocation4 + $0x1930] sm:$0xff]
        %v1172 = vld [vmem:[#allocation4 + $0x1938] sm:$0xff]
        %v1173 = vld [vmem:[#allocation4 + $0x1940] sm:$0xff]
        %v1174 = vld [vmem:[#allocation4 + $0x1948] sm:$0xff]
        %v1175 = vld [vmem:[#allocation4 + $0x1950] sm:$0xff]
        %v1176 = vld [vmem:[#allocation4 + $0x1958] sm:$0xff]
        %v1177 = vld [vmem:[#allocation4 + $0x1960] sm:$0xff]
        %v1178 = vld [vmem:[#allocation4 + $0x1968] sm:$0xff]
        %v1179 = vld [vmem:[#allocation4 + $0x1970] sm:$0xff]
        %v1180 = vld [vmem:[#allocation4 + $0x1978] sm:$0xff]
        %v1181 = vld [vmem:[#allocation4 + $0x1980] sm:$0xff]
        %v1182 = vld [vmem:[#allocation4 + $0x1988] sm:$0xff]
        %v1183 = vld [vmem:[#allocation4 + $0x1990] sm:$0xff]
        %v1184 = vld [vmem:[#allocation4 + $0x1998] sm:$0xff]
        %v1185 = vld [vmem:[#allocation4 + $0x19a0] sm:$0xff]
        %v1186 = vld [vmem:[#allocation4 + $0x19a8] sm:$0xff]
        %v1187 = vld [vmem:[#allocation4 + $0x19b0] sm:$0xff]
        %v1188 = vld [vmem:[#allocation4 + $0x19b8] sm:$0xff]
        %v1189 = vld [vmem:[#allocation4 + $0x19c0] sm:$0xff]
        %v1190 = vld [vmem:[#allocation4 + $0x19c8] sm:$0xff]
        %v1191 = vld [vmem:[#allocation4 + $0x19d0] sm:$0xff]
        %v1192 = vld [vmem:[#allocation4 + $0x19d8] sm:$0xff]
        %v1193 = vld [vmem:[#allocation4 + $0x19e0] sm:$0xff]
        %v1194 = vld [vmem:[#allocation4 + $0x19e8] sm:$0xff]
        %v1195 = vld [vmem:[#allocation4 + $0x19f0] sm:$0xff]
        %v1196 = vld [vmem:[#allocation4 + $0x19f8] sm:$0xff]
        %v1197 = vld [vmem:[#allocation4 + $0x1a00] sm:$0xff]
        %v1198 = vld [vmem:[#allocation4 + $0x1a08] sm:$0xff]
        %v1199 = vld [vmem:[#allocation4 + $0x1a10] sm:$0xff]
        %v1200 = vld [vmem:[#allocation4 + $0x1a18] sm:$0xff]
        %v1201 = vld [vmem:[#allocation4 + $0x1a20] sm:$0xff]
        %v1202 = vld [vmem:[#allocation4 + $0x1a28] sm:$0xff]
        %v1203 = vld [vmem:[#allocation4 + $0x1a30] sm:$0xff]
        %v1204 = vld [vmem:[#allocation4 + $0x1a38] sm:$0xff]
        %v1205 = vld [vmem:[#allocation4 + $0x1a40] sm:$0xff]
        %v1206 = vld [vmem:[#allocation4 + $0x1a48] sm:$0xff]
        %v1207 = vld [vmem:[#allocation4 + $0x1a50] sm:$0xff]
        %v1208 = vld [vmem:[#allocation4 + $0x1a58] sm:$0xff]
        %v1209 = vld [vmem:[#allocation4 + $0x1a60] sm:$0xff]
        %v1210 = vld [vmem:[#allocation4 + $0x1a68] sm:$0xff]
        %v1211 = vld [vmem:[#allocation4 + $0x1a70] sm:$0xff]
        %v1212 = vld [vmem:[#allocation4 + $0x1a78] sm:$0xff]
        %v1213 = vld [vmem:[#allocation4 + $0x1a80] sm:$0xff]
        %v1214 = vld [vmem:[#allocation4 + $0x1a88] sm:$0xff]
        %v1215 = vld [vmem:[#allocation4 + $0x1a90] sm:$0xff]
        %v1216 = vld [vmem:[#allocation4 + $0x1a98] sm:$0xff]
        %v1217 = vld [vmem:[#allocation4 + $0x1aa0] sm:$0xff]
        %v1218 = vld [vmem:[#allocation4 + $0x1aa8] sm:$0xff]
        %v1219 = vld [vmem:[#allocation4 + $0x1ab0] sm:$0xff]
        %v1220 = vld [vmem:[#allocation4 + $0x1ab8] sm:$0xff]
        %v1221 = vld [vmem:[#allocation4 + $0x1ac0] sm:$0xff]
        %v1222 = vld [vmem:[#allocation4 + $0x1ac8] sm:$0xff]
        %v1223 = vld [vmem:[#allocation4 + $0x1ad0] sm:$0xff]
        %v1224 = vld [vmem:[#allocation4 + $0x1ad8] sm:$0xff]
        %v1225 = vld [vmem:[#allocation4 + $0x1ae0] sm:$0xff]
        %v1226 = vld [vmem:[#allocation4 + $0x1ae8] sm:$0xff]
        %v1227 = vld [vmem:[#allocation4 + $0x1af0] sm:$0xff]
        %v1228 = vld [vmem:[#allocation4 + $0x1af8] sm:$0xff]
        %v1229 = vld [vmem:[#allocation4 + $0x1b00] sm:$0xff]
        %v1230 = vld [vmem:[#allocation4 + $0x1b08] sm:$0xff]
        %v1231 = vld [vmem:[#allocation4 + $0x1b10] sm:$0xff]
        %v1232 = vld [vmem:[#allocation4 + $0x1b18] sm:$0xff]
        %v1233 = vld [vmem:[#allocation4 + $0x1b20] sm:$0xff]
        %v1234 = vld [vmem:[#allocation4 + $0x1b28] sm:$0xff]
        %v1235 = vld [vmem:[#allocation4 + $0x1b30] sm:$0xff]
        %v1236 = vld [vmem:[#allocation4 + $0x1b38] sm:$0xff]
        %v1237 = vld [vmem:[#allocation4 + $0x1b40] sm:$0xff]
        %v1238 = vld [vmem:[#allocation4 + $0x1b48] sm:$0xff]
        %v1239 = vld [vmem:[#allocation4 + $0x1b50] sm:$0xff]
        %v1240 = vld [vmem:[#allocation4 + $0x1b58] sm:$0xff]
        %v1241 = vld [vmem:[#allocation4 + $0x1b60] sm:$0xff]
        %v1242 = vld [vmem:[#allocation4 + $0x1b68] sm:$0xff]
        %v1243 = vld [vmem:[#allocation4 + $0x1b70] sm:$0xff]
        %v1244 = vld [vmem:[#allocation4 + $0x1b78] sm:$0xff]
        %v1245 = vld [vmem:[#allocation4 + $0x1b80] sm:$0xff]
        %v1246 = vld [vmem:[#allocation4 + $0x1b88] sm:$0xff]
        %v1247 = vld [vmem:[#allocation4 + $0x1b90] sm:$0xff]
        %v1248 = vld [vmem:[#allocation4 + $0x1b98] sm:$0xff]
        %v1249 = vld [vmem:[#allocation4 + $0x1ba0] sm:$0xff]
        %v1250 = vld [vmem:[#allocation4 + $0x1ba8] sm:$0xff]
        %v1251 = vld [vmem:[#allocation4 + $0x1bb0] sm:$0xff]
        %v1252 = vld [vmem:[#allocation4 + $0x1bb8] sm:$0xff]
        %v1253 = vld [vmem:[#allocation4 + $0x1bc0] sm:$0xff]
        %v1254 = vld [vmem:[#allocation4 + $0x1bc8] sm:$0xff]
        %v1255 = vld [vmem:[#allocation4 + $0x1bd0] sm:$0xff]
        %v1256 = vld [vmem:[#allocation4 + $0x1bd8] sm:$0xff]
        %v1257 = vld [vmem:[#allocation4 + $0x1be0] sm:$0xff]
        %v1258 = vld [vmem:[#allocation4 + $0x1be8] sm:$0xff]
        %v1259 = vld [vmem:[#allocation4 + $0x1bf0] sm:$0xff]
        %v1260 = vld [vmem:[#allocation4 + $0x1bf8] sm:$0xff]
        %v1261 = vld [vmem:[#allocation4 + $0x1c00] sm:$0xff]
        %v1262 = vld [vmem:[#allocation4 + $0x1c08] sm:$0xff]
        %v1263 = vld [vmem:[#allocation4 + $0x1c10] sm:$0xff]
        %v1264 = vld [vmem:[#allocation4 + $0x1c18] sm:$0xff]
        %v1265 = vld [vmem:[#allocation4 + $0x1c20] sm:$0xff]
        %v1266 = vld [vmem:[#allocation4 + $0x1c28] sm:$0xff]
        %v1267 = vld [vmem:[#allocation4 + $0x1c30] sm:$0xff]
        %v1268 = vld [vmem:[#allocation4 + $0x1c38] sm:$0xff]
        %v1269 = vld [vmem:[#allocation4 + $0x1c40] sm:$0xff]
        %v1270 = vld [vmem:[#allocation4 + $0x1c48] sm:$0xff]
        %v1271 = vld [vmem:[#allocation4 + $0x1c50] sm:$0xff]
        %v1272 = vld [vmem:[#allocation4 + $0x1c58] sm:$0xff]
        %v1273 = vld [vmem:[#allocation4 + $0x1c60] sm:$0xff]
        %v1274 = vld [vmem:[#allocation4 + $0x1c68] sm:$0xff]
        %v1275 = vld [vmem:[#allocation4 + $0x1c70] sm:$0xff]
        %v1276 = vld [vmem:[#allocation4 + $0x1c78] sm:$0xff]
        %v1277 = vld [vmem:[#allocation4 + $0x1c80] sm:$0xff]
        %v1278 = vld [vmem:[#allocation4 + $0x1c88] sm:$0xff]
        %v1279 = vld [vmem:[#allocation4 + $0x1c90] sm:$0xff]
        %v1280 = vld [vmem:[#allocation4 + $0x1c98] sm:$0xff]
        %v1281 = vld [vmem:[#allocation4 + $0x1ca0] sm:$0xff]
        %v1282 = vld [vmem:[#allocation4 + $0x1ca8] sm:$0xff]
        %v1283 = vld [vmem:[#allocation4 + $0x1cb0] sm:$0xff]
        %v1284 = vld [vmem:[#allocation4 + $0x1cb8] sm:$0xff]
        %v1285 = vld [vmem:[#allocation4 + $0x1cc0] sm:$0xff]
        %v1286 = vld [vmem:[#allocation4 + $0x1cc8] sm:$0xff]
        %v1287 = vld [vmem:[#allocation4 + $0x1cd0] sm:$0xff]
        %v1288 = vld [vmem:[#allocation4 + $0x1cd8] sm:$0xff]
        %v1289 = vld [vmem:[#allocation4 + $0x1ce0] sm:$0xff]
        %v1290 = vld [vmem:[#allocation4 + $0x1ce8] sm:$0xff]
        %v1291 = vld [vmem:[#allocation4 + $0x1cf0] sm:$0xff]
        %v1292 = vld [vmem:[#allocation4 + $0x1cf8] sm:$0xff]
        %v1293 = vld [vmem:[#allocation4 + $0x1d00] sm:$0xff]
        %v1294 = vld [vmem:[#allocation4 + $0x1d08] sm:$0xff]
        %v1295 = vld [vmem:[#allocation4 + $0x1d10] sm:$0xff]
        %v1296 = vld [vmem:[#allocation4 + $0x1d18] sm:$0xff]
        %v1297 = vld [vmem:[#allocation4 + $0x1d20] sm:$0xff]
        %v1298 = vld [vmem:[#allocation4 + $0x1d28] sm:$0xff]
        %v1299 = vld [vmem:[#allocation4 + $0x1d30] sm:$0xff]
        %v1300 = vld [vmem:[#allocation4 + $0x1d38] sm:$0xff]
        %v1301 = vld [vmem:[#allocation4 + $0x1d40] sm:$0xff]
        %v1302 = vld [vmem:[#allocation4 + $0x1d48] sm:$0xff]
        %v1303 = vld [vmem:[#allocation4 + $0x1d50] sm:$0xff]
        %v1304 = vld [vmem:[#allocation4 + $0x1d58] sm:$0xff]
        %v1305 = vld [vmem:[#allocation4 + $0x1d60] sm:$0xff]
        %v1306 = vld [vmem:[#allocation4 + $0x1d68] sm:$0xff]
        %v1307 = vld [vmem:[#allocation4 + $0x1d70] sm:$0xff]
        %v1308 = vld [vmem:[#allocation4 + $0x1d78] sm:$0xff]
        %v1309 = vld [vmem:[#allocation4 + $0x1d80] sm:$0xff]
        %v1310 = vld [vmem:[#allocation4 + $0x1d88] sm:$0xff]
        %v1311 = vld [vmem:[#allocation4 + $0x1d90] sm:$0xff]
        %v1312 = vld [vmem:[#allocation4 + $0x1d98] sm:$0xff]
        %v1313 = vld [vmem:[#allocation4 + $0x1da0] sm:$0xff]
        %v1314 = vld [vmem:[#allocation4 + $0x1da8] sm:$0xff]
        %v1315 = vld [vmem:[#allocation4 + $0x1db0] sm:$0xff]
        %v1316 = vld [vmem:[#allocation4 + $0x1db8] sm:$0xff]
        %v1317 = vld [vmem:[#allocation4 + $0x1dc0] sm:$0xff]
        %v1318 = vld [vmem:[#allocation4 + $0x1dc8] sm:$0xff]
        %v1319 = vld [vmem:[#allocation4 + $0x1dd0] sm:$0xff]
        %v1320 = vld [vmem:[#allocation4 + $0x1dd8] sm:$0xff]
        %v1321 = vld [vmem:[#allocation4 + $0x1de0] sm:$0xff]
        %v1322 = vld [vmem:[#allocation4 + $0x1de8] sm:$0xff]
        %v1323 = vld [vmem:[#allocation4 + $0x1df0] sm:$0xff]
        %v1324 = vld [vmem:[#allocation4 + $0x1df8] sm:$0xff]
        %v1325 = vld [vmem:[#allocation4 + $0x1e00] sm:$0xff]
        %v1326 = vld [vmem:[#allocation4 + $0x1e08] sm:$0xff]
        %v1327 = vld [vmem:[#allocation4 + $0x1e10] sm:$0xff]
        %v1328 = vld [vmem:[#allocation4 + $0x1e18] sm:$0xff]
        %v1329 = vld [vmem:[#allocation4 + $0x1e20] sm:$0xff]
        %v1330 = vld [vmem:[#allocation4 + $0x1e28] sm:$0xff]
        %v1331 = vld [vmem:[#allocation4 + $0x1e30] sm:$0xff]
        %v1332 = vld [vmem:[#allocation4 + $0x1e38] sm:$0xff]
        %v1333 = vld [vmem:[#allocation4 + $0x1e40] sm:$0xff]
        %v1334 = vld [vmem:[#allocation4 + $0x1e48] sm:$0xff]
        %v1335 = vld [vmem:[#allocation4 + $0x1e50] sm:$0xff]
        %v1336 = vld [vmem:[#allocation4 + $0x1e58] sm:$0xff]
        %v1337 = vld [vmem:[#allocation4 + $0x1e60] sm:$0xff]
        %v1338 = vld [vmem:[#allocation4 + $0x1e68] sm:$0xff]
        %v1339 = vld [vmem:[#allocation4 + $0x1e70] sm:$0xff]
        %v1340 = vld [vmem:[#allocation4 + $0x1e78] sm:$0xff]
        %v1341 = vld [vmem:[#allocation4 + $0x1e80] sm:$0xff]
        %v1342 = vld [vmem:[#allocation4 + $0x1e88] sm:$0xff]
        %v1343 = vld [vmem:[#allocation4 + $0x1e90] sm:$0xff]
        %v1344 = vld [vmem:[#allocation4 + $0x1e98] sm:$0xff]
        %v1345 = vld [vmem:[#allocation4 + $0x1ea0] sm:$0xff]
        %v1346 = vld [vmem:[#allocation4 + $0x1ea8] sm:$0xff]
        %v1347 = vld [vmem:[#allocation4 + $0x1eb0] sm:$0xff]
        %v1348 = vld [vmem:[#allocation4 + $0x1eb8] sm:$0xff]
        %v1349 = vld [vmem:[#allocation4 + $0x1ec0] sm:$0xff]
        %v1350 = vld [vmem:[#allocation4 + $0x1ec8] sm:$0xff]
        %v1351 = vld [vmem:[#allocation4 + $0x1ed0] sm:$0xff]
        %v1352 = vld [vmem:[#allocation4 + $0x1ed8] sm:$0xff]
        %v1353 = vld [vmem:[#allocation4 + $0x1ee0] sm:$0xff]
        %v1354 = vld [vmem:[#allocation4 + $0x1ee8] sm:$0xff]
        %v1355 = vld [vmem:[#allocation4 + $0x1ef0] sm:$0xff]
        %v1356 = vld [vmem:[#allocation4 + $0x1ef8] sm:$0xff]
        %v1357 = vld [vmem:[#allocation4 + $0x1f00] sm:$0xff]
        %v1358 = vld [vmem:[#allocation4 + $0x1f08] sm:$0xff]
        %v1359 = vld [vmem:[#allocation4 + $0x1f10] sm:$0xff]
        %v1360 = vld [vmem:[#allocation4 + $0x1f18] sm:$0xff]
        %v1361 = vld [vmem:[#allocation4 + $0x1f20] sm:$0xff]
        %v1362 = vld [vmem:[#allocation4 + $0x1f28] sm:$0xff]
        %v1363 = vld [vmem:[#allocation4 + $0x1f30] sm:$0xff]
        %v1364 = vld [vmem:[#allocation4 + $0x1f38] sm:$0xff]
        %v1365 = vld [vmem:[#allocation4 + $0x1f40] sm:$0xff]
        %v1366 = vld [vmem:[#allocation4 + $0x1f48] sm:$0xff]
        %v1367 = vld [vmem:[#allocation4 + $0x1f50] sm:$0xff]
        %v1368 = vld [vmem:[#allocation4 + $0x1f58] sm:$0xff]
        %v1369 = vld [vmem:[#allocation4 + $0x1f60] sm:$0xff]
        %v1370 = vld [vmem:[#allocation4 + $0x1f68] sm:$0xff]
        %v1371 = vld [vmem:[#allocation4 + $0x1f70] sm:$0xff]
        %v1372 = vld [vmem:[#allocation4 + $0x1f78] sm:$0xff]
        %v1373 = vld [vmem:[#allocation4 + $0x1f80] sm:$0xff]
        %v1374 = vld [vmem:[#allocation4 + $0x1f88] sm:$0xff]
        %v1375 = vld [vmem:[#allocation4 + $0x1f90] sm:$0xff]
        %v1376 = vld [vmem:[#allocation4 + $0x1f98] sm:$0xff]
        %v1377 = vld [vmem:[#allocation4 + $0x1fa0] sm:$0xff]
        %v1378 = vld [vmem:[#allocation4 + $0x1fa8] sm:$0xff]
        %v1379 = vld [vmem:[#allocation4 + $0x1fb0] sm:$0xff]
        %v1380 = vld [vmem:[#allocation4 + $0x1fb8] sm:$0xff]
        %v1381 = vld [vmem:[#allocation4 + $0x1fc0] sm:$0xff]
        %v1382 = vld [vmem:[#allocation4 + $0x1fc8] sm:$0xff]
        %v1383 = vld [vmem:[#allocation4 + $0x1fd0] sm:$0xff]
        %v1384 = vld [vmem:[#allocation4 + $0x1fd8] sm:$0xff]
        %v1385 = vld [vmem:[#allocation4 + $0x1fe0] sm:$0xff]
        %v1386 = vld [vmem:[#allocation4 + $0x1fe8] sm:$0xff]
        %v1387 = vld [vmem:[#allocation4 + $0x1ff0] sm:$0xff]
        %v1388 = vld [vmem:[#allocation4 + $0x1ff8] sm:$0xff]
        %v1389 = vld [vmem:[#allocation6] sm:$0xff]
        %v1391 = vperm.slane %v1389, 0
        %v1392 = vperm.slane %v1389, 1
        %v1393 = vperm.slane %v1389, 2
        %v1394 = vperm.slane %v1389, 3
        %v1395 = vperm.slane %v1389, 4
        %v1396 = vperm.slane %v1389, 5
        %v1397 = vperm.slane %v1389, 6
        %v1398 = vperm.slane %v1389, 7
        %1407 = vmatpush.msra.mxu0 %v485
        %1408 = vmatpush.msra.mxu0 %v477
        %1409 = vmatpush.msra.mxu0 %v469
        %1410 = vmatpush.msra.mxu0 %v461
        %1411 = vmatpush.msra.mxu0 %v453
        %1412 = vmatpush.msra.mxu0 %v445
        %1413 = vmatpush.msra.mxu0 %v437
        %1414 = vmatpush.msra.mxu0 %v429
        %1415 = vmatpush.msra.mxu0 %v421
        %1416 = vmatpush.msra.mxu0 %v413
        %1417 = vmatpush.msra.mxu0 %v405
        %1418 = vmatpush.msra.mxu0 %v397
        %1419 = vmatpush.msra.mxu0 %v389
        %1420 = vmatpush.msra.mxu0 %v381
        %1421 = vmatpush.msra.mxu0 %v373
        %1422 = vmatpush.msra.mxu0 %v365
        %1423 = vmatmul.f32.gmra.mxu0 %v357
        %v1424 = vpop.f32.mrf.mxu0
        %v1425 = vadd.f32 %v1391, %v1424
        %1426 = vdwg.mxu0
        %1427 = vmatpush.msra.mxu0 %v613
        %1428 = vmatpush.msra.mxu0 %v605
        %1429 = vmatpush.msra.mxu0 %v597
        %1430 = vmatpush.msra.mxu0 %v589
        %1431 = vmatpush.msra.mxu0 %v581
        %1432 = vmatpush.msra.mxu0 %v573
        %1433 = vmatpush.msra.mxu0 %v565
        %1434 = vmatpush.msra.mxu0 %v557
        %1435 = vmatpush.msra.mxu0 %v549
        %1436 = vmatpush.msra.mxu0 %v541
        %1437 = vmatpush.msra.mxu0 %v533
        %1438 = vmatpush.msra.mxu0 %v525
        %1439 = vmatpush.msra.mxu0 %v517
        %1440 = vmatpush.msra.mxu0 %v509
        %1441 = vmatpush.msra.mxu0 %v501
        %1442 = vmatpush.msra.mxu0 %v493
        %1443 = vmatmul.f32.gmra.mxu0 %v358
        %v1444 = vpop.f32.mrf.mxu0
        %v1445 = vadd.f32 %v1425, %v1444
        %1446 = vdwg.mxu0
        %1447 = vmatpush.msra.mxu0 %v741
        %1448 = vmatpush.msra.mxu0 %v733
        %1449 = vmatpush.msra.mxu0 %v725
        %1450 = vmatpush.msra.mxu0 %v717
        %1451 = vmatpush.msra.mxu0 %v709
        %1452 = vmatpush.msra.mxu0 %v701
        %1453 = vmatpush.msra.mxu0 %v693
        %1454 = vmatpush.msra.mxu0 %v685
        %1455 = vmatpush.msra.mxu0 %v677
        %1456 = vmatpush.msra.mxu0 %v669
        %1457 = vmatpush.msra.mxu0 %v661
        %1458 = vmatpush.msra.mxu0 %v653
        %1459 = vmatpush.msra.mxu0 %v645
        %1460 = vmatpush.msra.mxu0 %v637
        %1461 = vmatpush.msra.mxu0 %v629
        %1462 = vmatpush.msra.mxu0 %v621
        %1463 = vmatmul.f32.gmra.mxu0 %v359
        %v1464 = vpop.f32.mrf.mxu0
        %v1465 = vadd.f32 %v1445, %v1464
        %1466 = vdwg.mxu0
        %1467 = vmatpush.msra.mxu0 %v869
        %1468 = vmatpush.msra.mxu0 %v861
        %1469 = vmatpush.msra.mxu0 %v853
        %1470 = vmatpush.msra.mxu0 %v845
        %1471 = vmatpush.msra.mxu0 %v837
        %1472 = vmatpush.msra.mxu0 %v829
        %1473 = vmatpush.msra.mxu0 %v821
        %1474 = vmatpush.msra.mxu0 %v813
        %1475 = vmatpush.msra.mxu0 %v805
        %1476 = vmatpush.msra.mxu0 %v797
        %1477 = vmatpush.msra.mxu0 %v789
        %1478 = vmatpush.msra.mxu0 %v781
        %1479 = vmatpush.msra.mxu0 %v773
        %1480 = vmatpush.msra.mxu0 %v765
        %1481 = vmatpush.msra.mxu0 %v757
        %1482 = vmatpush.msra.mxu0 %v749
        %1483 = vmatmul.f32.gmra.mxu0 %v360
        %v1484 = vpop.f32.mrf.mxu0
        %v1485 = vadd.f32 %v1465, %v1484
        %1486 = vdwg.mxu0
        %1487 = vmatpush.msra.mxu0 %v997
        %1488 = vmatpush.msra.mxu0 %v989
        %1489 = vmatpush.msra.mxu0 %v981
        %1490 = vmatpush.msra.mxu0 %v973
        %1491 = vmatpush.msra.mxu0 %v965
        %1492 = vmatpush.msra.mxu0 %v957
        %1493 = vmatpush.msra.mxu0 %v949
        %1494 = vmatpush.msra.mxu0 %v941
        %1495 = vmatpush.msra.mxu0 %v933
        %1496 = vmatpush.msra.mxu0 %v925
        %1497 = vmatpush.msra.mxu0 %v917
        %1498 = vmatpush.msra.mxu0 %v909
        %1499 = vmatpush.msra.mxu0 %v901
        %1500 = vmatpush.msra.mxu0 %v893
        %1501 = vmatpush.msra.mxu0 %v885
        %1502 = vmatpush.msra.mxu0 %v877
        %1503 = vmatmul.f32.gmra.mxu0 %v361
        %v1504 = vpop.f32.mrf.mxu0
        %v1505 = vadd.f32 %v1485, %v1504
        %1506 = vdwg.mxu0
        %1507 = vmatpush.msra.mxu0 %v1125
        %1508 = vmatpush.msra.mxu0 %v1117
        %1509 = vmatpush.msra.mxu0 %v1109
        %1510 = vmatpush.msra.mxu0 %v1101
        %1511 = vmatpush.msra.mxu0 %v1093
        %1512 = vmatpush.msra.mxu0 %v1085
        %1513 = vmatpush.msra.mxu0 %v1077
        %1514 = vmatpush.msra.mxu0 %v1069
        %1515 = vmatpush.msra.mxu0 %v1061
        %1516 = vmatpush.msra.mxu0 %v1053
        %1517 = vmatpush.msra.mxu0 %v1045
        %1518 = vmatpush.msra.mxu0 %v1037
        %1519 = vmatpush.msra.mxu0 %v1029
        %1520 = vmatpush.msra.mxu0 %v1021
        %1521 = vmatpush.msra.mxu0 %v1013
        %1522 = vmatpush.msra.mxu0 %v1005
        %1523 = vmatmul.f32.gmra.mxu0 %v362
        %v1524 = vpop.f32.mrf.mxu0
        %v1525 = vadd.f32 %v1505, %v1524
        %1526 = vdwg.mxu0
        %1527 = vmatpush.msra.mxu0 %v1253
        %1528 = vmatpush.msra.mxu0 %v1245
        %1529 = vmatpush.msra.mxu0 %v1237
        %1530 = vmatpush.msra.mxu0 %v1229
        %1531 = vmatpush.msra.mxu0 %v1221
        %1532 = vmatpush.msra.mxu0 %v1213
        %1533 = vmatpush.msra.mxu0 %v1205
        %1534 = vmatpush.msra.mxu0 %v1197
        %1535 = vmatpush.msra.mxu0 %v1189
        %1536 = vmatpush.msra.mxu0 %v1181
        %1537 = vmatpush.msra.mxu0 %v1173
        %1538 = vmatpush.msra.mxu0 %v1165
        %1539 = vmatpush.msra.mxu0 %v1157
        %1540 = vmatpush.msra.mxu0 %v1149
        %1541 = vmatpush.msra.mxu0 %v1141
        %1542 = vmatpush.msra.mxu0 %v1133
        %1543 = vmatmul.f32.gmra.mxu0 %v363
        %v1544 = vpop.f32.mrf.mxu0
        %v1545 = vadd.f32 %v1525, %v1544
        %1546 = vdwg.mxu0
        %1547 = vmatpush.msra.mxu0 %v1381
        %1548 = vmatpush.msra.mxu0 %v1373
        %1549 = vmatpush.msra.mxu0 %v1365
        %1550 = vmatpush.msra.mxu0 %v1357
        %1551 = vmatpush.msra.mxu0 %v1349
        %1552 = vmatpush.msra.mxu0 %v1341
        %1553 = vmatpush.msra.mxu0 %v1333
        %1554 = vmatpush.msra.mxu0 %v1325
        %1555 = vmatpush.msra.mxu0 %v1317
        %1556 = vmatpush.msra.mxu0 %v1309
        %1557 = vmatpush.msra.mxu0 %v1301
        %1558 = vmatpush.msra.mxu0 %v1293
        %1559 = vmatpush.msra.mxu0 %v1285
        %1560 = vmatpush.msra.mxu0 %v1277
        %1561 = vmatpush.msra.mxu0 %v1269
        %1562 = vmatpush.msra.mxu0 %v1261
        %1563 = vmatmul.f32.gmra.mxu0 %v364
        %v1564 = vpop.f32.mrf.mxu0
        %v1565 = vadd.f32 %v1545, %v1564
        %1566 = vdwg.mxu0
        %1567 = vmatpush.msra.mxu0 %v486
        %1568 = vmatpush.msra.mxu0 %v478
        %1569 = vmatpush.msra.mxu0 %v470
        %1570 = vmatpush.msra.mxu0 %v462
        %1571 = vmatpush.msra.mxu0 %v454
        %1572 = vmatpush.msra.mxu0 %v446
        %1573 = vmatpush.msra.mxu0 %v438
        %1574 = vmatpush.msra.mxu0 %v430
        %1575 = vmatpush.msra.mxu0 %v422
        %1576 = vmatpush.msra.mxu0 %v414
        %1577 = vmatpush.msra.mxu0 %v406
        %1578 = vmatpush.msra.mxu0 %v398
        %1579 = vmatpush.msra.mxu0 %v390
        %1580 = vmatpush.msra.mxu0 %v382
        %1581 = vmatpush.msra.mxu0 %v374
        %1582 = vmatpush.msra.mxu0 %v366
        %1583 = vmatmul.f32.gmra.mxu0 %v357
        %v1584 = vpop.f32.mrf.mxu0
        %v1585 = vadd.f32 %v1392, %v1584
        %1586 = vdwg.mxu0
        %1587 = vmatpush.msra.mxu0 %v614
        %1588 = vmatpush.msra.mxu0 %v606
        %1589 = vmatpush.msra.mxu0 %v598
        %1590 = vmatpush.msra.mxu0 %v590
        %1591 = vmatpush.msra.mxu0 %v582
        %1592 = vmatpush.msra.mxu0 %v574
        %1593 = vmatpush.msra.mxu0 %v566
        %1594 = vmatpush.msra.mxu0 %v558
        %1595 = vmatpush.msra.mxu0 %v550
        %1596 = vmatpush.msra.mxu0 %v542
        %1597 = vmatpush.msra.mxu0 %v534
        %1598 = vmatpush.msra.mxu0 %v526
        %1599 = vmatpush.msra.mxu0 %v518
        %1600 = vmatpush.msra.mxu0 %v510
        %1601 = vmatpush.msra.mxu0 %v502
        %1602 = vmatpush.msra.mxu0 %v494
        %1603 = vmatmul.f32.gmra.mxu0 %v358
        %v1604 = vpop.f32.mrf.mxu0
        %v1605 = vadd.f32 %v1585, %v1604
        %1606 = vdwg.mxu0
        %1607 = vmatpush.msra.mxu0 %v742
        %1608 = vmatpush.msra.mxu0 %v734
        %1609 = vmatpush.msra.mxu0 %v726
        %1610 = vmatpush.msra.mxu0 %v718
        %1611 = vmatpush.msra.mxu0 %v710
        %1612 = vmatpush.msra.mxu0 %v702
        %1613 = vmatpush.msra.mxu0 %v694
        %1614 = vmatpush.msra.mxu0 %v686
        %1615 = vmatpush.msra.mxu0 %v678
        %1616 = vmatpush.msra.mxu0 %v670
        %1617 = vmatpush.msra.mxu0 %v662
        %1618 = vmatpush.msra.mxu0 %v654
        %1619 = vmatpush.msra.mxu0 %v646
        %1620 = vmatpush.msra.mxu0 %v638
        %1621 = vmatpush.msra.mxu0 %v630
        %1622 = vmatpush.msra.mxu0 %v622
        %1623 = vmatmul.f32.gmra.mxu0 %v359
        %v1624 = vpop.f32.mrf.mxu0
        %v1625 = vadd.f32 %v1605, %v1624
        %1626 = vdwg.mxu0
        %1627 = vmatpush.msra.mxu0 %v870
        %1628 = vmatpush.msra.mxu0 %v862
        %1629 = vmatpush.msra.mxu0 %v854
        %1630 = vmatpush.msra.mxu0 %v846
        %1631 = vmatpush.msra.mxu0 %v838
        %1632 = vmatpush.msra.mxu0 %v830
        %1633 = vmatpush.msra.mxu0 %v822
        %1634 = vmatpush.msra.mxu0 %v814
        %1635 = vmatpush.msra.mxu0 %v806
        %1636 = vmatpush.msra.mxu0 %v798
        %1637 = vmatpush.msra.mxu0 %v790
        %1638 = vmatpush.msra.mxu0 %v782
        %1639 = vmatpush.msra.mxu0 %v774
        %1640 = vmatpush.msra.mxu0 %v766
        %1641 = vmatpush.msra.mxu0 %v758
        %1642 = vmatpush.msra.mxu0 %v750
        %1643 = vmatmul.f32.gmra.mxu0 %v360
        %v1644 = vpop.f32.mrf.mxu0
        %v1645 = vadd.f32 %v1625, %v1644
        %1646 = vdwg.mxu0
        %1647 = vmatpush.msra.mxu0 %v998
        %1648 = vmatpush.msra.mxu0 %v990
        %1649 = vmatpush.msra.mxu0 %v982
        %1650 = vmatpush.msra.mxu0 %v974
        %1651 = vmatpush.msra.mxu0 %v966
        %1652 = vmatpush.msra.mxu0 %v958
        %1653 = vmatpush.msra.mxu0 %v950
        %1654 = vmatpush.msra.mxu0 %v942
        %1655 = vmatpush.msra.mxu0 %v934
        %1656 = vmatpush.msra.mxu0 %v926
        %1657 = vmatpush.msra.mxu0 %v918
        %1658 = vmatpush.msra.mxu0 %v910
        %1659 = vmatpush.msra.mxu0 %v902
        %1660 = vmatpush.msra.mxu0 %v894
        %1661 = vmatpush.msra.mxu0 %v886
        %1662 = vmatpush.msra.mxu0 %v878
        %1663 = vmatmul.f32.gmra.mxu0 %v361
        %v1664 = vpop.f32.mrf.mxu0
        %v1665 = vadd.f32 %v1645, %v1664
        %1666 = vdwg.mxu0
        %1667 = vmatpush.msra.mxu0 %v1126
        %1668 = vmatpush.msra.mxu0 %v1118
        %1669 = vmatpush.msra.mxu0 %v1110
        %1670 = vmatpush.msra.mxu0 %v1102
        %1671 = vmatpush.msra.mxu0 %v1094
        %1672 = vmatpush.msra.mxu0 %v1086
        %1673 = vmatpush.msra.mxu0 %v1078
        %1674 = vmatpush.msra.mxu0 %v1070
        %1675 = vmatpush.msra.mxu0 %v1062
        %1676 = vmatpush.msra.mxu0 %v1054
        %1677 = vmatpush.msra.mxu0 %v1046
        %1678 = vmatpush.msra.mxu0 %v1038
        %1679 = vmatpush.msra.mxu0 %v1030
        %1680 = vmatpush.msra.mxu0 %v1022
        %1681 = vmatpush.msra.mxu0 %v1014
        %1682 = vmatpush.msra.mxu0 %v1006
        %1683 = vmatmul.f32.gmra.mxu0 %v362
        %v1684 = vpop.f32.mrf.mxu0
        %v1685 = vadd.f32 %v1665, %v1684
        %1686 = vdwg.mxu0
        %1687 = vmatpush.msra.mxu0 %v1254
        %1688 = vmatpush.msra.mxu0 %v1246
        %1689 = vmatpush.msra.mxu0 %v1238
        %1690 = vmatpush.msra.mxu0 %v1230
        %1691 = vmatpush.msra.mxu0 %v1222
        %1692 = vmatpush.msra.mxu0 %v1214
        %1693 = vmatpush.msra.mxu0 %v1206
        %1694 = vmatpush.msra.mxu0 %v1198
        %1695 = vmatpush.msra.mxu0 %v1190
        %1696 = vmatpush.msra.mxu0 %v1182
        %1697 = vmatpush.msra.mxu0 %v1174
        %1698 = vmatpush.msra.mxu0 %v1166
        %1699 = vmatpush.msra.mxu0 %v1158
        %1700 = vmatpush.msra.mxu0 %v1150
        %1701 = vmatpush.msra.mxu0 %v1142
        %1702 = vmatpush.msra.mxu0 %v1134
        %1703 = vmatmul.f32.gmra.mxu0 %v363
        %v1704 = vpop.f32.mrf.mxu0
        %v1705 = vadd.f32 %v1685, %v1704
        %1706 = vdwg.mxu0
        %1707 = vmatpush.msra.mxu0 %v1382
        %1708 = vmatpush.msra.mxu0 %v1374
        %1709 = vmatpush.msra.mxu0 %v1366
        %1710 = vmatpush.msra.mxu0 %v1358
        %1711 = vmatpush.msra.mxu0 %v1350
        %1712 = vmatpush.msra.mxu0 %v1342
        %1713 = vmatpush.msra.mxu0 %v1334
        %1714 = vmatpush.msra.mxu0 %v1326
        %1715 = vmatpush.msra.mxu0 %v1318
        %1716 = vmatpush.msra.mxu0 %v1310
        %1717 = vmatpush.msra.mxu0 %v1302
        %1718 = vmatpush.msra.mxu0 %v1294
        %1719 = vmatpush.msra.mxu0 %v1286
        %1720 = vmatpush.msra.mxu0 %v1278
        %1721 = vmatpush.msra.mxu0 %v1270
        %1722 = vmatpush.msra.mxu0 %v1262
        %1723 = vmatmul.f32.gmra.mxu0 %v364
        %v1724 = vpop.f32.mrf.mxu0
        %v1725 = vadd.f32 %v1705, %v1724
        %1726 = vdwg.mxu0
        %1727 = vmatpush.msra.mxu0 %v487
        %1728 = vmatpush.msra.mxu0 %v479
        %1729 = vmatpush.msra.mxu0 %v471
        %1730 = vmatpush.msra.mxu0 %v463
        %1731 = vmatpush.msra.mxu0 %v455
        %1732 = vmatpush.msra.mxu0 %v447
        %1733 = vmatpush.msra.mxu0 %v439
        %1734 = vmatpush.msra.mxu0 %v431
        %1735 = vmatpush.msra.mxu0 %v423
        %1736 = vmatpush.msra.mxu0 %v415
        %1737 = vmatpush.msra.mxu0 %v407
        %1738 = vmatpush.msra.mxu0 %v399
        %1739 = vmatpush.msra.mxu0 %v391
        %1740 = vmatpush.msra.mxu0 %v383
        %1741 = vmatpush.msra.mxu0 %v375
        %1742 = vmatpush.msra.mxu0 %v367
        %1743 = vmatmul.f32.gmra.mxu0 %v357
        %v1744 = vpop.f32.mrf.mxu0
        %v1745 = vadd.f32 %v1393, %v1744
        %1746 = vdwg.mxu0
        %1747 = vmatpush.msra.mxu0 %v615
        %1748 = vmatpush.msra.mxu0 %v607
        %1749 = vmatpush.msra.mxu0 %v599
        %1750 = vmatpush.msra.mxu0 %v591
        %1751 = vmatpush.msra.mxu0 %v583
        %1752 = vmatpush.msra.mxu0 %v575
        %1753 = vmatpush.msra.mxu0 %v567
        %1754 = vmatpush.msra.mxu0 %v559
        %1755 = vmatpush.msra.mxu0 %v551
        %1756 = vmatpush.msra.mxu0 %v543
        %1757 = vmatpush.msra.mxu0 %v535
        %1758 = vmatpush.msra.mxu0 %v527
        %1759 = vmatpush.msra.mxu0 %v519
        %1760 = vmatpush.msra.mxu0 %v511
        %1761 = vmatpush.msra.mxu0 %v503
        %1762 = vmatpush.msra.mxu0 %v495
        %1763 = vmatmul.f32.gmra.mxu0 %v358
        %v1764 = vpop.f32.mrf.mxu0
        %v1765 = vadd.f32 %v1745, %v1764
        %1766 = vdwg.mxu0
        %1767 = vmatpush.msra.mxu0 %v743
        %1768 = vmatpush.msra.mxu0 %v735
        %1769 = vmatpush.msra.mxu0 %v727
        %1770 = vmatpush.msra.mxu0 %v719
        %1771 = vmatpush.msra.mxu0 %v711
        %1772 = vmatpush.msra.mxu0 %v703
        %1773 = vmatpush.msra.mxu0 %v695
        %1774 = vmatpush.msra.mxu0 %v687
        %1775 = vmatpush.msra.mxu0 %v679
        %1776 = vmatpush.msra.mxu0 %v671
        %1777 = vmatpush.msra.mxu0 %v663
        %1778 = vmatpush.msra.mxu0 %v655
        %1779 = vmatpush.msra.mxu0 %v647
        %1780 = vmatpush.msra.mxu0 %v639
        %1781 = vmatpush.msra.mxu0 %v631
        %1782 = vmatpush.msra.mxu0 %v623
        %1783 = vmatmul.f32.gmra.mxu0 %v359
        %v1784 = vpop.f32.mrf.mxu0
        %v1785 = vadd.f32 %v1765, %v1784
        %1786 = vdwg.mxu0
        %1787 = vmatpush.msra.mxu0 %v871
        %1788 = vmatpush.msra.mxu0 %v863
        %1789 = vmatpush.msra.mxu0 %v855
        %1790 = vmatpush.msra.mxu0 %v847
        %1791 = vmatpush.msra.mxu0 %v839
        %1792 = vmatpush.msra.mxu0 %v831
        %1793 = vmatpush.msra.mxu0 %v823
        %1794 = vmatpush.msra.mxu0 %v815
        %1795 = vmatpush.msra.mxu0 %v807
        %1796 = vmatpush.msra.mxu0 %v799
        %1797 = vmatpush.msra.mxu0 %v791
        %1798 = vmatpush.msra.mxu0 %v783
        %1799 = vmatpush.msra.mxu0 %v775
        %1800 = vmatpush.msra.mxu0 %v767
        %1801 = vmatpush.msra.mxu0 %v759
        %1802 = vmatpush.msra.mxu0 %v751
        %1803 = vmatmul.f32.gmra.mxu0 %v360
        %v1804 = vpop.f32.mrf.mxu0
        %v1805 = vadd.f32 %v1785, %v1804
        %1806 = vdwg.mxu0
        %1807 = vmatpush.msra.mxu0 %v999
        %1808 = vmatpush.msra.mxu0 %v991
        %1809 = vmatpush.msra.mxu0 %v983
        %1810 = vmatpush.msra.mxu0 %v975
        %1811 = vmatpush.msra.mxu0 %v967
        %1812 = vmatpush.msra.mxu0 %v959
        %1813 = vmatpush.msra.mxu0 %v951
        %1814 = vmatpush.msra.mxu0 %v943
        %1815 = vmatpush.msra.mxu0 %v935
        %1816 = vmatpush.msra.mxu0 %v927
        %1817 = vmatpush.msra.mxu0 %v919
        %1818 = vmatpush.msra.mxu0 %v911
        %1819 = vmatpush.msra.mxu0 %v903
        %1820 = vmatpush.msra.mxu0 %v895
        %1821 = vmatpush.msra.mxu0 %v887
        %1822 = vmatpush.msra.mxu0 %v879
        %1823 = vmatmul.f32.gmra.mxu0 %v361
        %v1824 = vpop.f32.mrf.mxu0
        %v1825 = vadd.f32 %v1805, %v1824
        %1826 = vdwg.mxu0
        %1827 = vmatpush.msra.mxu0 %v1127
        %1828 = vmatpush.msra.mxu0 %v1119
        %1829 = vmatpush.msra.mxu0 %v1111
        %1830 = vmatpush.msra.mxu0 %v1103
        %1831 = vmatpush.msra.mxu0 %v1095
        %1832 = vmatpush.msra.mxu0 %v1087
        %1833 = vmatpush.msra.mxu0 %v1079
        %1834 = vmatpush.msra.mxu0 %v1071
        %1835 = vmatpush.msra.mxu0 %v1063
        %1836 = vmatpush.msra.mxu0 %v1055
        %1837 = vmatpush.msra.mxu0 %v1047
        %1838 = vmatpush.msra.mxu0 %v1039
        %1839 = vmatpush.msra.mxu0 %v1031
        %1840 = vmatpush.msra.mxu0 %v1023
        %1841 = vmatpush.msra.mxu0 %v1015
        %1842 = vmatpush.msra.mxu0 %v1007
        %1843 = vmatmul.f32.gmra.mxu0 %v362
        %v1844 = vpop.f32.mrf.mxu0
        %v1845 = vadd.f32 %v1825, %v1844
        %1846 = vdwg.mxu0
        %1847 = vmatpush.msra.mxu0 %v1255
        %1848 = vmatpush.msra.mxu0 %v1247
        %1849 = vmatpush.msra.mxu0 %v1239
        %1850 = vmatpush.msra.mxu0 %v1231
        %1851 = vmatpush.msra.mxu0 %v1223
        %1852 = vmatpush.msra.mxu0 %v1215
        %1853 = vmatpush.msra.mxu0 %v1207
        %1854 = vmatpush.msra.mxu0 %v1199
        %1855 = vmatpush.msra.mxu0 %v1191
        %1856 = vmatpush.msra.mxu0 %v1183
        %1857 = vmatpush.msra.mxu0 %v1175
        %1858 = vmatpush.msra.mxu0 %v1167
        %1859 = vmatpush.msra.mxu0 %v1159
        %1860 = vmatpush.msra.mxu0 %v1151
        %1861 = vmatpush.msra.mxu0 %v1143
        %1862 = vmatpush.msra.mxu0 %v1135
        %1863 = vmatmul.f32.gmra.mxu0 %v363
        %v1864 = vpop.f32.mrf.mxu0
        %v1865 = vadd.f32 %v1845, %v1864
        %1866 = vdwg.mxu0
        %1867 = vmatpush.msra.mxu0 %v1383
        %1868 = vmatpush.msra.mxu0 %v1375
        %1869 = vmatpush.msra.mxu0 %v1367
        %1870 = vmatpush.msra.mxu0 %v1359
        %1871 = vmatpush.msra.mxu0 %v1351
        %1872 = vmatpush.msra.mxu0 %v1343
        %1873 = vmatpush.msra.mxu0 %v1335
        %1874 = vmatpush.msra.mxu0 %v1327
        %1875 = vmatpush.msra.mxu0 %v1319
        %1876 = vmatpush.msra.mxu0 %v1311
        %1877 = vmatpush.msra.mxu0 %v1303
        %1878 = vmatpush.msra.mxu0 %v1295
        %1879 = vmatpush.msra.mxu0 %v1287
        %1880 = vmatpush.msra.mxu0 %v1279
        %1881 = vmatpush.msra.mxu0 %v1271
        %1882 = vmatpush.msra.mxu0 %v1263
        %1883 = vmatmul.f32.gmra.mxu0 %v364
        %v1884 = vpop.f32.mrf.mxu0
        %v1885 = vadd.f32 %v1865, %v1884
        %1886 = vdwg.mxu0
        %1887 = vmatpush.msra.mxu0 %v488
        %1888 = vmatpush.msra.mxu0 %v480
        %1889 = vmatpush.msra.mxu0 %v472
        %1890 = vmatpush.msra.mxu0 %v464
        %1891 = vmatpush.msra.mxu0 %v456
        %1892 = vmatpush.msra.mxu0 %v448
        %1893 = vmatpush.msra.mxu0 %v440
        %1894 = vmatpush.msra.mxu0 %v432
        %1895 = vmatpush.msra.mxu0 %v424
        %1896 = vmatpush.msra.mxu0 %v416
        %1897 = vmatpush.msra.mxu0 %v408
        %1898 = vmatpush.msra.mxu0 %v400
        %1899 = vmatpush.msra.mxu0 %v392
        %1900 = vmatpush.msra.mxu0 %v384
        %1901 = vmatpush.msra.mxu0 %v376
        %1902 = vmatpush.msra.mxu0 %v368
        %1903 = vmatmul.f32.gmra.mxu0 %v357
        %v1904 = vpop.f32.mrf.mxu0
        %v1905 = vadd.f32 %v1394, %v1904
        %1906 = vdwg.mxu0
        %1907 = vmatpush.msra.mxu0 %v616
        %1908 = vmatpush.msra.mxu0 %v608
        %1909 = vmatpush.msra.mxu0 %v600
        %1910 = vmatpush.msra.mxu0 %v592
        %1911 = vmatpush.msra.mxu0 %v584
        %1912 = vmatpush.msra.mxu0 %v576
        %1913 = vmatpush.msra.mxu0 %v568
        %1914 = vmatpush.msra.mxu0 %v560
        %1915 = vmatpush.msra.mxu0 %v552
        %1916 = vmatpush.msra.mxu0 %v544
        %1917 = vmatpush.msra.mxu0 %v536
        %1918 = vmatpush.msra.mxu0 %v528
        %1919 = vmatpush.msra.mxu0 %v520
        %1920 = vmatpush.msra.mxu0 %v512
        %1921 = vmatpush.msra.mxu0 %v504
        %1922 = vmatpush.msra.mxu0 %v496
        %1923 = vmatmul.f32.gmra.mxu0 %v358
        %v1924 = vpop.f32.mrf.mxu0
        %v1925 = vadd.f32 %v1905, %v1924
        %1926 = vdwg.mxu0
        %1927 = vmatpush.msra.mxu0 %v744
        %1928 = vmatpush.msra.mxu0 %v736
        %1929 = vmatpush.msra.mxu0 %v728
        %1930 = vmatpush.msra.mxu0 %v720
        %1931 = vmatpush.msra.mxu0 %v712
        %1932 = vmatpush.msra.mxu0 %v704
        %1933 = vmatpush.msra.mxu0 %v696
        %1934 = vmatpush.msra.mxu0 %v688
        %1935 = vmatpush.msra.mxu0 %v680
        %1936 = vmatpush.msra.mxu0 %v672
        %1937 = vmatpush.msra.mxu0 %v664
        %1938 = vmatpush.msra.mxu0 %v656
        %1939 = vmatpush.msra.mxu0 %v648
        %1940 = vmatpush.msra.mxu0 %v640
        %1941 = vmatpush.msra.mxu0 %v632
        %1942 = vmatpush.msra.mxu0 %v624
        %1943 = vmatmul.f32.gmra.mxu0 %v359
        %v1944 = vpop.f32.mrf.mxu0
        %v1945 = vadd.f32 %v1925, %v1944
        %1946 = vdwg.mxu0
        %1947 = vmatpush.msra.mxu0 %v872
        %1948 = vmatpush.msra.mxu0 %v864
        %1949 = vmatpush.msra.mxu0 %v856
        %1950 = vmatpush.msra.mxu0 %v848
        %1951 = vmatpush.msra.mxu0 %v840
        %1952 = vmatpush.msra.mxu0 %v832
        %1953 = vmatpush.msra.mxu0 %v824
        %1954 = vmatpush.msra.mxu0 %v816
        %1955 = vmatpush.msra.mxu0 %v808
        %1956 = vmatpush.msra.mxu0 %v800
        %1957 = vmatpush.msra.mxu0 %v792
        %1958 = vmatpush.msra.mxu0 %v784
        %1959 = vmatpush.msra.mxu0 %v776
        %1960 = vmatpush.msra.mxu0 %v768
        %1961 = vmatpush.msra.mxu0 %v760
        %1962 = vmatpush.msra.mxu0 %v752
        %1963 = vmatmul.f32.gmra.mxu0 %v360
        %v1964 = vpop.f32.mrf.mxu0
        %v1965 = vadd.f32 %v1945, %v1964
        %1966 = vdwg.mxu0
        %1967 = vmatpush.msra.mxu0 %v1000
        %1968 = vmatpush.msra.mxu0 %v992
        %1969 = vmatpush.msra.mxu0 %v984
        %1970 = vmatpush.msra.mxu0 %v976
        %1971 = vmatpush.msra.mxu0 %v968
        %1972 = vmatpush.msra.mxu0 %v960
        %1973 = vmatpush.msra.mxu0 %v952
        %1974 = vmatpush.msra.mxu0 %v944
        %1975 = vmatpush.msra.mxu0 %v936
        %1976 = vmatpush.msra.mxu0 %v928
        %1977 = vmatpush.msra.mxu0 %v920
        %1978 = vmatpush.msra.mxu0 %v912
        %1979 = vmatpush.msra.mxu0 %v904
        %1980 = vmatpush.msra.mxu0 %v896
        %1981 = vmatpush.msra.mxu0 %v888
        %1982 = vmatpush.msra.mxu0 %v880
        %1983 = vmatmul.f32.gmra.mxu0 %v361
        %v1984 = vpop.f32.mrf.mxu0
        %v1985 = vadd.f32 %v1965, %v1984
        %1986 = vdwg.mxu0
        %1987 = vmatpush.msra.mxu0 %v1128
        %1988 = vmatpush.msra.mxu0 %v1120
        %1989 = vmatpush.msra.mxu0 %v1112
        %1990 = vmatpush.msra.mxu0 %v1104
        %1991 = vmatpush.msra.mxu0 %v1096
        %1992 = vmatpush.msra.mxu0 %v1088
        %1993 = vmatpush.msra.mxu0 %v1080
        %1994 = vmatpush.msra.mxu0 %v1072
        %1995 = vmatpush.msra.mxu0 %v1064
        %1996 = vmatpush.msra.mxu0 %v1056
        %1997 = vmatpush.msra.mxu0 %v1048
        %1998 = vmatpush.msra.mxu0 %v1040
        %1999 = vmatpush.msra.mxu0 %v1032
        %2000 = vmatpush.msra.mxu0 %v1024
        %2001 = vmatpush.msra.mxu0 %v1016
        %2002 = vmatpush.msra.mxu0 %v1008
        %2003 = vmatmul.f32.gmra.mxu0 %v362
        %v2004 = vpop.f32.mrf.mxu0
        %v2005 = vadd.f32 %v1985, %v2004
        %2006 = vdwg.mxu0
        %2007 = vmatpush.msra.mxu0 %v1256
        %2008 = vmatpush.msra.mxu0 %v1248
        %2009 = vmatpush.msra.mxu0 %v1240
        %2010 = vmatpush.msra.mxu0 %v1232
        %2011 = vmatpush.msra.mxu0 %v1224
        %2012 = vmatpush.msra.mxu0 %v1216
        %2013 = vmatpush.msra.mxu0 %v1208
        %2014 = vmatpush.msra.mxu0 %v1200
        %2015 = vmatpush.msra.mxu0 %v1192
        %2016 = vmatpush.msra.mxu0 %v1184
        %2017 = vmatpush.msra.mxu0 %v1176
        %2018 = vmatpush.msra.mxu0 %v1168
        %2019 = vmatpush.msra.mxu0 %v1160
        %2020 = vmatpush.msra.mxu0 %v1152
        %2021 = vmatpush.msra.mxu0 %v1144
        %2022 = vmatpush.msra.mxu0 %v1136
        %2023 = vmatmul.f32.gmra.mxu0 %v363
        %v2024 = vpop.f32.mrf.mxu0
        %v2025 = vadd.f32 %v2005, %v2024
        %2026 = vdwg.mxu0
        %2027 = vmatpush.msra.mxu0 %v1384
        %2028 = vmatpush.msra.mxu0 %v1376
        %2029 = vmatpush.msra.mxu0 %v1368
        %2030 = vmatpush.msra.mxu0 %v1360
        %2031 = vmatpush.msra.mxu0 %v1352
        %2032 = vmatpush.msra.mxu0 %v1344
        %2033 = vmatpush.msra.mxu0 %v1336
        %2034 = vmatpush.msra.mxu0 %v1328
        %2035 = vmatpush.msra.mxu0 %v1320
        %2036 = vmatpush.msra.mxu0 %v1312
        %2037 = vmatpush.msra.mxu0 %v1304
        %2038 = vmatpush.msra.mxu0 %v1296
        %2039 = vmatpush.msra.mxu0 %v1288
        %2040 = vmatpush.msra.mxu0 %v1280
        %2041 = vmatpush.msra.mxu0 %v1272
        %2042 = vmatpush.msra.mxu0 %v1264
        %2043 = vmatmul.f32.gmra.mxu0 %v364
        %v2044 = vpop.f32.mrf.mxu0
        %v2045 = vadd.f32 %v2025, %v2044
        %2046 = vdwg.mxu0
        %2047 = vmatpush.msra.mxu0 %v489
        %2048 = vmatpush.msra.mxu0 %v481
        %2049 = vmatpush.msra.mxu0 %v473
        %2050 = vmatpush.msra.mxu0 %v465
        %2051 = vmatpush.msra.mxu0 %v457
        %2052 = vmatpush.msra.mxu0 %v449
        %2053 = vmatpush.msra.mxu0 %v441
        %2054 = vmatpush.msra.mxu0 %v433
        %2055 = vmatpush.msra.mxu0 %v425
        %2056 = vmatpush.msra.mxu0 %v417
        %2057 = vmatpush.msra.mxu0 %v409
        %2058 = vmatpush.msra.mxu0 %v401
        %2059 = vmatpush.msra.mxu0 %v393
        %2060 = vmatpush.msra.mxu0 %v385
        %2061 = vmatpush.msra.mxu0 %v377
        %2062 = vmatpush.msra.mxu0 %v369
        %2063 = vmatmul.f32.gmra.mxu0 %v357
        %v2064 = vpop.f32.mrf.mxu0
        %v2065 = vadd.f32 %v1395, %v2064
        %2066 = vdwg.mxu0
        %2067 = vmatpush.msra.mxu0 %v617
        %2068 = vmatpush.msra.mxu0 %v609
        %2069 = vmatpush.msra.mxu0 %v601
        %2070 = vmatpush.msra.mxu0 %v593
        %2071 = vmatpush.msra.mxu0 %v585
        %2072 = vmatpush.msra.mxu0 %v577
        %2073 = vmatpush.msra.mxu0 %v569
        %2074 = vmatpush.msra.mxu0 %v561
        %2075 = vmatpush.msra.mxu0 %v553
        %2076 = vmatpush.msra.mxu0 %v545
        %2077 = vmatpush.msra.mxu0 %v537
        %2078 = vmatpush.msra.mxu0 %v529
        %2079 = vmatpush.msra.mxu0 %v521
        %2080 = vmatpush.msra.mxu0 %v513
        %2081 = vmatpush.msra.mxu0 %v505
        %2082 = vmatpush.msra.mxu0 %v497
        %2083 = vmatmul.f32.gmra.mxu0 %v358
        %v2084 = vpop.f32.mrf.mxu0
        %v2085 = vadd.f32 %v2065, %v2084
        %2086 = vdwg.mxu0
        %2087 = vmatpush.msra.mxu0 %v745
        %2088 = vmatpush.msra.mxu0 %v737
        %2089 = vmatpush.msra.mxu0 %v729
        %2090 = vmatpush.msra.mxu0 %v721
        %2091 = vmatpush.msra.mxu0 %v713
        %2092 = vmatpush.msra.mxu0 %v705
        %2093 = vmatpush.msra.mxu0 %v697
        %2094 = vmatpush.msra.mxu0 %v689
        %2095 = vmatpush.msra.mxu0 %v681
        %2096 = vmatpush.msra.mxu0 %v673
        %2097 = vmatpush.msra.mxu0 %v665
        %2098 = vmatpush.msra.mxu0 %v657
        %2099 = vmatpush.msra.mxu0 %v649
        %2100 = vmatpush.msra.mxu0 %v641
        %2101 = vmatpush.msra.mxu0 %v633
        %2102 = vmatpush.msra.mxu0 %v625
        %2103 = vmatmul.f32.gmra.mxu0 %v359
        %v2104 = vpop.f32.mrf.mxu0
        %v2105 = vadd.f32 %v2085, %v2104
        %2106 = vdwg.mxu0
        %2107 = vmatpush.msra.mxu0 %v873
        %2108 = vmatpush.msra.mxu0 %v865
        %2109 = vmatpush.msra.mxu0 %v857
        %2110 = vmatpush.msra.mxu0 %v849
        %2111 = vmatpush.msra.mxu0 %v841
        %2112 = vmatpush.msra.mxu0 %v833
        %2113 = vmatpush.msra.mxu0 %v825
        %2114 = vmatpush.msra.mxu0 %v817
        %2115 = vmatpush.msra.mxu0 %v809
        %2116 = vmatpush.msra.mxu0 %v801
        %2117 = vmatpush.msra.mxu0 %v793
        %2118 = vmatpush.msra.mxu0 %v785
        %2119 = vmatpush.msra.mxu0 %v777
        %2120 = vmatpush.msra.mxu0 %v769
        %2121 = vmatpush.msra.mxu0 %v761
        %2122 = vmatpush.msra.mxu0 %v753
        %2123 = vmatmul.f32.gmra.mxu0 %v360
        %v2124 = vpop.f32.mrf.mxu0
        %v2125 = vadd.f32 %v2105, %v2124
        %2126 = vdwg.mxu0
        %2127 = vmatpush.msra.mxu0 %v1001
        %2128 = vmatpush.msra.mxu0 %v993
        %2129 = vmatpush.msra.mxu0 %v985
        %2130 = vmatpush.msra.mxu0 %v977
        %2131 = vmatpush.msra.mxu0 %v969
        %2132 = vmatpush.msra.mxu0 %v961
        %2133 = vmatpush.msra.mxu0 %v953
        %2134 = vmatpush.msra.mxu0 %v945
        %2135 = vmatpush.msra.mxu0 %v937
        %2136 = vmatpush.msra.mxu0 %v929
        %2137 = vmatpush.msra.mxu0 %v921
        %2138 = vmatpush.msra.mxu0 %v913
        %2139 = vmatpush.msra.mxu0 %v905
        %2140 = vmatpush.msra.mxu0 %v897
        %2141 = vmatpush.msra.mxu0 %v889
        %2142 = vmatpush.msra.mxu0 %v881
        %2143 = vmatmul.f32.gmra.mxu0 %v361
        %v2144 = vpop.f32.mrf.mxu0
        %v2145 = vadd.f32 %v2125, %v2144
        %2146 = vdwg.mxu0
        %2147 = vmatpush.msra.mxu0 %v1129
        %2148 = vmatpush.msra.mxu0 %v1121
        %2149 = vmatpush.msra.mxu0 %v1113
        %2150 = vmatpush.msra.mxu0 %v1105
        %2151 = vmatpush.msra.mxu0 %v1097
        %2152 = vmatpush.msra.mxu0 %v1089
        %2153 = vmatpush.msra.mxu0 %v1081
        %2154 = vmatpush.msra.mxu0 %v1073
        %2155 = vmatpush.msra.mxu0 %v1065
        %2156 = vmatpush.msra.mxu0 %v1057
        %2157 = vmatpush.msra.mxu0 %v1049
        %2158 = vmatpush.msra.mxu0 %v1041
        %2159 = vmatpush.msra.mxu0 %v1033
        %2160 = vmatpush.msra.mxu0 %v1025
        %2161 = vmatpush.msra.mxu0 %v1017
        %2162 = vmatpush.msra.mxu0 %v1009
        %2163 = vmatmul.f32.gmra.mxu0 %v362
        %v2164 = vpop.f32.mrf.mxu0
        %v2165 = vadd.f32 %v2145, %v2164
        %2166 = vdwg.mxu0
        %2167 = vmatpush.msra.mxu0 %v1257
        %2168 = vmatpush.msra.mxu0 %v1249
        %2169 = vmatpush.msra.mxu0 %v1241
        %2170 = vmatpush.msra.mxu0 %v1233
        %2171 = vmatpush.msra.mxu0 %v1225
        %2172 = vmatpush.msra.mxu0 %v1217
        %2173 = vmatpush.msra.mxu0 %v1209
        %2174 = vmatpush.msra.mxu0 %v1201
        %2175 = vmatpush.msra.mxu0 %v1193
        %2176 = vmatpush.msra.mxu0 %v1185
        %2177 = vmatpush.msra.mxu0 %v1177
        %2178 = vmatpush.msra.mxu0 %v1169
        %2179 = vmatpush.msra.mxu0 %v1161
        %2180 = vmatpush.msra.mxu0 %v1153
        %2181 = vmatpush.msra.mxu0 %v1145
        %2182 = vmatpush.msra.mxu0 %v1137
        %2183 = vmatmul.f32.gmra.mxu0 %v363
        %v2184 = vpop.f32.mrf.mxu0
        %v2185 = vadd.f32 %v2165, %v2184
        %2186 = vdwg.mxu0
        %2187 = vmatpush.msra.mxu0 %v1385
        %2188 = vmatpush.msra.mxu0 %v1377
        %2189 = vmatpush.msra.mxu0 %v1369
        %2190 = vmatpush.msra.mxu0 %v1361
        %2191 = vmatpush.msra.mxu0 %v1353
        %2192 = vmatpush.msra.mxu0 %v1345
        %2193 = vmatpush.msra.mxu0 %v1337
        %2194 = vmatpush.msra.mxu0 %v1329
        %2195 = vmatpush.msra.mxu0 %v1321
        %2196 = vmatpush.msra.mxu0 %v1313
        %2197 = vmatpush.msra.mxu0 %v1305
        %2198 = vmatpush.msra.mxu0 %v1297
        %2199 = vmatpush.msra.mxu0 %v1289
        %2200 = vmatpush.msra.mxu0 %v1281
        %2201 = vmatpush.msra.mxu0 %v1273
        %2202 = vmatpush.msra.mxu0 %v1265
        %2203 = vmatmul.f32.gmra.mxu0 %v364
        %v2204 = vpop.f32.mrf.mxu0
        %v2205 = vadd.f32 %v2185, %v2204
        %2206 = vdwg.mxu0
        %2207 = vmatpush.msra.mxu0 %v490
        %2208 = vmatpush.msra.mxu0 %v482
        %2209 = vmatpush.msra.mxu0 %v474
        %2210 = vmatpush.msra.mxu0 %v466
        %2211 = vmatpush.msra.mxu0 %v458
        %2212 = vmatpush.msra.mxu0 %v450
        %2213 = vmatpush.msra.mxu0 %v442
        %2214 = vmatpush.msra.mxu0 %v434
        %2215 = vmatpush.msra.mxu0 %v426
        %2216 = vmatpush.msra.mxu0 %v418
        %2217 = vmatpush.msra.mxu0 %v410
        %2218 = vmatpush.msra.mxu0 %v402
        %2219 = vmatpush.msra.mxu0 %v394
        %2220 = vmatpush.msra.mxu0 %v386
        %2221 = vmatpush.msra.mxu0 %v378
        %2222 = vmatpush.msra.mxu0 %v370
        %2223 = vmatmul.f32.gmra.mxu0 %v357
        %v2224 = vpop.f32.mrf.mxu0
        %v2225 = vadd.f32 %v1396, %v2224
        %2226 = vdwg.mxu0
        %2227 = vmatpush.msra.mxu0 %v618
        %2228 = vmatpush.msra.mxu0 %v610
        %2229 = vmatpush.msra.mxu0 %v602
        %2230 = vmatpush.msra.mxu0 %v594
        %2231 = vmatpush.msra.mxu0 %v586
        %2232 = vmatpush.msra.mxu0 %v578
        %2233 = vmatpush.msra.mxu0 %v570
        %2234 = vmatpush.msra.mxu0 %v562
        %2235 = vmatpush.msra.mxu0 %v554
        %2236 = vmatpush.msra.mxu0 %v546
        %2237 = vmatpush.msra.mxu0 %v538
        %2238 = vmatpush.msra.mxu0 %v530
        %2239 = vmatpush.msra.mxu0 %v522
        %2240 = vmatpush.msra.mxu0 %v514
        %2241 = vmatpush.msra.mxu0 %v506
        %2242 = vmatpush.msra.mxu0 %v498
        %2243 = vmatmul.f32.gmra.mxu0 %v358
        %v2244 = vpop.f32.mrf.mxu0
        %v2245 = vadd.f32 %v2225, %v2244
        %2246 = vdwg.mxu0
        %2247 = vmatpush.msra.mxu0 %v746
        %2248 = vmatpush.msra.mxu0 %v738
        %2249 = vmatpush.msra.mxu0 %v730
        %2250 = vmatpush.msra.mxu0 %v722
        %2251 = vmatpush.msra.mxu0 %v714
        %2252 = vmatpush.msra.mxu0 %v706
        %2253 = vmatpush.msra.mxu0 %v698
        %2254 = vmatpush.msra.mxu0 %v690
        %2255 = vmatpush.msra.mxu0 %v682
        %2256 = vmatpush.msra.mxu0 %v674
        %2257 = vmatpush.msra.mxu0 %v666
        %2258 = vmatpush.msra.mxu0 %v658
        %2259 = vmatpush.msra.mxu0 %v650
        %2260 = vmatpush.msra.mxu0 %v642
        %2261 = vmatpush.msra.mxu0 %v634
        %2262 = vmatpush.msra.mxu0 %v626
        %2263 = vmatmul.f32.gmra.mxu0 %v359
        %v2264 = vpop.f32.mrf.mxu0
        %v2265 = vadd.f32 %v2245, %v2264
        %2266 = vdwg.mxu0
        %2267 = vmatpush.msra.mxu0 %v874
        %2268 = vmatpush.msra.mxu0 %v866
        %2269 = vmatpush.msra.mxu0 %v858
        %2270 = vmatpush.msra.mxu0 %v850
        %2271 = vmatpush.msra.mxu0 %v842
        %2272 = vmatpush.msra.mxu0 %v834
        %2273 = vmatpush.msra.mxu0 %v826
        %2274 = vmatpush.msra.mxu0 %v818
        %2275 = vmatpush.msra.mxu0 %v810
        %2276 = vmatpush.msra.mxu0 %v802
        %2277 = vmatpush.msra.mxu0 %v794
        %2278 = vmatpush.msra.mxu0 %v786
        %2279 = vmatpush.msra.mxu0 %v778
        %2280 = vmatpush.msra.mxu0 %v770
        %2281 = vmatpush.msra.mxu0 %v762
        %2282 = vmatpush.msra.mxu0 %v754
        %2283 = vmatmul.f32.gmra.mxu0 %v360
        %v2284 = vpop.f32.mrf.mxu0
        %v2285 = vadd.f32 %v2265, %v2284
        %2286 = vdwg.mxu0
        %2287 = vmatpush.msra.mxu0 %v1002
        %2288 = vmatpush.msra.mxu0 %v994
        %2289 = vmatpush.msra.mxu0 %v986
        %2290 = vmatpush.msra.mxu0 %v978
        %2291 = vmatpush.msra.mxu0 %v970
        %2292 = vmatpush.msra.mxu0 %v962
        %2293 = vmatpush.msra.mxu0 %v954
        %2294 = vmatpush.msra.mxu0 %v946
        %2295 = vmatpush.msra.mxu0 %v938
        %2296 = vmatpush.msra.mxu0 %v930
        %2297 = vmatpush.msra.mxu0 %v922
        %2298 = vmatpush.msra.mxu0 %v914
        %2299 = vmatpush.msra.mxu0 %v906
        %2300 = vmatpush.msra.mxu0 %v898
        %2301 = vmatpush.msra.mxu0 %v890
        %2302 = vmatpush.msra.mxu0 %v882
        %2303 = vmatmul.f32.gmra.mxu0 %v361
        %v2304 = vpop.f32.mrf.mxu0
        %v2305 = vadd.f32 %v2285, %v2304
        %2306 = vdwg.mxu0
        %2307 = vmatpush.msra.mxu0 %v1130
        %2308 = vmatpush.msra.mxu0 %v1122
        %2309 = vmatpush.msra.mxu0 %v1114
        %2310 = vmatpush.msra.mxu0 %v1106
        %2311 = vmatpush.msra.mxu0 %v1098
        %2312 = vmatpush.msra.mxu0 %v1090
        %2313 = vmatpush.msra.mxu0 %v1082
        %2314 = vmatpush.msra.mxu0 %v1074
        %2315 = vmatpush.msra.mxu0 %v1066
        %2316 = vmatpush.msra.mxu0 %v1058
        %2317 = vmatpush.msra.mxu0 %v1050
        %2318 = vmatpush.msra.mxu0 %v1042
        %2319 = vmatpush.msra.mxu0 %v1034
        %2320 = vmatpush.msra.mxu0 %v1026
        %2321 = vmatpush.msra.mxu0 %v1018
        %2322 = vmatpush.msra.mxu0 %v1010
        %2323 = vmatmul.f32.gmra.mxu0 %v362
        %v2324 = vpop.f32.mrf.mxu0
        %v2325 = vadd.f32 %v2305, %v2324
        %2326 = vdwg.mxu0
        %2327 = vmatpush.msra.mxu0 %v1258
        %2328 = vmatpush.msra.mxu0 %v1250
        %2329 = vmatpush.msra.mxu0 %v1242
        %2330 = vmatpush.msra.mxu0 %v1234
        %2331 = vmatpush.msra.mxu0 %v1226
        %2332 = vmatpush.msra.mxu0 %v1218
        %2333 = vmatpush.msra.mxu0 %v1210
        %2334 = vmatpush.msra.mxu0 %v1202
        %2335 = vmatpush.msra.mxu0 %v1194
        %2336 = vmatpush.msra.mxu0 %v1186
        %2337 = vmatpush.msra.mxu0 %v1178
        %2338 = vmatpush.msra.mxu0 %v1170
        %2339 = vmatpush.msra.mxu0 %v1162
        %2340 = vmatpush.msra.mxu0 %v1154
        %2341 = vmatpush.msra.mxu0 %v1146
        %2342 = vmatpush.msra.mxu0 %v1138
        %2343 = vmatmul.f32.gmra.mxu0 %v363
        %v2344 = vpop.f32.mrf.mxu0
        %v2345 = vadd.f32 %v2325, %v2344
        %2346 = vdwg.mxu0
        %2347 = vmatpush.msra.mxu0 %v1386
        %2348 = vmatpush.msra.mxu0 %v1378
        %2349 = vmatpush.msra.mxu0 %v1370
        %2350 = vmatpush.msra.mxu0 %v1362
        %2351 = vmatpush.msra.mxu0 %v1354
        %2352 = vmatpush.msra.mxu0 %v1346
        %2353 = vmatpush.msra.mxu0 %v1338
        %2354 = vmatpush.msra.mxu0 %v1330
        %2355 = vmatpush.msra.mxu0 %v1322
        %2356 = vmatpush.msra.mxu0 %v1314
        %2357 = vmatpush.msra.mxu0 %v1306
        %2358 = vmatpush.msra.mxu0 %v1298
        %2359 = vmatpush.msra.mxu0 %v1290
        %2360 = vmatpush.msra.mxu0 %v1282
        %2361 = vmatpush.msra.mxu0 %v1274
        %2362 = vmatpush.msra.mxu0 %v1266
        %2363 = vmatmul.f32.gmra.mxu0 %v364
        %v2364 = vpop.f32.mrf.mxu0
        %v2365 = vadd.f32 %v2345, %v2364
        %2366 = vdwg.mxu0
        %2367 = vmatpush.msra.mxu0 %v491
        %2368 = vmatpush.msra.mxu0 %v483
        %2369 = vmatpush.msra.mxu0 %v475
        %2370 = vmatpush.msra.mxu0 %v467
        %2371 = vmatpush.msra.mxu0 %v459
        %2372 = vmatpush.msra.mxu0 %v451
        %2373 = vmatpush.msra.mxu0 %v443
        %2374 = vmatpush.msra.mxu0 %v435
        %2375 = vmatpush.msra.mxu0 %v427
        %2376 = vmatpush.msra.mxu0 %v419
        %2377 = vmatpush.msra.mxu0 %v411
        %2378 = vmatpush.msra.mxu0 %v403
        %2379 = vmatpush.msra.mxu0 %v395
        %2380 = vmatpush.msra.mxu0 %v387
        %2381 = vmatpush.msra.mxu0 %v379
        %2382 = vmatpush.msra.mxu0 %v371
        %2383 = vmatmul.f32.gmra.mxu0 %v357
        %v2384 = vpop.f32.mrf.mxu0
        %v2385 = vadd.f32 %v1397, %v2384
        %2386 = vdwg.mxu0
        %2387 = vmatpush.msra.mxu0 %v619
        %2388 = vmatpush.msra.mxu0 %v611
        %2389 = vmatpush.msra.mxu0 %v603
        %2390 = vmatpush.msra.mxu0 %v595
        %2391 = vmatpush.msra.mxu0 %v587
        %2392 = vmatpush.msra.mxu0 %v579
        %2393 = vmatpush.msra.mxu0 %v571
        %2394 = vmatpush.msra.mxu0 %v563
        %2395 = vmatpush.msra.mxu0 %v555
        %2396 = vmatpush.msra.mxu0 %v547
        %2397 = vmatpush.msra.mxu0 %v539
        %2398 = vmatpush.msra.mxu0 %v531
        %2399 = vmatpush.msra.mxu0 %v523
        %2400 = vmatpush.msra.mxu0 %v515
        %2401 = vmatpush.msra.mxu0 %v507
        %2402 = vmatpush.msra.mxu0 %v499
        %2403 = vmatmul.f32.gmra.mxu0 %v358
        %v2404 = vpop.f32.mrf.mxu0
        %v2405 = vadd.f32 %v2385, %v2404
        %2406 = vdwg.mxu0
        %2407 = vmatpush.msra.mxu0 %v747
        %2408 = vmatpush.msra.mxu0 %v739
        %2409 = vmatpush.msra.mxu0 %v731
        %2410 = vmatpush.msra.mxu0 %v723
        %2411 = vmatpush.msra.mxu0 %v715
        %2412 = vmatpush.msra.mxu0 %v707
        %2413 = vmatpush.msra.mxu0 %v699
        %2414 = vmatpush.msra.mxu0 %v691
        %2415 = vmatpush.msra.mxu0 %v683
        %2416 = vmatpush.msra.mxu0 %v675
        %2417 = vmatpush.msra.mxu0 %v667
        %2418 = vmatpush.msra.mxu0 %v659
        %2419 = vmatpush.msra.mxu0 %v651
        %2420 = vmatpush.msra.mxu0 %v643
        %2421 = vmatpush.msra.mxu0 %v635
        %2422 = vmatpush.msra.mxu0 %v627
        %2423 = vmatmul.f32.gmra.mxu0 %v359
        %v2424 = vpop.f32.mrf.mxu0
        %v2425 = vadd.f32 %v2405, %v2424
        %2426 = vdwg.mxu0
        %2427 = vmatpush.msra.mxu0 %v875
        %2428 = vmatpush.msra.mxu0 %v867
        %2429 = vmatpush.msra.mxu0 %v859
        %2430 = vmatpush.msra.mxu0 %v851
        %2431 = vmatpush.msra.mxu0 %v843
        %2432 = vmatpush.msra.mxu0 %v835
        %2433 = vmatpush.msra.mxu0 %v827
        %2434 = vmatpush.msra.mxu0 %v819
        %2435 = vmatpush.msra.mxu0 %v811
        %2436 = vmatpush.msra.mxu0 %v803
        %2437 = vmatpush.msra.mxu0 %v795
        %2438 = vmatpush.msra.mxu0 %v787
        %2439 = vmatpush.msra.mxu0 %v779
        %2440 = vmatpush.msra.mxu0 %v771
        %2441 = vmatpush.msra.mxu0 %v763
        %2442 = vmatpush.msra.mxu0 %v755
        %2443 = vmatmul.f32.gmra.mxu0 %v360
        %v2444 = vpop.f32.mrf.mxu0
        %v2445 = vadd.f32 %v2425, %v2444
        %2446 = vdwg.mxu0
        %2447 = vmatpush.msra.mxu0 %v1003
        %2448 = vmatpush.msra.mxu0 %v995
        %2449 = vmatpush.msra.mxu0 %v987
        %2450 = vmatpush.msra.mxu0 %v979
        %2451 = vmatpush.msra.mxu0 %v971
        %2452 = vmatpush.msra.mxu0 %v963
        %2453 = vmatpush.msra.mxu0 %v955
        %2454 = vmatpush.msra.mxu0 %v947
        %2455 = vmatpush.msra.mxu0 %v939
        %2456 = vmatpush.msra.mxu0 %v931
        %2457 = vmatpush.msra.mxu0 %v923
        %2458 = vmatpush.msra.mxu0 %v915
        %2459 = vmatpush.msra.mxu0 %v907
        %2460 = vmatpush.msra.mxu0 %v899
        %2461 = vmatpush.msra.mxu0 %v891
        %2462 = vmatpush.msra.mxu0 %v883
        %2463 = vmatmul.f32.gmra.mxu0 %v361
        %v2464 = vpop.f32.mrf.mxu0
        %v2465 = vadd.f32 %v2445, %v2464
        %2466 = vdwg.mxu0
        %2467 = vmatpush.msra.mxu0 %v1131
        %2468 = vmatpush.msra.mxu0 %v1123
        %2469 = vmatpush.msra.mxu0 %v1115
        %2470 = vmatpush.msra.mxu0 %v1107
        %2471 = vmatpush.msra.mxu0 %v1099
        %2472 = vmatpush.msra.mxu0 %v1091
        %2473 = vmatpush.msra.mxu0 %v1083
        %2474 = vmatpush.msra.mxu0 %v1075
        %2475 = vmatpush.msra.mxu0 %v1067
        %2476 = vmatpush.msra.mxu0 %v1059
        %2477 = vmatpush.msra.mxu0 %v1051
        %2478 = vmatpush.msra.mxu0 %v1043
        %2479 = vmatpush.msra.mxu0 %v1035
        %2480 = vmatpush.msra.mxu0 %v1027
        %2481 = vmatpush.msra.mxu0 %v1019
        %2482 = vmatpush.msra.mxu0 %v1011
        %2483 = vmatmul.f32.gmra.mxu0 %v362
        %v2484 = vpop.f32.mrf.mxu0
        %v2485 = vadd.f32 %v2465, %v2484
        %2486 = vdwg.mxu0
        %2487 = vmatpush.msra.mxu0 %v1259
        %2488 = vmatpush.msra.mxu0 %v1251
        %2489 = vmatpush.msra.mxu0 %v1243
        %2490 = vmatpush.msra.mxu0 %v1235
        %2491 = vmatpush.msra.mxu0 %v1227
        %2492 = vmatpush.msra.mxu0 %v1219
        %2493 = vmatpush.msra.mxu0 %v1211
        %2494 = vmatpush.msra.mxu0 %v1203
        %2495 = vmatpush.msra.mxu0 %v1195
        %2496 = vmatpush.msra.mxu0 %v1187
        %2497 = vmatpush.msra.mxu0 %v1179
        %2498 = vmatpush.msra.mxu0 %v1171
        %2499 = vmatpush.msra.mxu0 %v1163
        %2500 = vmatpush.msra.mxu0 %v1155
        %2501 = vmatpush.msra.mxu0 %v1147
        %2502 = vmatpush.msra.mxu0 %v1139
        %2503 = vmatmul.f32.gmra.mxu0 %v363
        %v2504 = vpop.f32.mrf.mxu0
        %v2505 = vadd.f32 %v2485, %v2504
        %2506 = vdwg.mxu0
        %2507 = vmatpush.msra.mxu0 %v1387
        %2508 = vmatpush.msra.mxu0 %v1379
        %2509 = vmatpush.msra.mxu0 %v1371
        %2510 = vmatpush.msra.mxu0 %v1363
        %2511 = vmatpush.msra.mxu0 %v1355
        %2512 = vmatpush.msra.mxu0 %v1347
        %2513 = vmatpush.msra.mxu0 %v1339
        %2514 = vmatpush.msra.mxu0 %v1331
        %2515 = vmatpush.msra.mxu0 %v1323
        %2516 = vmatpush.msra.mxu0 %v1315
        %2517 = vmatpush.msra.mxu0 %v1307
        %2518 = vmatpush.msra.mxu0 %v1299
        %2519 = vmatpush.msra.mxu0 %v1291
        %2520 = vmatpush.msra.mxu0 %v1283
        %2521 = vmatpush.msra.mxu0 %v1275
        %2522 = vmatpush.msra.mxu0 %v1267
        %2523 = vmatmul.f32.gmra.mxu0 %v364
        %v2524 = vpop.f32.mrf.mxu0
        %v2525 = vadd.f32 %v2505, %v2524
        %2526 = vdwg.mxu0
        %2527 = vmatpush.msra.mxu0 %v492
        %2528 = vmatpush.msra.mxu0 %v484
        %2529 = vmatpush.msra.mxu0 %v476
        %2530 = vmatpush.msra.mxu0 %v468
        %2531 = vmatpush.msra.mxu0 %v460
        %2532 = vmatpush.msra.mxu0 %v452
        %2533 = vmatpush.msra.mxu0 %v444
        %2534 = vmatpush.msra.mxu0 %v436
        %2535 = vmatpush.msra.mxu0 %v428
        %2536 = vmatpush.msra.mxu0 %v420
        %2537 = vmatpush.msra.mxu0 %v412
        %2538 = vmatpush.msra.mxu0 %v404
        %2539 = vmatpush.msra.mxu0 %v396
        %2540 = vmatpush.msra.mxu0 %v388
        %2541 = vmatpush.msra.mxu0 %v380
        %2542 = vmatpush.msra.mxu0 %v372
        %2543 = vmatmul.f32.gmra.mxu0 %v357
        %v2544 = vpop.f32.mrf.mxu0
        %v2545 = vadd.f32 %v1398, %v2544
        %2546 = vdwg.mxu0
        %2547 = vmatpush.msra.mxu0 %v620
        %2548 = vmatpush.msra.mxu0 %v612
        %2549 = vmatpush.msra.mxu0 %v604
        %2550 = vmatpush.msra.mxu0 %v596
        %2551 = vmatpush.msra.mxu0 %v588
        %2552 = vmatpush.msra.mxu0 %v580
        %2553 = vmatpush.msra.mxu0 %v572
        %2554 = vmatpush.msra.mxu0 %v564
        %2555 = vmatpush.msra.mxu0 %v556
        %2556 = vmatpush.msra.mxu0 %v548
        %2557 = vmatpush.msra.mxu0 %v540
        %2558 = vmatpush.msra.mxu0 %v532
        %2559 = vmatpush.msra.mxu0 %v524
        %2560 = vmatpush.msra.mxu0 %v516
        %2561 = vmatpush.msra.mxu0 %v508
        %2562 = vmatpush.msra.mxu0 %v500
        %2563 = vmatmul.f32.gmra.mxu0 %v358
        %v2564 = vpop.f32.mrf.mxu0
        %v2565 = vadd.f32 %v2545, %v2564
        %2566 = vdwg.mxu0
        %2567 = vmatpush.msra.mxu0 %v748
        %2568 = vmatpush.msra.mxu0 %v740
        %2569 = vmatpush.msra.mxu0 %v732
        %2570 = vmatpush.msra.mxu0 %v724
        %2571 = vmatpush.msra.mxu0 %v716
        %2572 = vmatpush.msra.mxu0 %v708
        %2573 = vmatpush.msra.mxu0 %v700
        %2574 = vmatpush.msra.mxu0 %v692
        %2575 = vmatpush.msra.mxu0 %v684
        %2576 = vmatpush.msra.mxu0 %v676
        %2577 = vmatpush.msra.mxu0 %v668
        %2578 = vmatpush.msra.mxu0 %v660
        %2579 = vmatpush.msra.mxu0 %v652
        %2580 = vmatpush.msra.mxu0 %v644
        %2581 = vmatpush.msra.mxu0 %v636
        %2582 = vmatpush.msra.mxu0 %v628
        %2583 = vmatmul.f32.gmra.mxu0 %v359
        %v2584 = vpop.f32.mrf.mxu0
        %v2585 = vadd.f32 %v2565, %v2584
        %2586 = vdwg.mxu0
        %2587 = vmatpush.msra.mxu0 %v876
        %2588 = vmatpush.msra.mxu0 %v868
        %2589 = vmatpush.msra.mxu0 %v860
        %2590 = vmatpush.msra.mxu0 %v852
        %2591 = vmatpush.msra.mxu0 %v844
        %2592 = vmatpush.msra.mxu0 %v836
        %2593 = vmatpush.msra.mxu0 %v828
        %2594 = vmatpush.msra.mxu0 %v820
        %2595 = vmatpush.msra.mxu0 %v812
        %2596 = vmatpush.msra.mxu0 %v804
        %2597 = vmatpush.msra.mxu0 %v796
        %2598 = vmatpush.msra.mxu0 %v788
        %2599 = vmatpush.msra.mxu0 %v780
        %2600 = vmatpush.msra.mxu0 %v772
        %2601 = vmatpush.msra.mxu0 %v764
        %2602 = vmatpush.msra.mxu0 %v756
        %2603 = vmatmul.f32.gmra.mxu0 %v360
        %v2604 = vpop.f32.mrf.mxu0
        %v2605 = vadd.f32 %v2585, %v2604
        %2606 = vdwg.mxu0
        %2607 = vmatpush.msra.mxu0 %v1004
        %2608 = vmatpush.msra.mxu0 %v996
        %2609 = vmatpush.msra.mxu0 %v988
        %2610 = vmatpush.msra.mxu0 %v980
        %2611 = vmatpush.msra.mxu0 %v972
        %2612 = vmatpush.msra.mxu0 %v964
        %2613 = vmatpush.msra.mxu0 %v956
        %2614 = vmatpush.msra.mxu0 %v948
        %2615 = vmatpush.msra.mxu0 %v940
        %2616 = vmatpush.msra.mxu0 %v932
        %2617 = vmatpush.msra.mxu0 %v924
        %2618 = vmatpush.msra.mxu0 %v916
        %2619 = vmatpush.msra.mxu0 %v908
        %2620 = vmatpush.msra.mxu0 %v900
        %2621 = vmatpush.msra.mxu0 %v892
        %2622 = vmatpush.msra.mxu0 %v884
        %2623 = vmatmul.f32.gmra.mxu0 %v361
        %v2624 = vpop.f32.mrf.mxu0
        %v2625 = vadd.f32 %v2605, %v2624
        %2626 = vdwg.mxu0
        %2627 = vmatpush.msra.mxu0 %v1132
        %2628 = vmatpush.msra.mxu0 %v1124
        %2629 = vmatpush.msra.mxu0 %v1116
        %2630 = vmatpush.msra.mxu0 %v1108
        %2631 = vmatpush.msra.mxu0 %v1100
        %2632 = vmatpush.msra.mxu0 %v1092
        %2633 = vmatpush.msra.mxu0 %v1084
        %2634 = vmatpush.msra.mxu0 %v1076
        %2635 = vmatpush.msra.mxu0 %v1068
        %2636 = vmatpush.msra.mxu0 %v1060
        %2637 = vmatpush.msra.mxu0 %v1052
        %2638 = vmatpush.msra.mxu0 %v1044
        %2639 = vmatpush.msra.mxu0 %v1036
        %2640 = vmatpush.msra.mxu0 %v1028
        %2641 = vmatpush.msra.mxu0 %v1020
        %2642 = vmatpush.msra.mxu0 %v1012
        %2643 = vmatmul.f32.gmra.mxu0 %v362
        %v2644 = vpop.f32.mrf.mxu0
        %v2645 = vadd.f32 %v2625, %v2644
        %2646 = vdwg.mxu0
        %2647 = vmatpush.msra.mxu0 %v1260
        %2648 = vmatpush.msra.mxu0 %v1252
        %2649 = vmatpush.msra.mxu0 %v1244
        %2650 = vmatpush.msra.mxu0 %v1236
        %2651 = vmatpush.msra.mxu0 %v1228
        %2652 = vmatpush.msra.mxu0 %v1220
        %2653 = vmatpush.msra.mxu0 %v1212
        %2654 = vmatpush.msra.mxu0 %v1204
        %2655 = vmatpush.msra.mxu0 %v1196
        %2656 = vmatpush.msra.mxu0 %v1188
        %2657 = vmatpush.msra.mxu0 %v1180
        %2658 = vmatpush.msra.mxu0 %v1172
        %2659 = vmatpush.msra.mxu0 %v1164
        %2660 = vmatpush.msra.mxu0 %v1156
        %2661 = vmatpush.msra.mxu0 %v1148
        %2662 = vmatpush.msra.mxu0 %v1140
        %2663 = vmatmul.f32.gmra.mxu0 %v363
        %v2664 = vpop.f32.mrf.mxu0
        %v2665 = vadd.f32 %v2645, %v2664
        %2666 = vdwg.mxu0
        %2667 = vmatpush.msra.mxu0 %v1388
        %2668 = vmatpush.msra.mxu0 %v1380
        %2669 = vmatpush.msra.mxu0 %v1372
        %2670 = vmatpush.msra.mxu0 %v1364
        %2671 = vmatpush.msra.mxu0 %v1356
        %2672 = vmatpush.msra.mxu0 %v1348
        %2673 = vmatpush.msra.mxu0 %v1340
        %2674 = vmatpush.msra.mxu0 %v1332
        %2675 = vmatpush.msra.mxu0 %v1324
        %2676 = vmatpush.msra.mxu0 %v1316
        %2677 = vmatpush.msra.mxu0 %v1308
        %2678 = vmatpush.msra.mxu0 %v1300
        %2679 = vmatpush.msra.mxu0 %v1292
        %2680 = vmatpush.msra.mxu0 %v1284
        %2681 = vmatpush.msra.mxu0 %v1276
        %2682 = vmatpush.msra.mxu0 %v1268
        %2683 = vmatmul.f32.gmra.mxu0 %v364
        %v2684 = vpop.f32.mrf.mxu0
        %v2685 = vadd.f32 %v2665, %v2684
        %2686 = vdwg.mxu0
        %vm2687 = vcmp.gt.f32.partialorder %v1565, 0.0
        %vm2688 = vcmp.gt.f32.partialorder %v1725, 0.0
        %vm2689 = vcmp.gt.f32.partialorder %v1885, 0.0
        %vm2690 = vcmp.gt.f32.partialorder %v2045, 0.0
        %vm2691 = vcmp.gt.f32.partialorder %v2205, 0.0
        %vm2692 = vcmp.gt.f32.partialorder %v2365, 0.0
        %vm2693 = vcmp.gt.f32.partialorder %v2525, 0.0
        %vm2694 = vcmp.gt.f32.partialorder %v2685, 0.0
        %v2695 = vmin.f32 %v1565, 0.0
        %v2696 = vmin.f32 %v1725, 0.0
        %v2697 = vmin.f32 %v1885, 0.0
        %v2698 = vmin.f32 %v2045, 0.0
        %v2699 = vmin.f32 %v2205, 0.0
        %v2700 = vmin.f32 %v2365, 0.0
        %v2701 = vmin.f32 %v2525, 0.0
        %v2702 = vmin.f32 %v2685, 0.0
        %v2703 = vmul.f32 %v2695, 1.442695
        %v2704 = vpow.pop %v2703
        %v2705 = vmul.f32 %v2696, 1.442695
        %v2706 = vpow.pop %v2705
        %v2707 = vmul.f32 %v2697, 1.442695
        %v2708 = vpow.pop %v2707
        %v2709 = vmul.f32 %v2698, 1.442695
        %v2710 = vpow.pop %v2709
        %v2711 = vmul.f32 %v2699, 1.442695
        %v2712 = vpow.pop %v2711
        %v2713 = vmul.f32 %v2700, 1.442695
        %v2714 = vpow.pop %v2713
        %v2715 = vmul.f32 %v2701, 1.442695
        %v2716 = vpow.pop %v2715
        %v2717 = vmul.f32 %v2702, 1.442695
        %v2718 = vpow.pop %v2717
        %v2719 = vsub.f32 %v2704, 1.0
        %v2720 = vsub.f32 %v2706, 1.0
        %v2721 = vsub.f32 %v2708, 1.0
        %v2722 = vsub.f32 %v2710, 1.0
        %v2723 = vsub.f32 %v2712, 1.0
        %v2724 = vsub.f32 %v2714, 1.0
        %v2725 = vsub.f32 %v2716, 1.0
        %v2726 = vsub.f32 %v2718, 1.0
        %v2727 = vsel %vm2687, %v1565, %v2719
        %v2728 = vsel %vm2688, %v1725, %v2720
        %v2729 = vsel %vm2689, %v1885, %v2721
        %v2730 = vsel %vm2690, %v2045, %v2722
        %v2731 = vsel %vm2691, %v2205, %v2723
        %v2732 = vsel %vm2692, %v2365, %v2724
        %v2733 = vsel %vm2693, %v2525, %v2725
        %v2734 = vsel %vm2694, %v2685, %v2726
        %v2735 = vld [vmem:[%s3] sm:$0xff]
        %v2736 = vld [vmem:[%s3 + $0x8] sm:$0xff]
        %v2737 = vld [vmem:[%s3 + $0x10] sm:$0xff]
        %v2738 = vld [vmem:[%s3 + $0x18] sm:$0xff]
        %v2739 = vld [vmem:[%s3 + $0x20] sm:$0xff]
        %v2740 = vld [vmem:[%s3 + $0x28] sm:$0xff]
        %v2741 = vld [vmem:[%s3 + $0x30] sm:$0xff]
        %v2742 = vld [vmem:[%s3 + $0x38] sm:$0xff]
        %v2743 = vld [vmem:[%s3 + $0x40] sm:$0xff]
        %v2744 = vld [vmem:[%s3 + $0x48] sm:$0xff]
        %v2745 = vld [vmem:[%s3 + $0x50] sm:$0xff]
        %v2746 = vld [vmem:[%s3 + $0x58] sm:$0xff]
        %v2747 = vld [vmem:[%s3 + $0x60] sm:$0xff]
        %v2748 = vld [vmem:[%s3 + $0x68] sm:$0xff]
        %v2749 = vld [vmem:[%s3 + $0x70] sm:$0xff]
        %v2750 = vld [vmem:[%s3 + $0x78] sm:$0xff]
        %v2751 = vld [vmem:[%s3 + $0x80] sm:$0xff]
        %v2752 = vld [vmem:[%s3 + $0x88] sm:$0xff]
        %v2753 = vld [vmem:[%s3 + $0x90] sm:$0xff]
        %v2754 = vld [vmem:[%s3 + $0x98] sm:$0xff]
        %v2755 = vld [vmem:[%s3 + $0xa0] sm:$0xff]
        %v2756 = vld [vmem:[%s3 + $0xa8] sm:$0xff]
        %v2757 = vld [vmem:[%s3 + $0xb0] sm:$0xff]
        %v2758 = vld [vmem:[%s3 + $0xb8] sm:$0xff]
        %v2759 = vld [vmem:[%s3 + $0xc0] sm:$0xff]
        %v2760 = vld [vmem:[%s3 + $0xc8] sm:$0xff]
        %v2761 = vld [vmem:[%s3 + $0xd0] sm:$0xff]
        %v2762 = vld [vmem:[%s3 + $0xd8] sm:$0xff]
        %v2763 = vld [vmem:[%s3 + $0xe0] sm:$0xff]
        %v2764 = vld [vmem:[%s3 + $0xe8] sm:$0xff]
        %v2765 = vld [vmem:[%s3 + $0xf0] sm:$0xff]
        %v2766 = vld [vmem:[%s3 + $0xf8] sm:$0xff]
        %v2767 = vld [vmem:[%s3 + $0x100] sm:$0xff]
        %v2768 = vld [vmem:[%s3 + $0x108] sm:$0xff]
        %v2769 = vld [vmem:[%s3 + $0x110] sm:$0xff]
        %v2770 = vld [vmem:[%s3 + $0x118] sm:$0xff]
        %v2771 = vld [vmem:[%s3 + $0x120] sm:$0xff]
        %v2772 = vld [vmem:[%s3 + $0x128] sm:$0xff]
        %v2773 = vld [vmem:[%s3 + $0x130] sm:$0xff]
        %v2774 = vld [vmem:[%s3 + $0x138] sm:$0xff]
        %v2775 = vld [vmem:[%s3 + $0x140] sm:$0xff]
        %v2776 = vld [vmem:[%s3 + $0x148] sm:$0xff]
        %v2777 = vld [vmem:[%s3 + $0x150] sm:$0xff]
        %v2778 = vld [vmem:[%s3 + $0x158] sm:$0xff]
        %v2779 = vld [vmem:[%s3 + $0x160] sm:$0xff]
        %v2780 = vld [vmem:[%s3 + $0x168] sm:$0xff]
        %v2781 = vld [vmem:[%s3 + $0x170] sm:$0xff]
        %v2782 = vld [vmem:[%s3 + $0x178] sm:$0xff]
        %v2783 = vld [vmem:[%s3 + $0x180] sm:$0xff]
        %v2784 = vld [vmem:[%s3 + $0x188] sm:$0xff]
        %v2785 = vld [vmem:[%s3 + $0x190] sm:$0xff]
        %v2786 = vld [vmem:[%s3 + $0x198] sm:$0xff]
        %v2787 = vld [vmem:[%s3 + $0x1a0] sm:$0xff]
        %v2788 = vld [vmem:[%s3 + $0x1a8] sm:$0xff]
        %v2789 = vld [vmem:[%s3 + $0x1b0] sm:$0xff]
        %v2790 = vld [vmem:[%s3 + $0x1b8] sm:$0xff]
        %v2791 = vld [vmem:[%s3 + $0x1c0] sm:$0xff]
        %v2792 = vld [vmem:[%s3 + $0x1c8] sm:$0xff]
        %v2793 = vld [vmem:[%s3 + $0x1d0] sm:$0xff]
        %v2794 = vld [vmem:[%s3 + $0x1d8] sm:$0xff]
        %v2795 = vld [vmem:[%s3 + $0x1e0] sm:$0xff]
        %v2796 = vld [vmem:[%s3 + $0x1e8] sm:$0xff]
        %v2797 = vld [vmem:[%s3 + $0x1f0] sm:$0xff]
        %v2798 = vld [vmem:[%s3 + $0x1f8] sm:$0xff]
        %v2799 = vld [vmem:[%s3 + $0x200] sm:$0xff]
        %v2800 = vld [vmem:[%s3 + $0x208] sm:$0xff]
        %v2801 = vld [vmem:[%s3 + $0x210] sm:$0xff]
        %v2802 = vld [vmem:[%s3 + $0x218] sm:$0xff]
        %v2803 = vld [vmem:[%s3 + $0x220] sm:$0xff]
        %v2804 = vld [vmem:[%s3 + $0x228] sm:$0xff]
        %v2805 = vld [vmem:[%s3 + $0x230] sm:$0xff]
        %v2806 = vld [vmem:[%s3 + $0x238] sm:$0xff]
        %v2807 = vld [vmem:[%s3 + $0x240] sm:$0xff]
        %v2808 = vld [vmem:[%s3 + $0x248] sm:$0xff]
        %v2809 = vld [vmem:[%s3 + $0x250] sm:$0xff]
        %v2810 = vld [vmem:[%s3 + $0x258] sm:$0xff]
        %v2811 = vld [vmem:[%s3 + $0x260] sm:$0xff]
        %v2812 = vld [vmem:[%s3 + $0x268] sm:$0xff]
        %v2813 = vld [vmem:[%s3 + $0x270] sm:$0xff]
        %v2814 = vld [vmem:[%s3 + $0x278] sm:$0xff]
        %v2815 = vld [vmem:[%s3 + $0x280] sm:$0xff]
        %v2816 = vld [vmem:[%s3 + $0x288] sm:$0xff]
        %v2817 = vld [vmem:[%s3 + $0x290] sm:$0xff]
        %v2818 = vld [vmem:[%s3 + $0x298] sm:$0xff]
        %v2819 = vld [vmem:[%s3 + $0x2a0] sm:$0xff]
        %v2820 = vld [vmem:[%s3 + $0x2a8] sm:$0xff]
        %v2821 = vld [vmem:[%s3 + $0x2b0] sm:$0xff]
        %v2822 = vld [vmem:[%s3 + $0x2b8] sm:$0xff]
        %v2823 = vld [vmem:[%s3 + $0x2c0] sm:$0xff]
        %v2824 = vld [vmem:[%s3 + $0x2c8] sm:$0xff]
        %v2825 = vld [vmem:[%s3 + $0x2d0] sm:$0xff]
        %v2826 = vld [vmem:[%s3 + $0x2d8] sm:$0xff]
        %v2827 = vld [vmem:[%s3 + $0x2e0] sm:$0xff]
        %v2828 = vld [vmem:[%s3 + $0x2e8] sm:$0xff]
        %v2829 = vld [vmem:[%s3 + $0x2f0] sm:$0xff]
        %v2830 = vld [vmem:[%s3 + $0x2f8] sm:$0xff]
        %v2831 = vld [vmem:[%s3 + $0x300] sm:$0xff]
        %v2832 = vld [vmem:[%s3 + $0x308] sm:$0xff]
        %v2833 = vld [vmem:[%s3 + $0x310] sm:$0xff]
        %v2834 = vld [vmem:[%s3 + $0x318] sm:$0xff]
        %v2835 = vld [vmem:[%s3 + $0x320] sm:$0xff]
        %v2836 = vld [vmem:[%s3 + $0x328] sm:$0xff]
        %v2837 = vld [vmem:[%s3 + $0x330] sm:$0xff]
        %v2838 = vld [vmem:[%s3 + $0x338] sm:$0xff]
        %v2839 = vld [vmem:[%s3 + $0x340] sm:$0xff]
        %v2840 = vld [vmem:[%s3 + $0x348] sm:$0xff]
        %v2841 = vld [vmem:[%s3 + $0x350] sm:$0xff]
        %v2842 = vld [vmem:[%s3 + $0x358] sm:$0xff]
        %v2843 = vld [vmem:[%s3 + $0x360] sm:$0xff]
        %v2844 = vld [vmem:[%s3 + $0x368] sm:$0xff]
        %v2845 = vld [vmem:[%s3 + $0x370] sm:$0xff]
        %v2846 = vld [vmem:[%s3 + $0x378] sm:$0xff]
        %v2847 = vld [vmem:[%s3 + $0x380] sm:$0xff]
        %v2848 = vld [vmem:[%s3 + $0x388] sm:$0xff]
        %v2849 = vld [vmem:[%s3 + $0x390] sm:$0xff]
        %v2850 = vld [vmem:[%s3 + $0x398] sm:$0xff]
        %v2851 = vld [vmem:[%s3 + $0x3a0] sm:$0xff]
        %v2852 = vld [vmem:[%s3 + $0x3a8] sm:$0xff]
        %v2853 = vld [vmem:[%s3 + $0x3b0] sm:$0xff]
        %v2854 = vld [vmem:[%s3 + $0x3b8] sm:$0xff]
        %v2855 = vld [vmem:[%s3 + $0x3c0] sm:$0xff]
        %v2856 = vld [vmem:[%s3 + $0x3c8] sm:$0xff]
        %v2857 = vld [vmem:[%s3 + $0x3d0] sm:$0xff]
        %v2858 = vld [vmem:[%s3 + $0x3d8] sm:$0xff]
        %v2859 = vld [vmem:[%s3 + $0x3e0] sm:$0xff]
        %v2860 = vld [vmem:[%s3 + $0x3e8] sm:$0xff]
        %v2861 = vld [vmem:[%s3 + $0x3f0] sm:$0xff]
        %v2862 = vld [vmem:[%s3 + $0x3f8] sm:$0xff]
        %v2863 = vld [vmem:[%s3 + $0x400] sm:$0xff]
        %v2864 = vld [vmem:[%s3 + $0x408] sm:$0xff]
        %v2865 = vld [vmem:[%s3 + $0x410] sm:$0xff]
        %v2866 = vld [vmem:[%s3 + $0x418] sm:$0xff]
        %v2867 = vld [vmem:[%s3 + $0x420] sm:$0xff]
        %v2868 = vld [vmem:[%s3 + $0x428] sm:$0xff]
        %v2869 = vld [vmem:[%s3 + $0x430] sm:$0xff]
        %v2870 = vld [vmem:[%s3 + $0x438] sm:$0xff]
        %v2871 = vld [vmem:[%s3 + $0x440] sm:$0xff]
        %v2872 = vld [vmem:[%s3 + $0x448] sm:$0xff]
        %v2873 = vld [vmem:[%s3 + $0x450] sm:$0xff]
        %v2874 = vld [vmem:[%s3 + $0x458] sm:$0xff]
        %v2875 = vld [vmem:[%s3 + $0x460] sm:$0xff]
        %v2876 = vld [vmem:[%s3 + $0x468] sm:$0xff]
        %v2877 = vld [vmem:[%s3 + $0x470] sm:$0xff]
        %v2878 = vld [vmem:[%s3 + $0x478] sm:$0xff]
        %v2879 = vld [vmem:[%s3 + $0x480] sm:$0xff]
        %v2880 = vld [vmem:[%s3 + $0x488] sm:$0xff]
        %v2881 = vld [vmem:[%s3 + $0x490] sm:$0xff]
        %v2882 = vld [vmem:[%s3 + $0x498] sm:$0xff]
        %v2883 = vld [vmem:[%s3 + $0x4a0] sm:$0xff]
        %v2884 = vld [vmem:[%s3 + $0x4a8] sm:$0xff]
        %v2885 = vld [vmem:[%s3 + $0x4b0] sm:$0xff]
        %v2886 = vld [vmem:[%s3 + $0x4b8] sm:$0xff]
        %v2887 = vld [vmem:[%s3 + $0x4c0] sm:$0xff]
        %v2888 = vld [vmem:[%s3 + $0x4c8] sm:$0xff]
        %v2889 = vld [vmem:[%s3 + $0x4d0] sm:$0xff]
        %v2890 = vld [vmem:[%s3 + $0x4d8] sm:$0xff]
        %v2891 = vld [vmem:[%s3 + $0x4e0] sm:$0xff]
        %v2892 = vld [vmem:[%s3 + $0x4e8] sm:$0xff]
        %v2893 = vld [vmem:[%s3 + $0x4f0] sm:$0xff]
        %v2894 = vld [vmem:[%s3 + $0x4f8] sm:$0xff]
        %v2895 = vld [vmem:[%s3 + $0x500] sm:$0xff]
        %v2896 = vld [vmem:[%s3 + $0x508] sm:$0xff]
        %v2897 = vld [vmem:[%s3 + $0x510] sm:$0xff]
        %v2898 = vld [vmem:[%s3 + $0x518] sm:$0xff]
        %v2899 = vld [vmem:[%s3 + $0x520] sm:$0xff]
        %v2900 = vld [vmem:[%s3 + $0x528] sm:$0xff]
        %v2901 = vld [vmem:[%s3 + $0x530] sm:$0xff]
        %v2902 = vld [vmem:[%s3 + $0x538] sm:$0xff]
        %v2903 = vld [vmem:[%s3 + $0x540] sm:$0xff]
        %v2904 = vld [vmem:[%s3 + $0x548] sm:$0xff]
        %v2905 = vld [vmem:[%s3 + $0x550] sm:$0xff]
        %v2906 = vld [vmem:[%s3 + $0x558] sm:$0xff]
        %v2907 = vld [vmem:[%s3 + $0x560] sm:$0xff]
        %v2908 = vld [vmem:[%s3 + $0x568] sm:$0xff]
        %v2909 = vld [vmem:[%s3 + $0x570] sm:$0xff]
        %v2910 = vld [vmem:[%s3 + $0x578] sm:$0xff]
        %v2911 = vld [vmem:[%s3 + $0x580] sm:$0xff]
        %v2912 = vld [vmem:[%s3 + $0x588] sm:$0xff]
        %v2913 = vld [vmem:[%s3 + $0x590] sm:$0xff]
        %v2914 = vld [vmem:[%s3 + $0x598] sm:$0xff]
        %v2915 = vld [vmem:[%s3 + $0x5a0] sm:$0xff]
        %v2916 = vld [vmem:[%s3 + $0x5a8] sm:$0xff]
        %v2917 = vld [vmem:[%s3 + $0x5b0] sm:$0xff]
        %v2918 = vld [vmem:[%s3 + $0x5b8] sm:$0xff]
        %v2919 = vld [vmem:[%s3 + $0x5c0] sm:$0xff]
        %v2920 = vld [vmem:[%s3 + $0x5c8] sm:$0xff]
        %v2921 = vld [vmem:[%s3 + $0x5d0] sm:$0xff]
        %v2922 = vld [vmem:[%s3 + $0x5d8] sm:$0xff]
        %v2923 = vld [vmem:[%s3 + $0x5e0] sm:$0xff]
        %v2924 = vld [vmem:[%s3 + $0x5e8] sm:$0xff]
        %v2925 = vld [vmem:[%s3 + $0x5f0] sm:$0xff]
        %v2926 = vld [vmem:[%s3 + $0x5f8] sm:$0xff]
        %v2927 = vld [vmem:[%s3 + $0x600] sm:$0xff]
        %v2928 = vld [vmem:[%s3 + $0x608] sm:$0xff]
        %v2929 = vld [vmem:[%s3 + $0x610] sm:$0xff]
        %v2930 = vld [vmem:[%s3 + $0x618] sm:$0xff]
        %v2931 = vld [vmem:[%s3 + $0x620] sm:$0xff]
        %v2932 = vld [vmem:[%s3 + $0x628] sm:$0xff]
        %v2933 = vld [vmem:[%s3 + $0x630] sm:$0xff]
        %v2934 = vld [vmem:[%s3 + $0x638] sm:$0xff]
        %v2935 = vld [vmem:[%s3 + $0x640] sm:$0xff]
        %v2936 = vld [vmem:[%s3 + $0x648] sm:$0xff]
        %v2937 = vld [vmem:[%s3 + $0x650] sm:$0xff]
        %v2938 = vld [vmem:[%s3 + $0x658] sm:$0xff]
        %v2939 = vld [vmem:[%s3 + $0x660] sm:$0xff]
        %v2940 = vld [vmem:[%s3 + $0x668] sm:$0xff]
        %v2941 = vld [vmem:[%s3 + $0x670] sm:$0xff]
        %v2942 = vld [vmem:[%s3 + $0x678] sm:$0xff]
        %v2943 = vld [vmem:[%s3 + $0x680] sm:$0xff]
        %v2944 = vld [vmem:[%s3 + $0x688] sm:$0xff]
        %v2945 = vld [vmem:[%s3 + $0x690] sm:$0xff]
        %v2946 = vld [vmem:[%s3 + $0x698] sm:$0xff]
        %v2947 = vld [vmem:[%s3 + $0x6a0] sm:$0xff]
        %v2948 = vld [vmem:[%s3 + $0x6a8] sm:$0xff]
        %v2949 = vld [vmem:[%s3 + $0x6b0] sm:$0xff]
        %v2950 = vld [vmem:[%s3 + $0x6b8] sm:$0xff]
        %v2951 = vld [vmem:[%s3 + $0x6c0] sm:$0xff]
        %v2952 = vld [vmem:[%s3 + $0x6c8] sm:$0xff]
        %v2953 = vld [vmem:[%s3 + $0x6d0] sm:$0xff]
        %v2954 = vld [vmem:[%s3 + $0x6d8] sm:$0xff]
        %v2955 = vld [vmem:[%s3 + $0x6e0] sm:$0xff]
        %v2956 = vld [vmem:[%s3 + $0x6e8] sm:$0xff]
        %v2957 = vld [vmem:[%s3 + $0x6f0] sm:$0xff]
        %v2958 = vld [vmem:[%s3 + $0x6f8] sm:$0xff]
        %v2959 = vld [vmem:[%s3 + $0x700] sm:$0xff]
        %v2960 = vld [vmem:[%s3 + $0x708] sm:$0xff]
        %v2961 = vld [vmem:[%s3 + $0x710] sm:$0xff]
        %v2962 = vld [vmem:[%s3 + $0x718] sm:$0xff]
        %v2963 = vld [vmem:[%s3 + $0x720] sm:$0xff]
        %v2964 = vld [vmem:[%s3 + $0x728] sm:$0xff]
        %v2965 = vld [vmem:[%s3 + $0x730] sm:$0xff]
        %v2966 = vld [vmem:[%s3 + $0x738] sm:$0xff]
        %v2967 = vld [vmem:[%s3 + $0x740] sm:$0xff]
        %v2968 = vld [vmem:[%s3 + $0x748] sm:$0xff]
        %v2969 = vld [vmem:[%s3 + $0x750] sm:$0xff]
        %v2970 = vld [vmem:[%s3 + $0x758] sm:$0xff]
        %v2971 = vld [vmem:[%s3 + $0x760] sm:$0xff]
        %v2972 = vld [vmem:[%s3 + $0x768] sm:$0xff]
        %v2973 = vld [vmem:[%s3 + $0x770] sm:$0xff]
        %v2974 = vld [vmem:[%s3 + $0x778] sm:$0xff]
        %v2975 = vld [vmem:[%s3 + $0x780] sm:$0xff]
        %v2976 = vld [vmem:[%s3 + $0x788] sm:$0xff]
        %v2977 = vld [vmem:[%s3 + $0x790] sm:$0xff]
        %v2978 = vld [vmem:[%s3 + $0x798] sm:$0xff]
        %v2979 = vld [vmem:[%s3 + $0x7a0] sm:$0xff]
        %v2980 = vld [vmem:[%s3 + $0x7a8] sm:$0xff]
        %v2981 = vld [vmem:[%s3 + $0x7b0] sm:$0xff]
        %v2982 = vld [vmem:[%s3 + $0x7b8] sm:$0xff]
        %v2983 = vld [vmem:[%s3 + $0x7c0] sm:$0xff]
        %v2984 = vld [vmem:[%s3 + $0x7c8] sm:$0xff]
        %v2985 = vld [vmem:[%s3 + $0x7d0] sm:$0xff]
        %v2986 = vld [vmem:[%s3 + $0x7d8] sm:$0xff]
        %v2987 = vld [vmem:[%s3 + $0x7e0] sm:$0xff]
        %v2988 = vld [vmem:[%s3 + $0x7e8] sm:$0xff]
        %v2989 = vld [vmem:[%s3 + $0x7f0] sm:$0xff]
        %v2990 = vld [vmem:[%s3 + $0x7f8] sm:$0xff]
        %v2991 = vld [vmem:[#allocation7] sm:$0x3]
        %v2993 = vperm.slane %v2991, 0
        %v2994 = vperm.slane %v2991, 1
        %2997 = vmatpush.msra.mxu0 %v2765
        %2998 = vmatpush.msra.mxu0 %v2763
        %2999 = vmatpush.msra.mxu0 %v2761
        %3000 = vmatpush.msra.mxu0 %v2759
        %3001 = vmatpush.msra.mxu0 %v2757
        %3002 = vmatpush.msra.mxu0 %v2755
        %3003 = vmatpush.msra.mxu0 %v2753
        %3004 = vmatpush.msra.mxu0 %v2751
        %3005 = vmatpush.msra.mxu0 %v2749
        %3006 = vmatpush.msra.mxu0 %v2747
        %3007 = vmatpush.msra.mxu0 %v2745
        %3008 = vmatpush.msra.mxu0 %v2743
        %3009 = vmatpush.msra.mxu0 %v2741
        %3010 = vmatpush.msra.mxu0 %v2739
        %3011 = vmatpush.msra.mxu0 %v2737
        %3012 = vmatpush.msra.mxu0 %v2735
        %3013 = vmatmul.f32.gmra.mxu0 %v2727
        %v3014 = vpop.f32.mrf.mxu0
        %v3015 = vadd.f32 %v2993, %v3014
        %3016 = vdwg.mxu0
        %3017 = vmatpush.msra.mxu0 %v2797
        %3018 = vmatpush.msra.mxu0 %v2795
        %3019 = vmatpush.msra.mxu0 %v2793
        %3020 = vmatpush.msra.mxu0 %v2791
        %3021 = vmatpush.msra.mxu0 %v2789
        %3022 = vmatpush.msra.mxu0 %v2787
        %3023 = vmatpush.msra.mxu0 %v2785
        %3024 = vmatpush.msra.mxu0 %v2783
        %3025 = vmatpush.msra.mxu0 %v2781
        %3026 = vmatpush.msra.mxu0 %v2779
        %3027 = vmatpush.msra.mxu0 %v2777
        %3028 = vmatpush.msra.mxu0 %v2775
        %3029 = vmatpush.msra.mxu0 %v2773
        %3030 = vmatpush.msra.mxu0 %v2771
        %3031 = vmatpush.msra.mxu0 %v2769
        %3032 = vmatpush.msra.mxu0 %v2767
        %3033 = vmatmul.f32.gmra.mxu0 %v2728
        %v3034 = vpop.f32.mrf.mxu0
        %v3035 = vadd.f32 %v3015, %v3034
        %3036 = vdwg.mxu0
        %3037 = vmatpush.msra.mxu0 %v2829
        %3038 = vmatpush.msra.mxu0 %v2827
        %3039 = vmatpush.msra.mxu0 %v2825
        %3040 = vmatpush.msra.mxu0 %v2823
        %3041 = vmatpush.msra.mxu0 %v2821
        %3042 = vmatpush.msra.mxu0 %v2819
        %3043 = vmatpush.msra.mxu0 %v2817
        %3044 = vmatpush.msra.mxu0 %v2815
        %3045 = vmatpush.msra.mxu0 %v2813
        %3046 = vmatpush.msra.mxu0 %v2811
        %3047 = vmatpush.msra.mxu0 %v2809
        %3048 = vmatpush.msra.mxu0 %v2807
        %3049 = vmatpush.msra.mxu0 %v2805
        %3050 = vmatpush.msra.mxu0 %v2803
        %3051 = vmatpush.msra.mxu0 %v2801
        %3052 = vmatpush.msra.mxu0 %v2799
        %3053 = vmatmul.f32.gmra.mxu0 %v2729
        %v3054 = vpop.f32.mrf.mxu0
        %v3055 = vadd.f32 %v3035, %v3054
        %3056 = vdwg.mxu0
        %3057 = vmatpush.msra.mxu0 %v2861
        %3058 = vmatpush.msra.mxu0 %v2859
        %3059 = vmatpush.msra.mxu0 %v2857
        %3060 = vmatpush.msra.mxu0 %v2855
        %3061 = vmatpush.msra.mxu0 %v2853
        %3062 = vmatpush.msra.mxu0 %v2851
        %3063 = vmatpush.msra.mxu0 %v2849
        %3064 = vmatpush.msra.mxu0 %v2847
        %3065 = vmatpush.msra.mxu0 %v2845
        %3066 = vmatpush.msra.mxu0 %v2843
        %3067 = vmatpush.msra.mxu0 %v2841
        %3068 = vmatpush.msra.mxu0 %v2839
        %3069 = vmatpush.msra.mxu0 %v2837
        %3070 = vmatpush.msra.mxu0 %v2835
        %3071 = vmatpush.msra.mxu0 %v2833
        %3072 = vmatpush.msra.mxu0 %v2831
        %3073 = vmatmul.f32.gmra.mxu0 %v2730
        %v3074 = vpop.f32.mrf.mxu0
        %v3075 = vadd.f32 %v3055, %v3074
        %3076 = vdwg.mxu0
        %3077 = vmatpush.msra.mxu0 %v2893
        %3078 = vmatpush.msra.mxu0 %v2891
        %3079 = vmatpush.msra.mxu0 %v2889
        %3080 = vmatpush.msra.mxu0 %v2887
        %3081 = vmatpush.msra.mxu0 %v2885
        %3082 = vmatpush.msra.mxu0 %v2883
        %3083 = vmatpush.msra.mxu0 %v2881
        %3084 = vmatpush.msra.mxu0 %v2879
        %3085 = vmatpush.msra.mxu0 %v2877
        %3086 = vmatpush.msra.mxu0 %v2875
        %3087 = vmatpush.msra.mxu0 %v2873
        %3088 = vmatpush.msra.mxu0 %v2871
        %3089 = vmatpush.msra.mxu0 %v2869
        %3090 = vmatpush.msra.mxu0 %v2867
        %3091 = vmatpush.msra.mxu0 %v2865
        %3092 = vmatpush.msra.mxu0 %v2863
        %3093 = vmatmul.f32.gmra.mxu0 %v2731
        %v3094 = vpop.f32.mrf.mxu0
        %v3095 = vadd.f32 %v3075, %v3094
        %3096 = vdwg.mxu0
        %3097 = vmatpush.msra.mxu0 %v2925
        %3098 = vmatpush.msra.mxu0 %v2923
        %3099 = vmatpush.msra.mxu0 %v2921
        %3100 = vmatpush.msra.mxu0 %v2919
        %3101 = vmatpush.msra.mxu0 %v2917
        %3102 = vmatpush.msra.mxu0 %v2915
        %3103 = vmatpush.msra.mxu0 %v2913
        %3104 = vmatpush.msra.mxu0 %v2911
        %3105 = vmatpush.msra.mxu0 %v2909
        %3106 = vmatpush.msra.mxu0 %v2907
        %3107 = vmatpush.msra.mxu0 %v2905
        %3108 = vmatpush.msra.mxu0 %v2903
        %3109 = vmatpush.msra.mxu0 %v2901
        %3110 = vmatpush.msra.mxu0 %v2899
        %3111 = vmatpush.msra.mxu0 %v2897
        %3112 = vmatpush.msra.mxu0 %v2895
        %3113 = vmatmul.f32.gmra.mxu0 %v2732
        %v3114 = vpop.f32.mrf.mxu0
        %v3115 = vadd.f32 %v3095, %v3114
        %3116 = vdwg.mxu0
        %3117 = vmatpush.msra.mxu0 %v2957
        %3118 = vmatpush.msra.mxu0 %v2955
        %3119 = vmatpush.msra.mxu0 %v2953
        %3120 = vmatpush.msra.mxu0 %v2951
        %3121 = vmatpush.msra.mxu0 %v2949
        %3122 = vmatpush.msra.mxu0 %v2947
        %3123 = vmatpush.msra.mxu0 %v2945
        %3124 = vmatpush.msra.mxu0 %v2943
        %3125 = vmatpush.msra.mxu0 %v2941
        %3126 = vmatpush.msra.mxu0 %v2939
        %3127 = vmatpush.msra.mxu0 %v2937
        %3128 = vmatpush.msra.mxu0 %v2935
        %3129 = vmatpush.msra.mxu0 %v2933
        %3130 = vmatpush.msra.mxu0 %v2931
        %3131 = vmatpush.msra.mxu0 %v2929
        %3132 = vmatpush.msra.mxu0 %v2927
        %3133 = vmatmul.f32.gmra.mxu0 %v2733
        %v3134 = vpop.f32.mrf.mxu0
        %v3135 = vadd.f32 %v3115, %v3134
        %3136 = vdwg.mxu0
        %3137 = vmatpush.msra.mxu0 %v2989
        %3138 = vmatpush.msra.mxu0 %v2987
        %3139 = vmatpush.msra.mxu0 %v2985
        %3140 = vmatpush.msra.mxu0 %v2983
        %3141 = vmatpush.msra.mxu0 %v2981
        %3142 = vmatpush.msra.mxu0 %v2979
        %3143 = vmatpush.msra.mxu0 %v2977
        %3144 = vmatpush.msra.mxu0 %v2975
        %3145 = vmatpush.msra.mxu0 %v2973
        %3146 = vmatpush.msra.mxu0 %v2971
        %3147 = vmatpush.msra.mxu0 %v2969
        %3148 = vmatpush.msra.mxu0 %v2967
        %3149 = vmatpush.msra.mxu0 %v2965
        %3150 = vmatpush.msra.mxu0 %v2963
        %3151 = vmatpush.msra.mxu0 %v2961
        %3152 = vmatpush.msra.mxu0 %v2959
        %3153 = vmatmul.f32.gmra.mxu0 %v2734
        %v3154 = vpop.f32.mrf.mxu0
        %v3155 = vadd.f32 %v3135, %v3154
        %3156 = vdwg.mxu0
        %3157 = vmatpush.msra.mxu0 %v2766
        %3158 = vmatpush.msra.mxu0 %v2764
        %3159 = vmatpush.msra.mxu0 %v2762
        %3160 = vmatpush.msra.mxu0 %v2760
        %3161 = vmatpush.msra.mxu0 %v2758
        %3162 = vmatpush.msra.mxu0 %v2756
        %3163 = vmatpush.msra.mxu0 %v2754
        %3164 = vmatpush.msra.mxu0 %v2752
        %3165 = vmatpush.msra.mxu0 %v2750
        %3166 = vmatpush.msra.mxu0 %v2748
        %3167 = vmatpush.msra.mxu0 %v2746
        %3168 = vmatpush.msra.mxu0 %v2744
        %3169 = vmatpush.msra.mxu0 %v2742
        %3170 = vmatpush.msra.mxu0 %v2740
        %3171 = vmatpush.msra.mxu0 %v2738
        %3172 = vmatpush.msra.mxu0 %v2736
        %3173 = vmatmul.f32.gmra.mxu0 %v2727
        %v3174 = vpop.f32.mrf.mxu0
        %v3175 = vadd.f32 %v2994, %v3174
        %3176 = vdwg.mxu0
        %3177 = vmatpush.msra.mxu0 %v2798
        %3178 = vmatpush.msra.mxu0 %v2796
        %3179 = vmatpush.msra.mxu0 %v2794
        %3180 = vmatpush.msra.mxu0 %v2792
        %3181 = vmatpush.msra.mxu0 %v2790
        %3182 = vmatpush.msra.mxu0 %v2788
        %3183 = vmatpush.msra.mxu0 %v2786
        %3184 = vmatpush.msra.mxu0 %v2784
        %3185 = vmatpush.msra.mxu0 %v2782
        %3186 = vmatpush.msra.mxu0 %v2780
        %3187 = vmatpush.msra.mxu0 %v2778
        %3188 = vmatpush.msra.mxu0 %v2776
        %3189 = vmatpush.msra.mxu0 %v2774
        %3190 = vmatpush.msra.mxu0 %v2772
        %3191 = vmatpush.msra.mxu0 %v2770
        %3192 = vmatpush.msra.mxu0 %v2768
        %3193 = vmatmul.f32.gmra.mxu0 %v2728
        %v3194 = vpop.f32.mrf.mxu0
        %v3195 = vadd.f32 %v3175, %v3194
        %3196 = vdwg.mxu0
        %3197 = vmatpush.msra.mxu0 %v2830
        %3198 = vmatpush.msra.mxu0 %v2828
        %3199 = vmatpush.msra.mxu0 %v2826
        %3200 = vmatpush.msra.mxu0 %v2824
        %3201 = vmatpush.msra.mxu0 %v2822
        %3202 = vmatpush.msra.mxu0 %v2820
        %3203 = vmatpush.msra.mxu0 %v2818
        %3204 = vmatpush.msra.mxu0 %v2816
        %3205 = vmatpush.msra.mxu0 %v2814
        %3206 = vmatpush.msra.mxu0 %v2812
        %3207 = vmatpush.msra.mxu0 %v2810
        %3208 = vmatpush.msra.mxu0 %v2808
        %3209 = vmatpush.msra.mxu0 %v2806
        %3210 = vmatpush.msra.mxu0 %v2804
        %3211 = vmatpush.msra.mxu0 %v2802
        %3212 = vmatpush.msra.mxu0 %v2800
        %3213 = vmatmul.f32.gmra.mxu0 %v2729
        %v3214 = vpop.f32.mrf.mxu0
        %v3215 = vadd.f32 %v3195, %v3214
        %3216 = vdwg.mxu0
        %3217 = vmatpush.msra.mxu0 %v2862
        %3218 = vmatpush.msra.mxu0 %v2860
        %3219 = vmatpush.msra.mxu0 %v2858
        %3220 = vmatpush.msra.mxu0 %v2856
        %3221 = vmatpush.msra.mxu0 %v2854
        %3222 = vmatpush.msra.mxu0 %v2852
        %3223 = vmatpush.msra.mxu0 %v2850
        %3224 = vmatpush.msra.mxu0 %v2848
        %3225 = vmatpush.msra.mxu0 %v2846
        %3226 = vmatpush.msra.mxu0 %v2844
        %3227 = vmatpush.msra.mxu0 %v2842
        %3228 = vmatpush.msra.mxu0 %v2840
        %3229 = vmatpush.msra.mxu0 %v2838
        %3230 = vmatpush.msra.mxu0 %v2836
        %3231 = vmatpush.msra.mxu0 %v2834
        %3232 = vmatpush.msra.mxu0 %v2832
        %3233 = vmatmul.f32.gmra.mxu0 %v2730
        %v3234 = vpop.f32.mrf.mxu0
        %v3235 = vadd.f32 %v3215, %v3234
        %3236 = vdwg.mxu0
        %3237 = vmatpush.msra.mxu0 %v2894
        %3238 = vmatpush.msra.mxu0 %v2892
        %3239 = vmatpush.msra.mxu0 %v2890
        %3240 = vmatpush.msra.mxu0 %v2888
        %3241 = vmatpush.msra.mxu0 %v2886
        %3242 = vmatpush.msra.mxu0 %v2884
        %3243 = vmatpush.msra.mxu0 %v2882
        %3244 = vmatpush.msra.mxu0 %v2880
        %3245 = vmatpush.msra.mxu0 %v2878
        %3246 = vmatpush.msra.mxu0 %v2876
        %3247 = vmatpush.msra.mxu0 %v2874
        %3248 = vmatpush.msra.mxu0 %v2872
        %3249 = vmatpush.msra.mxu0 %v2870
        %3250 = vmatpush.msra.mxu0 %v2868
        %3251 = vmatpush.msra.mxu0 %v2866
        %3252 = vmatpush.msra.mxu0 %v2864
        %3253 = vmatmul.f32.gmra.mxu0 %v2731
        %v3254 = vpop.f32.mrf.mxu0
        %v3255 = vadd.f32 %v3235, %v3254
        %3256 = vdwg.mxu0
        %3257 = vmatpush.msra.mxu0 %v2926
        %3258 = vmatpush.msra.mxu0 %v2924
        %3259 = vmatpush.msra.mxu0 %v2922
        %3260 = vmatpush.msra.mxu0 %v2920
        %3261 = vmatpush.msra.mxu0 %v2918
        %3262 = vmatpush.msra.mxu0 %v2916
        %3263 = vmatpush.msra.mxu0 %v2914
        %3264 = vmatpush.msra.mxu0 %v2912
        %3265 = vmatpush.msra.mxu0 %v2910
        %3266 = vmatpush.msra.mxu0 %v2908
        %3267 = vmatpush.msra.mxu0 %v2906
        %3268 = vmatpush.msra.mxu0 %v2904
        %3269 = vmatpush.msra.mxu0 %v2902
        %3270 = vmatpush.msra.mxu0 %v2900
        %3271 = vmatpush.msra.mxu0 %v2898
        %3272 = vmatpush.msra.mxu0 %v2896
        %3273 = vmatmul.f32.gmra.mxu0 %v2732
        %v3274 = vpop.f32.mrf.mxu0
        %v3275 = vadd.f32 %v3255, %v3274
        %3276 = vdwg.mxu0
        %3277 = vmatpush.msra.mxu0 %v2958
        %3278 = vmatpush.msra.mxu0 %v2956
        %3279 = vmatpush.msra.mxu0 %v2954
        %3280 = vmatpush.msra.mxu0 %v2952
        %3281 = vmatpush.msra.mxu0 %v2950
        %3282 = vmatpush.msra.mxu0 %v2948
        %3283 = vmatpush.msra.mxu0 %v2946
        %3284 = vmatpush.msra.mxu0 %v2944
        %3285 = vmatpush.msra.mxu0 %v2942
        %3286 = vmatpush.msra.mxu0 %v2940
        %3287 = vmatpush.msra.mxu0 %v2938
        %3288 = vmatpush.msra.mxu0 %v2936
        %3289 = vmatpush.msra.mxu0 %v2934
        %3290 = vmatpush.msra.mxu0 %v2932
        %3291 = vmatpush.msra.mxu0 %v2930
        %3292 = vmatpush.msra.mxu0 %v2928
        %3293 = vmatmul.f32.gmra.mxu0 %v2733
        %v3294 = vpop.f32.mrf.mxu0
        %v3295 = vadd.f32 %v3275, %v3294
        %3296 = vdwg.mxu0
        %3297 = vmatpush.msra.mxu0 %v2990
        %3298 = vmatpush.msra.mxu0 %v2988
        %3299 = vmatpush.msra.mxu0 %v2986
        %3300 = vmatpush.msra.mxu0 %v2984
        %3301 = vmatpush.msra.mxu0 %v2982
        %3302 = vmatpush.msra.mxu0 %v2980
        %3303 = vmatpush.msra.mxu0 %v2978
        %3304 = vmatpush.msra.mxu0 %v2976
        %3305 = vmatpush.msra.mxu0 %v2974
        %3306 = vmatpush.msra.mxu0 %v2972
        %3307 = vmatpush.msra.mxu0 %v2970
        %3308 = vmatpush.msra.mxu0 %v2968
        %3309 = vmatpush.msra.mxu0 %v2966
        %3310 = vmatpush.msra.mxu0 %v2964
        %3311 = vmatpush.msra.mxu0 %v2962
        %3312 = vmatpush.msra.mxu0 %v2960
        %3313 = vmatmul.f32.gmra.mxu0 %v2734
        %v3314 = vpop.f32.mrf.mxu0
        %v3315 = vadd.f32 %v3295, %v3314
        %3316 = vdwg.mxu0
        %vm3317 = vcmp.gt.f32.partialorder %v3155, 0.0
        %vm3318 = vcmp.gt.f32.partialorder %v3315, 0.0
        %v3319 = vmin.f32 %v3155, 0.0
        %v3320 = vmin.f32 %v3315, 0.0
        %v3321 = vmul.f32 %v3319, 1.442695
        %v3322 = vpow.pop %v3321
        %v3323 = vmul.f32 %v3320, 1.442695
        %v3324 = vpow.pop %v3323
        %v3325 = vsub.f32 %v3322, 1.0
        %v3326 = vsub.f32 %v3324, 1.0
        %v3327 = vsel %vm3317, %v3155, %v3325
        %v3328 = vsel %vm3318, %v3315, %v3326
        %v3329 = vld [vmem:[%s5] sm:$0xff]
        %v3330 = vld [vmem:[%s5 + $0x8] sm:$0xff]
        %v3331 = vld [vmem:[%s5 + $0x10] sm:$0xff]
        %v3332 = vld [vmem:[%s5 + $0x18] sm:$0xff]
        %v3333 = vld [vmem:[%s5 + $0x20] sm:$0xff]
        %v3334 = vld [vmem:[%s5 + $0x28] sm:$0xff]
        %v3335 = vld [vmem:[%s5 + $0x30] sm:$0xff]
        %v3336 = vld [vmem:[%s5 + $0x38] sm:$0xff]
        %v3337 = vld [vmem:[%s5 + $0x40] sm:$0xff]
        %v3338 = vld [vmem:[%s5 + $0x48] sm:$0xff]
        %v3339 = vld [vmem:[%s5 + $0x50] sm:$0xff]
        %v3340 = vld [vmem:[%s5 + $0x58] sm:$0xff]
        %v3341 = vld [vmem:[%s5 + $0x60] sm:$0xff]
        %v3342 = vld [vmem:[%s5 + $0x68] sm:$0xff]
        %v3343 = vld [vmem:[%s5 + $0x70] sm:$0xff]
        %v3344 = vld [vmem:[%s5 + $0x78] sm:$0xff]
        %v3345 = vld [vmem:[%s5 + $0x80] sm:$0xff]
        %v3346 = vld [vmem:[#allocation9] sm:$0x1]
        %v3348 = vperm.slane %v3346, 0
        %vm3350 = vcmask 64512
        %v3352 = vsel %vm3350, %v3328, 0
        %3354 = vmatpush.msra.mxu0 %v3344
        %3355 = vmatpush.msra.mxu0 %v3343
        %3356 = vmatpush.msra.mxu0 %v3342
        %3357 = vmatpush.msra.mxu0 %v3341
        %3358 = vmatpush.msra.mxu0 %v3340
        %3359 = vmatpush.msra.mxu0 %v3339
        %3360 = vmatpush.msra.mxu0 %v3338
        %3361 = vmatpush.msra.mxu0 %v3337
        %3362 = vmatpush.msra.mxu0 %v3336
        %3363 = vmatpush.msra.mxu0 %v3335
        %3364 = vmatpush.msra.mxu0 %v3334
        %3365 = vmatpush.msra.mxu0 %v3333
        %3366 = vmatpush.msra.mxu0 %v3332
        %3367 = vmatpush.msra.mxu0 %v3331
        %3368 = vmatpush.msra.mxu0 %v3330
        %3369 = vmatpush.msra.mxu0 %v3329
        %3370 = vmatmul.f32.gmra.mxu0 %v3327
        %v3371 = vpop.f32.mrf.mxu0
        %v3372 = vadd.f32 %v3348, %v3371
        %3373 = vdwg.mxu0
        %3374 = vmatpush.msra.mxu0 0.0
        %3375 = vmatpush.msra.mxu0 0.0
        %3376 = vmatpush.msra.mxu0 0.0
        %3377 = vmatpush.msra.mxu0 0.0
        %3378 = vmatpush.msra.mxu0 0.0
        %3379 = vmatpush.msra.mxu0 0.0
        %3380 = vmatpush.msra.mxu0 0.0
        %3381 = vmatpush.msra.mxu0 0.0
        %3382 = vmatpush.msra.mxu0 0.0
        %3383 = vmatpush.msra.mxu0 0.0
        %3384 = vmatpush.msra.mxu0 0.0
        %3385 = vmatpush.msra.mxu0 0.0
        %3386 = vmatpush.msra.mxu0 0.0
        %3387 = vmatpush.msra.mxu0 0.0
        %3388 = vmatpush.msra.mxu0 0.0
        %3389 = vmatpush.msra.mxu0 %v3345
        %3390 = vmatmul.f32.gmra.mxu0 %v3352
        %v3391 = vpop.f32.mrf.mxu0
        %v3392 = vadd.f32 %v3372, %v3391
        %3393 = vdwg.mxu0
        %vm3394 = vcmask 31744
        %v3395 = vsel %vm3394, %v3392, -inf
        %3396 = vmax.xlane.f32.xlu0 %v3395
        %v3397 = vpop.xlane.xlu0 %3396
        %v3398 = vsub.f32 %v3392, %v3397
        %v3399 = vmul.f32 %v3398, 1.442695
        %v3400 = vpow.pop %v3399
        %v3401 = vsel %vm3394, %v3400, 0.0
        %3402 = vadd.xlane.f32.xlu0 %v3401
        %v3403 = vpop.xlane.xlu0 %3402
        %v3404 = vrcp.pop %v3403
        %v3405 = vmul.f32 %v3403, %v3404
        %v3406 = vsub.f32 1.0, %v3405
        %v3407 = vmul.f32 %v3404, %v3406
        %v3408 = vadd.f32 %v3404, %v3407
        %vm3409 = vweird.f32 %v3403
        %vm3410 = vweird.f32 %v3404
        %vm3411 = vmor %vm3409, %vm3410
        %v3412 = vsel %vm3411, %v3404, %v3408
        %v3413 = vand.u32 2147483647, %v3403
        %vm3414 = vcmp.eq.f32.partialorder %v3413, 8.507059e+37
        %v3415 = vand.u32 %v3403, 2147483648
        %v3416 = vor.u32 1.1754944e-38, %v3415
        %v3417 = vsel %vm3414, %v3416, %v3412
        %v3418 = vmul.f32 %v3400, %v3417
        %3419 = vst.msk [vmem:[%s356] sm:$0xff] %vm3394, %v3418
        %p3420 = scmp.lt.s32.totalorder %s23, 1
        %s3421 = scalar_select %p3420, %s23, 1
        %s3422 = smul.addr %s3421, 8
        %s3423 = scalar_lea.vmem %s7, %s3422
        // Predicated region
        $region69: #{tpu_custom_call.1} parent=47 // pred_check
          %p3424 = pneg %p193
        $region70: #{tpu_custom_call.1} parent=47 // pred_check_branch
          %3426 = sbr.rel (%p3424) target = $region72
        $region71: #{tpu_custom_call.1} parent=47 // pred_region
          _
        $region72: #{tpu_custom_call.1} parent=47 // pred_fallthru
          _
      $region48: #{tpu_custom_call.1} parent=5 // pred_fallthru
        _
      %p3427 = scmp.le.s32.totalorder 2, %s18
      // Predicated region
      $region73: #{tpu_custom_call.1} parent=5 // pred_check
        %p3428 = pneg %p3427
      $region74: #{tpu_custom_call.1} parent=5 // pred_check_branch
        %3430 = sbr.rel (%p3428) target = $region76
      $region75: #{tpu_custom_call.1} parent=5 // pred_region
        %s3431 = ssub.s32 %s18, 2
        // Predicated region
        $region77: #{tpu_custom_call.1} parent=75 // pred_check
          %p3432 = pneg %p199
        $region78: #{tpu_custom_call.1} parent=75 // pred_check_branch
          %3434 = sbr.rel (%p3432) target = $region80
        $region79: #{tpu_custom_call.1} parent=75 // pred_region
          %p3435 = scmp.lt.s32.totalorder %s24, 1
          %s3436 = scalar_select %p3435, %s24, 1
          %s3437 = smul.addr %s3436, 8
          %s3438 = scalar_lea.vmem %s7, %s3437
        $region80: #{tpu_custom_call.1} parent=75 // pred_fallthru
          _
      $region76: #{tpu_custom_call.1} parent=5 // pred_fallthru
        _
    $region6: #{tpu_custom_call.1} parent=1 // loop_footer
      %s22 = sadd.s32 1, %s18
    $region7: #{tpu_custom_call.1} parent=1 // loop_footer_branch
      %17 = sbr.rel target = $region3
    $region8: #{tpu_custom_call.1} parent=1 // loop_exit
      _
    %3439 = vsyncpa [#allocation3], 1
    %s3440 = scalar_lea.sflag [#allocation3], 1
    %3441 = vsyncpa %s3440, 1
    %3442 = vsyncpa [#allocation5], 1
    %3443 = vsyncpa [#allocation8], 1

</llo_original>
